<compile_context>
chip_gen: v7x
topology: tpu7x:2x2x1
jax: 0.10.0
libtpu: 0.0.40
codegen_flags: <defaults>
</compile_context>

<pallas_src>
import jax
import jax.numpy as jnp
from jax.experimental import pallas as pl
from jax.experimental.pallas import tpu as pltpu

_CHUNK_ROWS = 128   # rows per in-kernel sub-chunk (keeps count accs in vregs)


def _round_up(x, m):
    return ((x + m - 1) // m) * m


def _pad2d(a, shape, dtype):
    """Zero-pad a 2-D array up to `shape` and cast to `dtype`."""
    out = jnp.zeros(shape, dtype)
    return out.at[: a.shape[0], : a.shape[1]].set(a.astype(dtype))


def _default_count_dtype():
    """bf16 count accumulators where the VPU has bf16 (v6e/v7x), else f32."""
    try:
        kind = jax.devices()[0].device_kind.lower()
    except Exception:
        return jnp.float32
    if ("v6" in kind) or ("v7" in kind) or ("7x" in kind):
        return jnp.bfloat16
    return jnp.float32


def _make_mlp_pickpack_kernel(num_layers, card_pad, step_pad,
                              compute_dtype, count_dtype):
    """Chunked fused kernel: one-hot encode -> (Linear->ReLU)* -> Linear."""

    def kernel(pool_ref, pack_ref, *refs):
        o_ref = refs[-1]
        w1_ref, b1_ref = refs[0], refs[1]
        rest = refs[2:-1]                      # (w2, b2, w3, b3, ...)

        bt = pool_ref.shape[0]
        C, S = card_pad, step_pad
        n_chunks = bt // _CHUNK_ROWS
        f32 = jnp.float32

        # card c (1-based) lives in lane c-1; lanes >= input_size never match.
        card_ids = jax.lax.broadcasted_iota(jnp.int32, (1, C), 1) + 1
        step_ids = jax.lax.broadcasted_iota(jnp.int32, (1, S), 1)
        one = jnp.ones((), count_dtype)
        zero = jnp.zeros((), count_dtype)

        def multiset_counts(idx):
            """(rows, L) int32 -> (rows, C) counts, accumulator vreg-resident.

            Compares are tree-summed in groups of four before touching the
            running accumulator, so it sees ceil(L/4) adds instead of L and
            never round-trips VMEM.  Exact in bf16 while counts <= 256
            (L <= 20 here)."""
            L = idx.shape[1]
            acc = None
            for l0 in range(0, L, 4):
                grp = None
                for l in range(l0, min(l0 + 4, L)):
                    hit = jnp.where(idx[:, l:l + 1] == card_ids, one, zero)
                    grp = hit if grp is None else grp + hit
                acc = grp if acc is None else acc + grp
            return acc

        def chunk_body(ci, carry):
            row0 = pl.multiple_of(ci * _CHUNK_ROWS, _CHUNK_ROWS)
            pool_idx = pool_ref[pl.ds(row0, _CHUNK_ROWS), :]
            pack_idx = pack_ref[pl.ds(row0, _CHUNK_ROWS), :]

            pool_cnt = multiset_counts(pool_idx)
            pack_cnt = multiset_counts(pack_idx)

            # step = one_hot(#picked) = one_hot(sum of pool counts).  Padded
            # batch rows give n=0 -> a garbage row that is sliced off later.
            n_picked = jnp.sum(pool_cnt.astype(f32), axis=1,
                               keepdims=True).astype(jnp.int32)
            step_oh = jnp.where(n_picked == step_ids, one, zero)

            # Fused lane-dense first-layer activation (chunk, 2C + S).
            act = jnp.concatenate(
                [pool_cnt.astype(compute_dtype),
                 pack_cnt.astype(compute_dtype),
                 step_oh.astype(compute_dtype)], axis=1)

            # Single K = 2C+S matmul (bf16 x bf16 -> f32 on the MXU).
            h = (jnp.dot(act, w1_ref[...], preferred_element_type=f32)
                 + b1_ref[...])
            if num_layers > 1:
                h = jnp.maximum(h, 0.0)   # ReLU; Dropout identity at inference.

            for i in range(1, num_layers):
                w_ref = rest[2 * (i - 1)]
                b_ref = rest[2 * (i - 1) + 1]
                h = jnp.dot(h.astype(compute_dtype), w_ref[...],
                            preferred_element_type=f32) + b_ref[...]
                if i < num_layers - 1:
                    h = jnp.maximum(h, 0.0)

            o_ref[pl.ds(row0, _CHUNK_ROWS), :] = h.astype(o_ref.dtype)
            return carry

        jax.lax.fori_loop(0, n_chunks, chunk_body, 0)

    return kernel


class MLPPickPackModScorerCE:
    """JAX/Pallas port of MLP_PickPack_Mod_Scorer_CE (inference mode)."""

    def __init__(self, input_size, hidden_sizes, key,
                 param_dtype=jnp.bfloat16, count_dtype=None):
        # param_dtype=jnp.float32 gives exact f32 weights/dots (slower).
        self.input_size = input_size
        self.compute_dtype = param_dtype
        self.count_dtype = (count_dtype if count_dtype is not None
                            else _default_count_dtype())

        sizes = list(hidden_sizes) + [input_size]
        dims = [input_size * 2 + 45] + sizes
        self.num_layers = len(sizes)

        # PyTorch Linear default init: U(-1/sqrt(fan_in), 1/sqrt(fan_in)).
        raw = []
        for i in range(self.num_layers):
            key, kw, kb = jax.random.split(key, 3)
            bound = 1.0 / float(dims[i]) ** 0.5
            w = jax.random.uniform(kw, (dims[i], dims[i + 1]), jnp.float32,
                                   -bound, bound)   # (in, out) layout
            b = jax.random.uniform(kb, (dims[i + 1],), jnp.float32,
                                   -bound, bound)
            raw.append((w, b))
        self.raw_params = raw

        # Lane-dense padded kernel params.
        C = _round_up(input_size, 128)      # card-count width
        S = 128                             # step one-hot width (>= 45)
        Hp = [_round_up(d, 128) for d in sizes]
        self.card_pad, self.step_pad = C, S
        self.h_pad = Hp
        self.out_pad = Hp[-1]
        self.k1 = 2 * C + S

        # Fused first-layer weight: rows [0,C) pool counts, [C,2C) pack
        # counts, [2C,2C+S) step one-hot (rows >= 45 zero-padded).
        w1, b1 = raw[0]
        n = input_size
        w1f = jnp.zeros((self.k1, Hp[0]), param_dtype)
        w1f = w1f.at[:n, :sizes[0]].set(w1[:n].astype(param_dtype))
        w1f = w1f.at[C:C + n, :sizes[0]].set(w1[n:2 * n].astype(param_dtype))
        w1f = w1f.at[2 * C:2 * C + 45, :sizes[0]].set(
            w1[2 * n:].astype(param_dtype))
        kp = [w1f, _pad2d(b1.reshape(1, -1), (1, Hp[0]), jnp.float32)]
        for i in range(1, self.num_layers):
            w, b = raw[i]
            kp.append(_pad2d(w, (Hp[i - 1], Hp[i]), param_dtype))
            kp.append(_pad2d(b.reshape(1, -1), (1, Hp[i]), jnp.float32))
        self.kernel_params = kp

    def __call__(self, pool, pack, *, batch_tile=1024, out_dtype=jnp.bfloat16):
        pool = jnp.asarray(pool, jnp.int32)
        pack = jnp.asarray(pack, jnp.int32)
        B = pool.shape[0]
        CH = _CHUNK_ROWS

        # 128-aligned batch tile; large default amortizes per-grid-step
        # overhead, but cap so the parallel grid keeps >= 2 steps whenever
        # the batch allows it (v7x has 2 TensorCores; no effect on v5e/v6e).
        B_ru = _round_up(B, CH)
        bt = min(_round_up(batch_tile, CH), B_ru)
        if B_ru >= 2 * CH:
            bt = min(bt, _round_up(B_ru // 2, CH))
        bt = max(bt, CH)
        B_pad = _round_up(B, bt)
        if B_pad != B:
            pool = jnp.pad(pool, ((0, B_pad - B), (0, 0)))
            pack = jnp.pad(pack, ((0, B_pad - B), (0, 0)))

        in_specs = [
            pl.BlockSpec((bt, pool.shape[1]), lambda i: (i, 0)),
            pl.BlockSpec((bt, pack.shape[1]), lambda i: (i, 0)),
        ]
        for p in self.kernel_params:
            # Constant block index => weights stay VMEM-resident across steps.
            in_specs.append(pl.BlockSpec(p.shape, lambda i: (0, 0)))

        # Advisory cost hint for XLA's scheduler around the custom call.
        dims = [self.k1] + self.h_pad
        mm_flops = 2 * sum(dims[i] * dims[i + 1] for i in range(len(dims) - 1))
        enc_flops = 2 * (pool.shape[1] + pack.shape[1]) * self.card_pad
        cost = pl.CostEstimate(
            flops=int(B_pad) * int(mm_flops + enc_flops),
            transcendentals=0,
            bytes_accessed=int(pool.nbytes) + int(pack.nbytes)
            + sum(int(p.nbytes) for p in self.kernel_params)
            + int(B_pad) * self.out_pad * jnp.dtype(out_dtype).itemsize)

        out = pl.pallas_call(
            _make_mlp_pickpack_kernel(self.num_layers, self.card_pad,
                                      self.step_pad, self.compute_dtype,
                                      self.count_dtype),
            out_shape=jax.ShapeDtypeStruct((B_pad, self.out_pad), out_dtype),
            grid_spec=pltpu.PrefetchScalarGridSpec(
                num_scalar_prefetch=0,
                grid=(B_pad // bt,),
                in_specs=in_specs,
                out_specs=pl.BlockSpec((bt, self.out_pad), lambda i: (i, 0)),
            ),
            compiler_params=pltpu.CompilerParams(
                dimension_semantics=("parallel",)),
            cost_estimate=cost,
        )(pool, pack, *self.kernel_params)

        return out[:B, :self.input_size]

    # ------------------------------------------------------------------ #
    # Pure-JAX reference mirroring the kernel numerics (same fused padded
    # bf16 weights, bf16 dot inputs, f32 accumulation) for tight checks.
    # ------------------------------------------------------------------ #
    def _encode_counts_padded(self, idx):
        oh = jax.nn.one_hot(idx, self.input_size + 1, dtype=jnp.float32)
        c = oh.sum(axis=1)[:, 1:]                     # (B, input_size)
        pad = self.card_pad - self.input_size
        if pad:
            c = jnp.pad(c, ((0, 0), (0, pad)))
        return c

    def reference(self, pool, pack):
        pool = jnp.asarray(pool, jnp.int32)
        pack = jnp.asarray(pack, jnp.int32)
        dt = self.compute_dtype
        f32 = jnp.float32

        pool_c = self._encode_counts_padded(pool)
        pack_c = self._encode_counts_padded(pack)
        n = jnp.sum(pool_c, axis=1).astype(jnp.int32)
        step = jax.nn.one_hot(n, self.step_pad, dtype=jnp.float32)
        act = jnp.concatenate([pool_c, pack_c, step], axis=1).astype(dt)

        w1, b1 = self.kernel_params[0], self.kernel_params[1]
        h = jnp.dot(act, w1, preferred_element_type=f32) + b1
        if self.num_layers > 1:
            h = jnp.maximum(h, 0.0)
        rest = self.kernel_params[2:]
        for i in range(1, self.num_layers):
            w = rest[2 * (i - 1)]
            b = rest[2 * (i - 1) + 1]
            h = jnp.dot(h.astype(dt), w, preferred_element_type=f32) + b
            if i < self.num_layers - 1:
                h = jnp.maximum(h, 0.0)
        return h[:, :self.input_size]


if __name__ == "__main__":
    key = jax.random.PRNGKey(0)
    k_model, k_pool, k_pack = jax.random.split(key, 3)

    input_size = 128          # card vocabulary size
    hidden_sizes = [64, 32]   # module appends [input_size] -> [64, 32, 128]
    batch = 512
    pool_len = 20             # #picked <= 20 < 45, as the torch module requires
    pack_len = 14

    model = MLPPickPackModScorerCE(input_size, hidden_sizes, k_model)

    # Integer card indices in [0, input_size]; 0 acts as padding.
    pool = jax.random.randint(k_pool, (batch, pool_len), 0, input_size + 1,
                              dtype=jnp.int32)
    pack = jax.random.randint(k_pack, (batch, pack_len), 0, input_size + 1,
                              dtype=jnp.int32)

    # batch_tile=256 -> a 2-step parallel grid with 2 in-kernel sub-chunks
    # per step, exercising both the grid pipeline and the chunk loop.
    out = model(pool, pack, batch_tile=256)
    jax.block_until_ready(out)

    ref = model.reference(pool, pack)
    assert out.shape == (batch, input_size), out.shape
    err = float(jnp.max(jnp.abs(out.astype(jnp.float32) - ref)))
    assert err < 2e-2, err

    print("KERNEL_OK")
</pallas_src>

<mosaic_0001>
module attributes {stable_mosaic.version = 11 : i64} {
  func.func @kernel(%arg0: i32, %arg1: memref<256x20xi32, #tpu.memory_space<vmem>>, %arg2: memref<256x14xi32, #tpu.memory_space<vmem>>, %arg3: memref<384x128xbf16, #tpu.memory_space<vmem>>, %arg4: memref<1x128xf32, #tpu.memory_space<vmem>>, %arg5: memref<128x128xbf16, #tpu.memory_space<vmem>>, %arg6: memref<1x128xf32, #tpu.memory_space<vmem>>, %arg7: memref<128x128xbf16, #tpu.memory_space<vmem>>, %arg8: memref<1x128xf32, #tpu.memory_space<vmem>>, %arg9: memref<256x128xbf16, #tpu.memory_space<vmem>>) attributes {dimension_semantics = [#tpu.dimension_semantics<parallel>], iteration_bounds = array<i64: 2>, scalar_prefetch = 0 : i64, scratch_operands = 0 : i64, tpu.core_type = #tpu.core_type<tc>, window_params = [{transform_indices = @transform_0, window_bounds = array<i64: 256, 20>}, {transform_indices = @transform_1, window_bounds = array<i64: 256, 14>}, {pipeline_mode = #tpu.pipeline_mode<synchronous>, transform_indices = @transform_2, window_bounds = array<i64: 384, 128>}, {pipeline_mode = #tpu.pipeline_mode<synchronous>, transform_indices = @transform_3, window_bounds = array<i64: 1, 128>}, {pipeline_mode = #tpu.pipeline_mode<synchronous>, transform_indices = @transform_4, window_bounds = array<i64: 128, 128>}, {pipeline_mode = #tpu.pipeline_mode<synchronous>, transform_indices = @transform_5, window_bounds = array<i64: 1, 128>}, {pipeline_mode = #tpu.pipeline_mode<synchronous>, transform_indices = @transform_6, window_bounds = array<i64: 128, 128>}, {pipeline_mode = #tpu.pipeline_mode<synchronous>, transform_indices = @transform_7, window_bounds = array<i64: 1, 128>}, {transform_indices = @transform_8, window_bounds = array<i64: 256, 128>}]} {
    %0 = tpu.iota {dimensions = array<i32: 1>} : vector<1x128xi32>
    %c1_i32 = arith.constant 1 : i32
    %1 = vector.broadcast %c1_i32 : i32 to vector<1x128xi32>
    %2 = arith.addi %0, %1 : vector<1x128xi32>
    %3 = tpu.iota {dimensions = array<i32: 1>} : vector<1x128xi32>
    %cst = arith.constant 1.000000e+00 : f32
    %cst_0 = arith.constant 0.000000e+00 : f32
    %c0_i32 = arith.constant 0 : i32
    %c2_i32 = arith.constant 2 : i32
    %4 = arith.addi %c0_i32, %c2_i32 : i32
    %c1_i32_1 = arith.constant 1 : i32
    scf.for %arg10 = %c0_i32 to %4 step %c1_i32_1  : i32 {
      %c128_i32 = arith.constant 128 : i32
      %5 = arith.muli %arg10, %c128_i32 : i32
      %6 = tpu.assume_multiple %5, 128 : i32
      %7 = arith.index_cast %6 : i32 to index
      %c0 = arith.constant 0 : index
      %8 = vector.load %arg1[%7, %c0] : memref<256x20xi32, #tpu.memory_space<vmem>>, vector<128x20xi32>
      %9 = arith.index_cast %6 : i32 to index
      %c0_3 = arith.constant 0 : index
      %10 = vector.load %arg2[%9, %c0_3] : memref<256x14xi32, #tpu.memory_space<vmem>>, vector<128x14xi32>
      %11 = vector.extract_strided_slice %8 {offsets = [0, 0], sizes = [128, 1], strides = [1, 1]} : vector<128x20xi32> to vector<128x1xi32>
      %12 = vector.broadcast %11 : vector<128x1xi32> to vector<128x128xi32>
      %13 = vector.broadcast %2 : vector<1x128xi32> to vector<128x128xi32>
      %14 = arith.cmpi eq, %12, %13 : vector<128x128xi32>
      %15 = vector.broadcast %cst : f32 to vector<128x128xf32>
      %16 = vector.broadcast %cst_0 : f32 to vector<128x128xf32>
      %17 = arith.select %14, %15, %16 : vector<128x128xi1>, vector<128x128xf32>
      %18 = vector.extract_strided_slice %8 {offsets = [0, 1], sizes = [128, 1], strides = [1, 1]} : vector<128x20xi32> to vector<128x1xi32>
      %19 = vector.broadcast %18 : vector<128x1xi32> to vector<128x128xi32>
      %20 = vector.broadcast %2 : vector<1x128xi32> to vector<128x128xi32>
      %21 = arith.cmpi eq, %19, %20 : vector<128x128xi32>
      %22 = vector.broadcast %cst : f32 to vector<128x128xf32>
      %23 = vector.broadcast %cst_0 : f32 to vector<128x128xf32>
      %24 = arith.select %21, %22, %23 : vector<128x128xi1>, vector<128x128xf32>
      %25 = arith.addf %17, %24 : vector<128x128xf32>
      %26 = vector.extract_strided_slice %8 {offsets = [0, 2], sizes = [128, 1], strides = [1, 1]} : vector<128x20xi32> to vector<128x1xi32>
      %27 = vector.broadcast %26 : vector<128x1xi32> to vector<128x128xi32>
      %28 = vector.broadcast %2 : vector<1x128xi32> to vector<128x128xi32>
      %29 = arith.cmpi eq, %27, %28 : vector<128x128xi32>
      %30 = vector.broadcast %cst : f32 to vector<128x128xf32>
      %31 = vector.broadcast %cst_0 : f32 to vector<128x128xf32>
      %32 = arith.select %29, %30, %31 : vector<128x128xi1>, vector<128x128xf32>
      %33 = arith.addf %25, %32 : vector<128x128xf32>
      %34 = vector.extract_strided_slice %8 {offsets = [0, 3], sizes = [128, 1], strides = [1, 1]} : vector<128x20xi32> to vector<128x1xi32>
      %35 = vector.broadcast %34 : vector<128x1xi32> to vector<128x128xi32>
      %36 = vector.broadcast %2 : vector<1x128xi32> to vector<128x128xi32>
      %37 = arith.cmpi eq, %35, %36 : vector<128x128xi32>
      %38 = vector.broadcast %cst : f32 to vector<128x128xf32>
      %39 = vector.broadcast %cst_0 : f32 to vector<128x128xf32>
      %40 = arith.select %37, %38, %39 : vector<128x128xi1>, vector<128x128xf32>
      %41 = arith.addf %33, %40 : vector<128x128xf32>
      %42 = vector.extract_strided_slice %8 {offsets = [0, 4], sizes = [128, 1], strides = [1, 1]} : vector<128x20xi32> to vector<128x1xi32>
      %43 = vector.broadcast %42 : vector<128x1xi32> to vector<128x128xi32>
      %44 = vector.broadcast %2 : vector<1x128xi32> to vector<128x128xi32>
      %45 = arith.cmpi eq, %43, %44 : vector<128x128xi32>
      %46 = vector.broadcast %cst : f32 to vector<128x128xf32>
      %47 = vector.broadcast %cst_0 : f32 to vector<128x128xf32>
      %48 = arith.select %45, %46, %47 : vector<128x128xi1>, vector<128x128xf32>
      %49 = vector.extract_strided_slice %8 {offsets = [0, 5], sizes = [128, 1], strides = [1, 1]} : vector<128x20xi32> to vector<128x1xi32>
      %50 = vector.broadcast %49 : vector<128x1xi32> to vector<128x128xi32>
      %51 = vector.broadcast %2 : vector<1x128xi32> to vector<128x128xi32>
      %52 = arith.cmpi eq, %50, %51 : vector<128x128xi32>
      %53 = vector.broadcast %cst : f32 to vector<128x128xf32>
      %54 = vector.broadcast %cst_0 : f32 to vector<128x128xf32>
      %55 = arith.select %52, %53, %54 : vector<128x128xi1>, vector<128x128xf32>
      %56 = arith.addf %48, %55 : vector<128x128xf32>
      %57 = vector.extract_strided_slice %8 {offsets = [0, 6], sizes = [128, 1], strides = [1, 1]} : vector<128x20xi32> to vector<128x1xi32>
      %58 = vector.broadcast %57 : vector<128x1xi32> to vector<128x128xi32>
      %59 = vector.broadcast %2 : vector<1x128xi32> to vector<128x128xi32>
      %60 = arith.cmpi eq, %58, %59 : vector<128x128xi32>
      %61 = vector.broadcast %cst : f32 to vector<128x128xf32>
      %62 = vector.broadcast %cst_0 : f32 to vector<128x128xf32>
      %63 = arith.select %60, %61, %62 : vector<128x128xi1>, vector<128x128xf32>
      %64 = arith.addf %56, %63 : vector<128x128xf32>
      %65 = vector.extract_strided_slice %8 {offsets = [0, 7], sizes = [128, 1], strides = [1, 1]} : vector<128x20xi32> to vector<128x1xi32>
      %66 = vector.broadcast %65 : vector<128x1xi32> to vector<128x128xi32>
      %67 = vector.broadcast %2 : vector<1x128xi32> to vector<128x128xi32>
      %68 = arith.cmpi eq, %66, %67 : vector<128x128xi32>
      %69 = vector.broadcast %cst : f32 to vector<128x128xf32>
      %70 = vector.broadcast %cst_0 : f32 to vector<128x128xf32>
      %71 = arith.select %68, %69, %70 : vector<128x128xi1>, vector<128x128xf32>
      %72 = arith.addf %64, %71 : vector<128x128xf32>
      %73 = arith.addf %41, %72 : vector<128x128xf32>
      %74 = vector.extract_strided_slice %8 {offsets = [0, 8], sizes = [128, 1], strides = [1, 1]} : vector<128x20xi32> to vector<128x1xi32>
      %75 = vector.broadcast %74 : vector<128x1xi32> to vector<128x128xi32>
      %76 = vector.broadcast %2 : vector<1x128xi32> to vector<128x128xi32>
      %77 = arith.cmpi eq, %75, %76 : vector<128x128xi32>
      %78 = vector.broadcast %cst : f32 to vector<128x128xf32>
      %79 = vector.broadcast %cst_0 : f32 to vector<128x128xf32>
      %80 = arith.select %77, %78, %79 : vector<128x128xi1>, vector<128x128xf32>
      %81 = vector.extract_strided_slice %8 {offsets = [0, 9], sizes = [128, 1], strides = [1, 1]} : vector<128x20xi32> to vector<128x1xi32>
      %82 = vector.broadcast %81 : vector<128x1xi32> to vector<128x128xi32>
      %83 = vector.broadcast %2 : vector<1x128xi32> to vector<128x128xi32>
      %84 = arith.cmpi eq, %82, %83 : vector<128x128xi32>
      %85 = vector.broadcast %cst : f32 to vector<128x128xf32>
      %86 = vector.broadcast %cst_0 : f32 to vector<128x128xf32>
      %87 = arith.select %84, %85, %86 : vector<128x128xi1>, vector<128x128xf32>
      %88 = arith.addf %80, %87 : vector<128x128xf32>
      %89 = vector.extract_strided_slice %8 {offsets = [0, 10], sizes = [128, 1], strides = [1, 1]} : vector<128x20xi32> to vector<128x1xi32>
      %90 = vector.broadcast %89 : vector<128x1xi32> to vector<128x128xi32>
      %91 = vector.broadcast %2 : vector<1x128xi32> to vector<128x128xi32>
      %92 = arith.cmpi eq, %90, %91 : vector<128x128xi32>
      %93 = vector.broadcast %cst : f32 to vector<128x128xf32>
      %94 = vector.broadcast %cst_0 : f32 to vector<128x128xf32>
      %95 = arith.select %92, %93, %94 : vector<128x128xi1>, vector<128x128xf32>
      %96 = arith.addf %88, %95 : vector<128x128xf32>
      %97 = vector.extract_strided_slice %8 {offsets = [0, 11], sizes = [128, 1], strides = [1, 1]} : vector<128x20xi32> to vector<128x1xi32>
      %98 = vector.broadcast %97 : vector<128x1xi32> to vector<128x128xi32>
      %99 = vector.broadcast %2 : vector<1x128xi32> to vector<128x128xi32>
      %100 = arith.cmpi eq, %98, %99 : vector<128x128xi32>
      %101 = vector.broadcast %cst : f32 to vector<128x128xf32>
      %102 = vector.broadcast %cst_0 : f32 to vector<128x128xf32>
      %103 = arith.select %100, %101, %102 : vector<128x128xi1>, vector<128x128xf32>
      %104 = arith.addf %96, %103 : vector<128x128xf32>
      %105 = arith.addf %73, %104 : vector<128x128xf32>
      %106 = vector.extract_strided_slice %8 {offsets = [0, 12], sizes = [128, 1], strides = [1, 1]} : vector<128x20xi32> to vector<128x1xi32>
      %107 = vector.broadcast %106 : vector<128x1xi32> to vector<128x128xi32>
      %108 = vector.broadcast %2 : vector<1x128xi32> to vector<128x128xi32>
      %109 = arith.cmpi eq, %107, %108 : vector<128x128xi32>
      %110 = vector.broadcast %cst : f32 to vector<128x128xf32>
      %111 = vector.broadcast %cst_0 : f32 to vector<128x128xf32>
      %112 = arith.select %109, %110, %111 : vector<128x128xi1>, vector<128x128xf32>
      %113 = vector.extract_strided_slice %8 {offsets = [0, 13], sizes = [128, 1], strides = [1, 1]} : vector<128x20xi32> to vector<128x1xi32>
      %114 = vector.broadcast %113 : vector<128x1xi32> to vector<128x128xi32>
      %115 = vector.broadcast %2 : vector<1x128xi32> to vector<128x128xi32>
      %116 = arith.cmpi eq, %114, %115 : vector<128x128xi32>
      %117 = vector.broadcast %cst : f32 to vector<128x128xf32>
      %118 = vector.broadcast %cst_0 : f32 to vector<128x128xf32>
      %119 = arith.select %116, %117, %118 : vector<128x128xi1>, vector<128x128xf32>
      %120 = arith.addf %112, %119 : vector<128x128xf32>
      %121 = vector.extract_strided_slice %8 {offsets = [0, 14], sizes = [128, 1], strides = [1, 1]} : vector<128x20xi32> to vector<128x1xi32>
      %122 = vector.broadcast %121 : vector<128x1xi32> to vector<128x128xi32>
      %123 = vector.broadcast %2 : vector<1x128xi32> to vector<128x128xi32>
      %124 = arith.cmpi eq, %122, %123 : vector<128x128xi32>
      %125 = vector.broadcast %cst : f32 to vector<128x128xf32>
      %126 = vector.broadcast %cst_0 : f32 to vector<128x128xf32>
      %127 = arith.select %124, %125, %126 : vector<128x128xi1>, vector<128x128xf32>
      %128 = arith.addf %120, %127 : vector<128x128xf32>
      %129 = vector.extract_strided_slice %8 {offsets = [0, 15], sizes = [128, 1], strides = [1, 1]} : vector<128x20xi32> to vector<128x1xi32>
      %130 = vector.broadcast %129 : vector<128x1xi32> to vector<128x128xi32>
      %131 = vector.broadcast %2 : vector<1x128xi32> to vector<128x128xi32>
      %132 = arith.cmpi eq, %130, %131 : vector<128x128xi32>
      %133 = vector.broadcast %cst : f32 to vector<128x128xf32>
      %134 = vector.broadcast %cst_0 : f32 to vector<128x128xf32>
      %135 = arith.select %132, %133, %134 : vector<128x128xi1>, vector<128x128xf32>
      %136 = arith.addf %128, %135 : vector<128x128xf32>
      %137 = arith.addf %105, %136 : vector<128x128xf32>
      %138 = vector.extract_strided_slice %8 {offsets = [0, 16], sizes = [128, 1], strides = [1, 1]} : vector<128x20xi32> to vector<128x1xi32>
      %139 = vector.broadcast %138 : vector<128x1xi32> to vector<128x128xi32>
      %140 = vector.broadcast %2 : vector<1x128xi32> to vector<128x128xi32>
      %141 = arith.cmpi eq, %139, %140 : vector<128x128xi32>
      %142 = vector.broadcast %cst : f32 to vector<128x128xf32>
      %143 = vector.broadcast %cst_0 : f32 to vector<128x128xf32>
      %144 = arith.select %141, %142, %143 : vector<128x128xi1>, vector<128x128xf32>
      %145 = vector.extract_strided_slice %8 {offsets = [0, 17], sizes = [128, 1], strides = [1, 1]} : vector<128x20xi32> to vector<128x1xi32>
      %146 = vector.broadcast %145 : vector<128x1xi32> to vector<128x128xi32>
      %147 = vector.broadcast %2 : vector<1x128xi32> to vector<128x128xi32>
      %148 = arith.cmpi eq, %146, %147 : vector<128x128xi32>
      %149 = vector.broadcast %cst : f32 to vector<128x128xf32>
      %150 = vector.broadcast %cst_0 : f32 to vector<128x128xf32>
      %151 = arith.select %148, %149, %150 : vector<128x128xi1>, vector<128x128xf32>
      %152 = arith.addf %144, %151 : vector<128x128xf32>
      %153 = vector.extract_strided_slice %8 {offsets = [0, 18], sizes = [128, 1], strides = [1, 1]} : vector<128x20xi32> to vector<128x1xi32>
      %154 = vector.broadcast %153 : vector<128x1xi32> to vector<128x128xi32>
      %155 = vector.broadcast %2 : vector<1x128xi32> to vector<128x128xi32>
      %156 = arith.cmpi eq, %154, %155 : vector<128x128xi32>
      %157 = vector.broadcast %cst : f32 to vector<128x128xf32>
      %158 = vector.broadcast %cst_0 : f32 to vector<128x128xf32>
      %159 = arith.select %156, %157, %158 : vector<128x128xi1>, vector<128x128xf32>
      %160 = arith.addf %152, %159 : vector<128x128xf32>
      %161 = vector.extract_strided_slice %8 {offsets = [0, 19], sizes = [128, 1], strides = [1, 1]} : vector<128x20xi32> to vector<128x1xi32>
      %162 = vector.broadcast %161 : vector<128x1xi32> to vector<128x128xi32>
      %163 = vector.broadcast %2 : vector<1x128xi32> to vector<128x128xi32>
      %164 = arith.cmpi eq, %162, %163 : vector<128x128xi32>
      %165 = vector.broadcast %cst : f32 to vector<128x128xf32>
      %166 = vector.broadcast %cst_0 : f32 to vector<128x128xf32>
      %167 = arith.select %164, %165, %166 : vector<128x128xi1>, vector<128x128xf32>
      %168 = arith.addf %160, %167 : vector<128x128xf32>
      %169 = arith.addf %137, %168 : vector<128x128xf32>
      %170 = vector.extract_strided_slice %10 {offsets = [0, 0], sizes = [128, 1], strides = [1, 1]} : vector<128x14xi32> to vector<128x1xi32>
      %171 = vector.broadcast %170 : vector<128x1xi32> to vector<128x128xi32>
      %172 = vector.broadcast %2 : vector<1x128xi32> to vector<128x128xi32>
      %173 = arith.cmpi eq, %171, %172 : vector<128x128xi32>
      %174 = vector.broadcast %cst : f32 to vector<128x128xf32>
      %175 = vector.broadcast %cst_0 : f32 to vector<128x128xf32>
      %176 = arith.select %173, %174, %175 : vector<128x128xi1>, vector<128x128xf32>
      %177 = vector.extract_strided_slice %10 {offsets = [0, 1], sizes = [128, 1], strides = [1, 1]} : vector<128x14xi32> to vector<128x1xi32>
      %178 = vector.broadcast %177 : vector<128x1xi32> to vector<128x128xi32>
      %179 = vector.broadcast %2 : vector<1x128xi32> to vector<128x128xi32>
      %180 = arith.cmpi eq, %178, %179 : vector<128x128xi32>
      %181 = vector.broadcast %cst : f32 to vector<128x128xf32>
      %182 = vector.broadcast %cst_0 : f32 to vector<128x128xf32>
      %183 = arith.select %180, %181, %182 : vector<128x128xi1>, vector<128x128xf32>
      %184 = arith.addf %176, %183 : vector<128x128xf32>
      %185 = vector.extract_strided_slice %10 {offsets = [0, 2], sizes = [128, 1], strides = [1, 1]} : vector<128x14xi32> to vector<128x1xi32>
      %186 = vector.broadcast %185 : vector<128x1xi32> to vector<128x128xi32>
      %187 = vector.broadcast %2 : vector<1x128xi32> to vector<128x128xi32>
      %188 = arith.cmpi eq, %186, %187 : vector<128x128xi32>
      %189 = vector.broadcast %cst : f32 to vector<128x128xf32>
      %190 = vector.broadcast %cst_0 : f32 to vector<128x128xf32>
      %191 = arith.select %188, %189, %190 : vector<128x128xi1>, vector<128x128xf32>
      %192 = arith.addf %184, %191 : vector<128x128xf32>
      %193 = vector.extract_strided_slice %10 {offsets = [0, 3], sizes = [128, 1], strides = [1, 1]} : vector<128x14xi32> to vector<128x1xi32>
      %194 = vector.broadcast %193 : vector<128x1xi32> to vector<128x128xi32>
      %195 = vector.broadcast %2 : vector<1x128xi32> to vector<128x128xi32>
      %196 = arith.cmpi eq, %194, %195 : vector<128x128xi32>
      %197 = vector.broadcast %cst : f32 to vector<128x128xf32>
      %198 = vector.broadcast %cst_0 : f32 to vector<128x128xf32>
      %199 = arith.select %196, %197, %198 : vector<128x128xi1>, vector<128x128xf32>
      %200 = arith.addf %192, %199 : vector<128x128xf32>
      %201 = vector.extract_strided_slice %10 {offsets = [0, 4], sizes = [128, 1], strides = [1, 1]} : vector<128x14xi32> to vector<128x1xi32>
      %202 = vector.broadcast %201 : vector<128x1xi32> to vector<128x128xi32>
      %203 = vector.broadcast %2 : vector<1x128xi32> to vector<128x128xi32>
      %204 = arith.cmpi eq, %202, %203 : vector<128x128xi32>
      %205 = vector.broadcast %cst : f32 to vector<128x128xf32>
      %206 = vector.broadcast %cst_0 : f32 to vector<128x128xf32>
      %207 = arith.select %204, %205, %206 : vector<128x128xi1>, vector<128x128xf32>
      %208 = vector.extract_strided_slice %10 {offsets = [0, 5], sizes = [128, 1], strides = [1, 1]} : vector<128x14xi32> to vector<128x1xi32>
      %209 = vector.broadcast %208 : vector<128x1xi32> to vector<128x128xi32>
      %210 = vector.broadcast %2 : vector<1x128xi32> to vector<128x128xi32>
      %211 = arith.cmpi eq, %209, %210 : vector<128x128xi32>
      %212 = vector.broadcast %cst : f32 to vector<128x128xf32>
      %213 = vector.broadcast %cst_0 : f32 to vector<128x128xf32>
      %214 = arith.select %211, %212, %213 : vector<128x128xi1>, vector<128x128xf32>
      %215 = arith.addf %207, %214 : vector<128x128xf32>
      %216 = vector.extract_strided_slice %10 {offsets = [0, 6], sizes = [128, 1], strides = [1, 1]} : vector<128x14xi32> to vector<128x1xi32>
      %217 = vector.broadcast %216 : vector<128x1xi32> to vector<128x128xi32>
      %218 = vector.broadcast %2 : vector<1x128xi32> to vector<128x128xi32>
      %219 = arith.cmpi eq, %217, %218 : vector<128x128xi32>
      %220 = vector.broadcast %cst : f32 to vector<128x128xf32>
      %221 = vector.broadcast %cst_0 : f32 to vector<128x128xf32>
      %222 = arith.select %219, %220, %221 : vector<128x128xi1>, vector<128x128xf32>
      %223 = arith.addf %215, %222 : vector<128x128xf32>
      %224 = vector.extract_strided_slice %10 {offsets = [0, 7], sizes = [128, 1], strides = [1, 1]} : vector<128x14xi32> to vector<128x1xi32>
      %225 = vector.broadcast %224 : vector<128x1xi32> to vector<128x128xi32>
      %226 = vector.broadcast %2 : vector<1x128xi32> to vector<128x128xi32>
      %227 = arith.cmpi eq, %225, %226 : vector<128x128xi32>
      %228 = vector.broadcast %cst : f32 to vector<128x128xf32>
      %229 = vector.broadcast %cst_0 : f32 to vector<128x128xf32>
      %230 = arith.select %227, %228, %229 : vector<128x128xi1>, vector<128x128xf32>
      %231 = arith.addf %223, %230 : vector<128x128xf32>
      %232 = arith.addf %200, %231 : vector<128x128xf32>
      %233 = vector.extract_strided_slice %10 {offsets = [0, 8], sizes = [128, 1], strides = [1, 1]} : vector<128x14xi32> to vector<128x1xi32>
      %234 = vector.broadcast %233 : vector<128x1xi32> to vector<128x128xi32>
      %235 = vector.broadcast %2 : vector<1x128xi32> to vector<128x128xi32>
      %236 = arith.cmpi eq, %234, %235 : vector<128x128xi32>
      %237 = vector.broadcast %cst : f32 to vector<128x128xf32>
      %238 = vector.broadcast %cst_0 : f32 to vector<128x128xf32>
      %239 = arith.select %236, %237, %238 : vector<128x128xi1>, vector<128x128xf32>
      %240 = vector.extract_strided_slice %10 {offsets = [0, 9], sizes = [128, 1], strides = [1, 1]} : vector<128x14xi32> to vector<128x1xi32>
      %241 = vector.broadcast %240 : vector<128x1xi32> to vector<128x128xi32>
      %242 = vector.broadcast %2 : vector<1x128xi32> to vector<128x128xi32>
      %243 = arith.cmpi eq, %241, %242 : vector<128x128xi32>
      %244 = vector.broadcast %cst : f32 to vector<128x128xf32>
      %245 = vector.broadcast %cst_0 : f32 to vector<128x128xf32>
      %246 = arith.select %243, %244, %245 : vector<128x128xi1>, vector<128x128xf32>
      %247 = arith.addf %239, %246 : vector<128x128xf32>
      %248 = vector.extract_strided_slice %10 {offsets = [0, 10], sizes = [128, 1], strides = [1, 1]} : vector<128x14xi32> to vector<128x1xi32>
      %249 = vector.broadcast %248 : vector<128x1xi32> to vector<128x128xi32>
      %250 = vector.broadcast %2 : vector<1x128xi32> to vector<128x128xi32>
      %251 = arith.cmpi eq, %249, %250 : vector<128x128xi32>
      %252 = vector.broadcast %cst : f32 to vector<128x128xf32>
      %253 = vector.broadcast %cst_0 : f32 to vector<128x128xf32>
      %254 = arith.select %251, %252, %253 : vector<128x128xi1>, vector<128x128xf32>
      %255 = arith.addf %247, %254 : vector<128x128xf32>
      %256 = vector.extract_strided_slice %10 {offsets = [0, 11], sizes = [128, 1], strides = [1, 1]} : vector<128x14xi32> to vector<128x1xi32>
      %257 = vector.broadcast %256 : vector<128x1xi32> to vector<128x128xi32>
      %258 = vector.broadcast %2 : vector<1x128xi32> to vector<128x128xi32>
      %259 = arith.cmpi eq, %257, %258 : vector<128x128xi32>
      %260 = vector.broadcast %cst : f32 to vector<128x128xf32>
      %261 = vector.broadcast %cst_0 : f32 to vector<128x128xf32>
      %262 = arith.select %259, %260, %261 : vector<128x128xi1>, vector<128x128xf32>
      %263 = arith.addf %255, %262 : vector<128x128xf32>
      %264 = arith.addf %232, %263 : vector<128x128xf32>
      %265 = vector.extract_strided_slice %10 {offsets = [0, 12], sizes = [128, 1], strides = [1, 1]} : vector<128x14xi32> to vector<128x1xi32>
      %266 = vector.broadcast %265 : vector<128x1xi32> to vector<128x128xi32>
      %267 = vector.broadcast %2 : vector<1x128xi32> to vector<128x128xi32>
      %268 = arith.cmpi eq, %266, %267 : vector<128x128xi32>
      %269 = vector.broadcast %cst : f32 to vector<128x128xf32>
      %270 = vector.broadcast %cst_0 : f32 to vector<128x128xf32>
      %271 = arith.select %268, %269, %270 : vector<128x128xi1>, vector<128x128xf32>
      %272 = vector.extract_strided_slice %10 {offsets = [0, 13], sizes = [128, 1], strides = [1, 1]} : vector<128x14xi32> to vector<128x1xi32>
      %273 = vector.broadcast %272 : vector<128x1xi32> to vector<128x128xi32>
      %274 = vector.broadcast %2 : vector<1x128xi32> to vector<128x128xi32>
      %275 = arith.cmpi eq, %273, %274 : vector<128x128xi32>
      %276 = vector.broadcast %cst : f32 to vector<128x128xf32>
      %277 = vector.broadcast %cst_0 : f32 to vector<128x128xf32>
      %278 = arith.select %275, %276, %277 : vector<128x128xi1>, vector<128x128xf32>
      %279 = arith.addf %271, %278 : vector<128x128xf32>
      %280 = arith.addf %264, %279 : vector<128x128xf32>
      %cst_4 = arith.constant dense<0.000000e+00> : vector<128xf32>
      %281 = vector.multi_reduction <add>, %169, %cst_4 [1] : vector<128x128xf32> to vector<128xf32>
      %282 = vector.shape_cast %281 : vector<128xf32> to vector<128x1xf32>
      %283 = arith.fptosi %282 : vector<128x1xf32> to vector<128x1xi32>
      %284 = vector.broadcast %283 : vector<128x1xi32> to vector<128x128xi32>
      %285 = vector.broadcast %3 : vector<1x128xi32> to vector<128x128xi32>
      %286 = arith.cmpi eq, %284, %285 : vector<128x128xi32>
      %287 = vector.broadcast %cst : f32 to vector<128x128xf32>
      %288 = vector.broadcast %cst_0 : f32 to vector<128x128xf32>
      %289 = arith.select %286, %287, %288 : vector<128x128xi1>, vector<128x128xf32>
      %290 = arith.truncf %169 : vector<128x128xf32> to vector<128x128xbf16>
      %291 = arith.truncf %280 : vector<128x128xf32> to vector<128x128xbf16>
      %292 = arith.truncf %289 : vector<128x128xf32> to vector<128x128xbf16>
      %293 = tpu.concatenate %290, %291, %292 in 1 : vector<128x128xbf16>, vector<128x128xbf16>, vector<128x128xbf16> -> vector<128x384xbf16>
      %c0_5 = arith.constant 0 : index
      %c0_6 = arith.constant 0 : index
      %294 = vector.load %arg3[%c0_5, %c0_6] : memref<384x128xbf16, #tpu.memory_space<vmem>>, vector<384x128xbf16>
      %cst_7 = arith.constant dense<0.000000e+00> : vector<128x128xf32>
      %295 = tpu.matmul %293, %294, %cst_7 {dimension_numbers = #tpu.dot_dimension_numbers<[1], [0], [0], [1], [0, 0, 1, 1], [], []>} : vector<128x384xbf16>, vector<384x128xbf16>, vector<128x128xf32> -> vector<128x128xf32>
      %c0_8 = arith.constant 0 : index
      %c0_9 = arith.constant 0 : index
      %296 = vector.load %arg4[%c0_8, %c0_9] : memref<1x128xf32, #tpu.memory_space<vmem>>, vector<1x128xf32>
      %297 = vector.broadcast %296 : vector<1x128xf32> to vector<128x128xf32>
      %298 = arith.addf %295, %297 : vector<128x128xf32>
      %cst_10 = arith.constant 0.000000e+00 : f32
      %299 = vector.broadcast %cst_10 : f32 to vector<128x128xf32>
      %300 = arith.maximumf %298, %299 : vector<128x128xf32>
      %301 = arith.truncf %300 : vector<128x128xf32> to vector<128x128xbf16>
      %c0_11 = arith.constant 0 : index
      %c0_12 = arith.constant 0 : index
      %302 = vector.load %arg5[%c0_11, %c0_12] : memref<128x128xbf16, #tpu.memory_space<vmem>>, vector<128x128xbf16>
      %cst_13 = arith.constant dense<0.000000e+00> : vector<128x128xf32>
      %303 = tpu.matmul %301, %302, %cst_13 {dimension_numbers = #tpu.dot_dimension_numbers<[1], [0], [0], [1], [0, 0, 1, 1], [], []>} : vector<128x128xbf16>, vector<128x128xbf16>, vector<128x128xf32> -> vector<128x128xf32>
      %c0_14 = arith.constant 0 : index
      %c0_15 = arith.constant 0 : index
      %304 = vector.load %arg6[%c0_14, %c0_15] : memref<1x128xf32, #tpu.memory_space<vmem>>, vector<1x128xf32>
      %305 = vector.broadcast %304 : vector<1x128xf32> to vector<128x128xf32>
      %306 = arith.addf %303, %305 : vector<128x128xf32>
      %cst_16 = arith.constant 0.000000e+00 : f32
      %307 = vector.broadcast %cst_16 : f32 to vector<128x128xf32>
      %308 = arith.maximumf %306, %307 : vector<128x128xf32>
      %309 = arith.truncf %308 : vector<128x128xf32> to vector<128x128xbf16>
      %c0_17 = arith.constant 0 : index
      %c0_18 = arith.constant 0 : index
      %310 = vector.load %arg7[%c0_17, %c0_18] : memref<128x128xbf16, #tpu.memory_space<vmem>>, vector<128x128xbf16>
      %cst_19 = arith.constant dense<0.000000e+00> : vector<128x128xf32>
      %311 = tpu.matmul %309, %310, %cst_19 {dimension_numbers = #tpu.dot_dimension_numbers<[1], [0], [0], [1], [0, 0, 1, 1], [], []>} : vector<128x128xbf16>, vector<128x128xbf16>, vector<128x128xf32> -> vector<128x128xf32>
      %c0_20 = arith.constant 0 : index
      %c0_21 = arith.constant 0 : index
      %312 = vector.load %arg8[%c0_20, %c0_21] : memref<1x128xf32, #tpu.memory_space<vmem>>, vector<1x128xf32>
      %313 = vector.broadcast %312 : vector<1x128xf32> to vector<128x128xf32>
      %314 = arith.addf %311, %313 : vector<128x128xf32>
      %315 = arith.truncf %314 : vector<128x128xf32> to vector<128x128xbf16>
      %316 = arith.index_cast %6 : i32 to index
      %c0_22 = arith.constant 0 : index
      %317 = vector.load %arg9[%316, %c0_22] : memref<256x128xbf16, #tpu.memory_space<vmem>>, vector<128x128xbf16>
      tpu.vector_store %arg9[%316, %c0_22], %315 {strides = array<i32>} : memref<256x128xbf16, #tpu.memory_space<vmem>>, vector<128x128xbf16>,
    }
    %c2_i32_2 = arith.constant 2 : i32
    return
  }
  func.func @transform_0(%arg0: i32) -> (i32, i32) {
    %c0_i32 = arith.constant 0 : i32
    %c0_i32_0 = arith.constant 0 : i32
    return %arg0, %c0_i32 : i32, i32
  }
  func.func @transform_1(%arg0: i32) -> (i32, i32) {
    %c0_i32 = arith.constant 0 : i32
    %c0_i32_0 = arith.constant 0 : i32
    return %arg0, %c0_i32 : i32, i32
  }
  func.func @transform_2(%arg0: i32) -> (i32, i32) {
    %c0_i32 = arith.constant 0 : i32
    %c0_i32_0 = arith.constant 0 : i32
    %c0_i32_1 = arith.constant 0 : i32
    return %c0_i32, %c0_i32_0 : i32, i32
  }
  func.func @transform_3(%arg0: i32) -> (i32, i32) {
    %c0_i32 = arith.constant 0 : i32
    %c0_i32_0 = arith.constant 0 : i32
    %c0_i32_1 = arith.constant 0 : i32
    return %c0_i32, %c0_i32_0 : i32, i32
  }
  func.func @transform_4(%arg0: i32) -> (i32, i32) {
    %c0_i32 = arith.constant 0 : i32
    %c0_i32_0 = arith.constant 0 : i32
    %c0_i32_1 = arith.constant 0 : i32
    return %c0_i32, %c0_i32_0 : i32, i32
  }
  func.func @transform_5(%arg0: i32) -> (i32, i32) {
    %c0_i32 = arith.constant 0 : i32
    %c0_i32_0 = arith.constant 0 : i32
    %c0_i32_1 = arith.constant 0 : i32
    return %c0_i32, %c0_i32_0 : i32, i32
  }
  func.func @transform_6(%arg0: i32) -> (i32, i32) {
    %c0_i32 = arith.constant 0 : i32
    %c0_i32_0 = arith.constant 0 : i32
    %c0_i32_1 = arith.constant 0 : i32
    return %c0_i32, %c0_i32_0 : i32, i32
  }
  func.func @transform_7(%arg0: i32) -> (i32, i32) {
    %c0_i32 = arith.constant 0 : i32
    %c0_i32_0 = arith.constant 0 : i32
    %c0_i32_1 = arith.constant 0 : i32
    return %c0_i32, %c0_i32_0 : i32, i32
  }
  func.func @transform_8(%arg0: i32) -> (i32, i32) {
    %c0_i32 = arith.constant 0 : i32
    %c0_i32_0 = arith.constant 0 : i32
    return %arg0, %c0_i32 : i32, i32
  }
}

</mosaic_0001>

<llo_original>
// kernel: tpu_custom_call.1
$region0: #{tpu_custom_call.1}
  #allocation0 [shape = 'u32[]', space=smem, size = 0x4, offset = 0x4, fixed_abs, tag = 'smem constant byte address 0x4 - core index']
  #allocation1 [shape = 'u32[144,128]{1,0:T(1,128)}', space=vmem, size = 0x12000, scoped, tag = 'internal scratch']
  %s0 = inlined_call_operand.vmem [shape: s32[512,20], index: 0, kind: input, shape index: {}]
  %s1 = inlined_call_operand.vmem [shape: s32[512,14], index: 1, kind: input, shape index: {}]
  %s2 = inlined_call_operand.vmem [shape: bf16[384,128], index: 2, kind: input, shape index: {}]
  %s3 = inlined_call_operand.vmem [shape: f32[1,128], index: 3, kind: input, shape index: {}]
  %s4 = inlined_call_operand.vmem [shape: bf16[128,128], index: 4, kind: input, shape index: {}]
  %s5 = inlined_call_operand.vmem [shape: f32[1,128], index: 5, kind: input, shape index: {}]
  %s6 = inlined_call_operand.vmem [shape: bf16[128,128], index: 6, kind: input, shape index: {}]
  %s7 = inlined_call_operand.vmem [shape: f32[1,128], index: 7, kind: input, shape index: {}]
  %s8 = inlined_call_operand.hbm [shape: bf16[512,128], index: 8, kind: output, shape index: {}]
  %s9 = sld [smem:[#allocation0]]
  $region72: #{tpu_custom_call.1} parent=0
    _
  %s11 = ssub.s32 1, %s9
  %s12 = scalar_select 0, %s11, %s9
  $region1: #{tpu_custom_call.1} parent=0
    #allocation2 [shape = 'u8[131072]{0}', space=vmem, size = 0x20000, scoped, tag = 'output window, operand 0']
    #allocation3 [shape = 's32[2]{0}', space=sflag, size = 0x8, scoped, tag = 'scoped memory for tpu_custom_call.1']
    %13 = vsyncpa [#allocation3], 0
    %s14 = scalar_lea.sflag [#allocation3], 1
    %15 = vsyncpa %s14, 0
    loop: start=0, step=1, limit=4
    $region2: #{tpu_custom_call.1} parent=1 // loop_pre_header
      _
    $region3: #{tpu_custom_call.1} parent=1 // loop_header
      %s17 = sphi 0, %s21
      %p18 = scmp.ge.s32.totalorder %s17, 4
      %s27 = sphi 0, %s29
      %s30 = sphi 0, %s27
      %s31 = sphi 0, %s30
      %s47 = sphi 0, %s31
      %s53 = sphi 0, %s55
      %s56 = sphi 0, %s53
      %s57 = sphi 0, %s56
      %s73 = sphi 0, %s57
      %s77 = sphi 0, %s77
      %s79 = sphi 0, %s77
      %s80 = sphi 0, %s79
      %s94 = sphi 0, %s80
      %s98 = sphi 0, %s98
      %s100 = sphi 0, %s98
      %s101 = sphi 0, %s100
      %s115 = sphi 0, %s101
      %s119 = sphi 0, %s119
      %s121 = sphi 0, %s119
      %s122 = sphi 0, %s121
      %s136 = sphi 0, %s122
      %s140 = sphi 0, %s140
      %s142 = sphi 0, %s140
      %s143 = sphi 0, %s142
      %s157 = sphi 0, %s143
      %s161 = sphi 0, %s161
      %s163 = sphi 0, %s161
      %s164 = sphi 0, %s163
      %s178 = sphi 0, %s164
      %s182 = sphi 0, %s182
      %s184 = sphi 0, %s182
      %s185 = sphi 0, %s184
      %s199 = sphi 0, %s185
      %s205 = sphi 0, %s207
      %s208 = sphi 0, %s205
      %s209 = sphi 0, %s208
      %s225 = sphi 0, %s209
    $region4: #{tpu_custom_call.1} parent=1 // loop_header_branch
      %20 = sbr.rel (%p18) target = $region8
    $region5: #{tpu_custom_call.1} parent=1 // loop_body
      %s22 = ssub.s32 %s17, 1
      %s23 = ssub.s32 %s17, 2
      %s24 = sadd.s32 %s17, 1
      %s25 = ssub.s32 %s17, %s24
      %p26 = scmp.eq.s32.totalorder %s25, 0
      %s28 = sadd.s32 %s27, 1
      %s29 = scalar_select %p26, %s27, %s28
      %p32 = pneg %p26
      %p33 = scmp.eq.s32.totalorder %s17, 1
      %p34 = por %p32, %p33
      %p35 = scmp.ne.s32.totalorder %s27, %s30
      %p36 = scmp.eq.s32.totalorder %s17, 0
      %p37 = por %p35, %p36
      %p38 = scmp.ne.s32.totalorder %s27, %s30
      %p39 = scmp.eq.s32.totalorder %s22, 1
      %p40 = por %p38, %p39
      %p41 = scmp.ne.s32.totalorder %s30, %s31
      %p42 = scmp.eq.s32.totalorder %s22, 0
      %p43 = por %p41, %p42
      %p44 = scmp.ne.s32.totalorder %s30, %s31
      %p45 = scmp.eq.s32.totalorder %s23, 1
      %p46 = por %p44, %p45
      %p48 = scmp.ne.s32.totalorder %s31, %s47
      %p49 = scmp.eq.s32.totalorder %s23, 0
      %p50 = por %p48, %p49
      %s51 = ssub.s32 %s17, %s24
      %p52 = scmp.eq.s32.totalorder %s51, 0
      %s54 = sadd.s32 %s53, 1
      %s55 = scalar_select %p52, %s53, %s54
      %p58 = pneg %p52
      %p59 = scmp.eq.s32.totalorder %s17, 1
      %p60 = por %p58, %p59
      %p61 = scmp.ne.s32.totalorder %s53, %s56
      %p62 = scmp.eq.s32.totalorder %s17, 0
      %p63 = por %p61, %p62
      %p64 = scmp.ne.s32.totalorder %s53, %s56
      %p65 = scmp.eq.s32.totalorder %s22, 1
      %p66 = por %p64, %p65
      %p67 = scmp.ne.s32.totalorder %s56, %s57
      %p68 = scmp.eq.s32.totalorder %s22, 0
      %p69 = por %p67, %p68
      %p70 = scmp.ne.s32.totalorder %s56, %s57
      %p71 = scmp.eq.s32.totalorder %s23, 1
      %p72 = por %p70, %p71
      %p74 = scmp.ne.s32.totalorder %s57, %s73
      %p75 = scmp.eq.s32.totalorder %s23, 0
      %p76 = por %p74, %p75
      %s78 = sadd.s32 %s77, 1
      %p81 = scmp.eq.s32.totalorder %s17, 1
      %p82 = scmp.ne.s32.totalorder %s77, %s79
      %p83 = scmp.eq.s32.totalorder %s17, 0
      %p84 = por %p82, %p83
      %p85 = scmp.ne.s32.totalorder %s77, %s79
      %p86 = scmp.eq.s32.totalorder %s22, 1
      %p87 = por %p85, %p86
      %p88 = scmp.ne.s32.totalorder %s79, %s80
      %p89 = scmp.eq.s32.totalorder %s22, 0
      %p90 = por %p88, %p89
      %p91 = scmp.ne.s32.totalorder %s79, %s80
      %p92 = scmp.eq.s32.totalorder %s23, 1
      %p93 = por %p91, %p92
      %p95 = scmp.ne.s32.totalorder %s80, %s94
      %p96 = scmp.eq.s32.totalorder %s23, 0
      %p97 = por %p95, %p96
      %s99 = sadd.s32 %s98, 1
      %p102 = scmp.eq.s32.totalorder %s17, 1
      %p103 = scmp.ne.s32.totalorder %s98, %s100
      %p104 = scmp.eq.s32.totalorder %s17, 0
      %p105 = por %p103, %p104
      %p106 = scmp.ne.s32.totalorder %s98, %s100
      %p107 = scmp.eq.s32.totalorder %s22, 1
      %p108 = por %p106, %p107
      %p109 = scmp.ne.s32.totalorder %s100, %s101
      %p110 = scmp.eq.s32.totalorder %s22, 0
      %p111 = por %p109, %p110
      %p112 = scmp.ne.s32.totalorder %s100, %s101
      %p113 = scmp.eq.s32.totalorder %s23, 1
      %p114 = por %p112, %p113
      %p116 = scmp.ne.s32.totalorder %s101, %s115
      %p117 = scmp.eq.s32.totalorder %s23, 0
      %p118 = por %p116, %p117
      %s120 = sadd.s32 %s119, 1
      %p123 = scmp.eq.s32.totalorder %s17, 1
      %p124 = scmp.ne.s32.totalorder %s119, %s121
      %p125 = scmp.eq.s32.totalorder %s17, 0
      %p126 = por %p124, %p125
      %p127 = scmp.ne.s32.totalorder %s119, %s121
      %p128 = scmp.eq.s32.totalorder %s22, 1
      %p129 = por %p127, %p128
      %p130 = scmp.ne.s32.totalorder %s121, %s122
      %p131 = scmp.eq.s32.totalorder %s22, 0
      %p132 = por %p130, %p131
      %p133 = scmp.ne.s32.totalorder %s121, %s122
      %p134 = scmp.eq.s32.totalorder %s23, 1
      %p135 = por %p133, %p134
      %p137 = scmp.ne.s32.totalorder %s122, %s136
      %p138 = scmp.eq.s32.totalorder %s23, 0
      %p139 = por %p137, %p138
      %s141 = sadd.s32 %s140, 1
      %p144 = scmp.eq.s32.totalorder %s17, 1
      %p145 = scmp.ne.s32.totalorder %s140, %s142
      %p146 = scmp.eq.s32.totalorder %s17, 0
      %p147 = por %p145, %p146
      %p148 = scmp.ne.s32.totalorder %s140, %s142
      %p149 = scmp.eq.s32.totalorder %s22, 1
      %p150 = por %p148, %p149
      %p151 = scmp.ne.s32.totalorder %s142, %s143
      %p152 = scmp.eq.s32.totalorder %s22, 0
      %p153 = por %p151, %p152
      %p154 = scmp.ne.s32.totalorder %s142, %s143
      %p155 = scmp.eq.s32.totalorder %s23, 1
      %p156 = por %p154, %p155
      %p158 = scmp.ne.s32.totalorder %s143, %s157
      %p159 = scmp.eq.s32.totalorder %s23, 0
      %p160 = por %p158, %p159
      %s162 = sadd.s32 %s161, 1
      %p165 = scmp.eq.s32.totalorder %s17, 1
      %p166 = scmp.ne.s32.totalorder %s161, %s163
      %p167 = scmp.eq.s32.totalorder %s17, 0
      %p168 = por %p166, %p167
      %p169 = scmp.ne.s32.totalorder %s161, %s163
      %p170 = scmp.eq.s32.totalorder %s22, 1
      %p171 = por %p169, %p170
      %p172 = scmp.ne.s32.totalorder %s163, %s164
      %p173 = scmp.eq.s32.totalorder %s22, 0
      %p174 = por %p172, %p173
      %p175 = scmp.ne.s32.totalorder %s163, %s164
      %p176 = scmp.eq.s32.totalorder %s23, 1
      %p177 = por %p175, %p176
      %p179 = scmp.ne.s32.totalorder %s164, %s178
      %p180 = scmp.eq.s32.totalorder %s23, 0
      %p181 = por %p179, %p180
      %s183 = sadd.s32 %s182, 1
      %p186 = scmp.eq.s32.totalorder %s17, 1
      %p187 = scmp.ne.s32.totalorder %s182, %s184
      %p188 = scmp.eq.s32.totalorder %s17, 0
      %p189 = por %p187, %p188
      %p190 = scmp.ne.s32.totalorder %s182, %s184
      %p191 = scmp.eq.s32.totalorder %s22, 1
      %p192 = por %p190, %p191
      %p193 = scmp.ne.s32.totalorder %s184, %s185
      %p194 = scmp.eq.s32.totalorder %s22, 0
      %p195 = por %p193, %p194
      %p196 = scmp.ne.s32.totalorder %s184, %s185
      %p197 = scmp.eq.s32.totalorder %s23, 1
      %p198 = por %p196, %p197
      %p200 = scmp.ne.s32.totalorder %s185, %s199
      %p201 = scmp.eq.s32.totalorder %s23, 0
      %p202 = por %p200, %p201
      %s203 = ssub.s32 %s17, %s24
      %p204 = scmp.eq.s32.totalorder %s203, 0
      %s206 = sadd.s32 %s205, 1
      %s207 = scalar_select %p204, %s205, %s206
      %p210 = pneg %p204
      %p211 = scmp.eq.s32.totalorder %s17, 1
      %p212 = por %p210, %p211
      %p213 = scmp.ne.s32.totalorder %s205, %s208
      %p214 = scmp.eq.s32.totalorder %s17, 0
      %p215 = por %p213, %p214
      %p216 = scmp.ne.s32.totalorder %s205, %s208
      %p217 = scmp.eq.s32.totalorder %s22, 1
      %p218 = por %p216, %p217
      %p219 = scmp.ne.s32.totalorder %s208, %s209
      %p220 = scmp.eq.s32.totalorder %s22, 0
      %p221 = por %p219, %p220
      %p222 = scmp.ne.s32.totalorder %s208, %s209
      %p223 = scmp.eq.s32.totalorder %s23, 1
      %p224 = por %p222, %p223
      %p226 = scmp.ne.s32.totalorder %s209, %s225
      %p227 = scmp.eq.s32.totalorder %s23, 0
      %p228 = por %p226, %p227
      %p229 = scmp.le.s32.totalorder 1, %s17
      %p230 = scmp.lt.s32.totalorder %s17, 3
      %p231 = pnand %p229, %p230
      %p232 = pneg %p231
      // Predicated region
      $region9: #{tpu_custom_call.1} parent=5 // pred_check
        _
      $region10: #{tpu_custom_call.1} parent=5 // pred_check_branch
        %234 = sbr.rel (%p231) target = $region12
      $region11: #{tpu_custom_call.1} parent=5 // pred_region
        %s235 = ssub.s32 %s17, 1
        // Predicated region
        $region13: #{tpu_custom_call.1} parent=11 // pred_check
          %p236 = pneg %p90
        $region14: #{tpu_custom_call.1} parent=11 // pred_check_branch
          %238 = sbr.rel (%p236) target = $region16
        $region15: #{tpu_custom_call.1} parent=11 // pred_region
          _
        $region16: #{tpu_custom_call.1} parent=11 // pred_fallthru
          _
        // Predicated region
        $region17: #{tpu_custom_call.1} parent=11 // pred_check
          %p239 = pneg %p111
        $region18: #{tpu_custom_call.1} parent=11 // pred_check_branch
          %241 = sbr.rel (%p239) target = $region20
        $region19: #{tpu_custom_call.1} parent=11 // pred_region
          _
        $region20: #{tpu_custom_call.1} parent=11 // pred_fallthru
          _
        // Predicated region
        $region21: #{tpu_custom_call.1} parent=11 // pred_check
          %p242 = pneg %p132
        $region22: #{tpu_custom_call.1} parent=11 // pred_check_branch
          %244 = sbr.rel (%p242) target = $region24
        $region23: #{tpu_custom_call.1} parent=11 // pred_region
          _
        $region24: #{tpu_custom_call.1} parent=11 // pred_fallthru
          _
        // Predicated region
        $region25: #{tpu_custom_call.1} parent=11 // pred_check
          %p245 = pneg %p153
        $region26: #{tpu_custom_call.1} parent=11 // pred_check_branch
          %247 = sbr.rel (%p245) target = $region28
        $region27: #{tpu_custom_call.1} parent=11 // pred_region
          _
        $region28: #{tpu_custom_call.1} parent=11 // pred_fallthru
          _
        // Predicated region
        $region29: #{tpu_custom_call.1} parent=11 // pred_check
          %p248 = pneg %p174
        $region30: #{tpu_custom_call.1} parent=11 // pred_check_branch
          %250 = sbr.rel (%p248) target = $region32
        $region31: #{tpu_custom_call.1} parent=11 // pred_region
          _
        $region32: #{tpu_custom_call.1} parent=11 // pred_fallthru
          _
        // Predicated region
        $region33: #{tpu_custom_call.1} parent=11 // pred_check
          %p251 = pneg %p195
        $region34: #{tpu_custom_call.1} parent=11 // pred_check_branch
          %253 = sbr.rel (%p251) target = $region36
        $region35: #{tpu_custom_call.1} parent=11 // pred_region
          _
        $region36: #{tpu_custom_call.1} parent=11 // pred_fallthru
          _
      $region12: #{tpu_custom_call.1} parent=5 // pred_fallthru
        _
      %p254 = scmp.lt.s32.totalorder %s17, 2
      // Predicated region
      $region37: #{tpu_custom_call.1} parent=5 // pred_check
        %p255 = pneg %p254
      $region38: #{tpu_custom_call.1} parent=5 // pred_check_branch
        %257 = sbr.rel (%p255) target = $region40
      $region39: #{tpu_custom_call.1} parent=5 // pred_region
        // Predicated region
        $region41: #{tpu_custom_call.1} parent=39 // pred_check
          %p258 = pneg %p37
        $region42: #{tpu_custom_call.1} parent=39 // pred_check_branch
          %260 = sbr.rel (%p258) target = $region44
        $region43: #{tpu_custom_call.1} parent=39 // pred_region
          %s261 = smul.u32 32, %s17
          %p262 = scmp.lt.s32.totalorder %s261, 63
          %s263 = scalar_select %p262, %s261, 63
          %s264 = smul.addr %s263, 8
          %s265 = scalar_lea.vmem %s0, %s264
          %s266 = smul.u32 32, %s17
        $region44: #{tpu_custom_call.1} parent=39 // pred_fallthru
          _
        // Predicated region
        $region45: #{tpu_custom_call.1} parent=39 // pred_check
          %p267 = pneg %p63
        $region46: #{tpu_custom_call.1} parent=39 // pred_check_branch
          %269 = sbr.rel (%p267) target = $region48
        $region47: #{tpu_custom_call.1} parent=39 // pred_region
          %s270 = smul.u32 32, %s17
          %p271 = scmp.lt.s32.totalorder %s270, 63
          %s272 = scalar_select %p271, %s270, 63
          %s273 = smul.addr %s272, 8
          %s274 = scalar_lea.vmem %s1, %s273
          %s275 = smul.u32 32, %s17
        $region48: #{tpu_custom_call.1} parent=39 // pred_fallthru
          _
      $region40: #{tpu_custom_call.1} parent=5 // pred_fallthru
        _
      %p276 = scmp.le.s32.totalorder 1, %s17
      %p277 = scmp.lt.s32.totalorder %s17, 3
      %p278 = pnand %p276, %p277
      %p279 = pneg %p278
      // Predicated region
      $region49: #{tpu_custom_call.1} parent=5 // pred_check
        _
      $region50: #{tpu_custom_call.1} parent=5 // pred_check_branch
        %281 = sbr.rel (%p278) target = $region52
      $region51: #{tpu_custom_call.1} parent=5 // pred_region
        %s282 = ssub.s32 %s17, 1
        %s283 = smul.u32 32, %s22
        %p284 = scmp.lt.s32.totalorder %s283, 63
        %s285 = scalar_select %p284, %s283, 63
        %s286 = smul.addr %s285, 8
        %s287 = scalar_lea.vmem %s0, %s286
        %p288 = pneg %p43
        %p289 = pneg %p40
        %s290 = smul.u32 32, %s22
        %p291 = scmp.lt.s32.totalorder %s290, 63
        %s292 = scalar_select %p291, %s290, 63
        %s293 = smul.addr %s292, 8
        %s294 = scalar_lea.vmem %s1, %s293
        %p295 = pneg %p69
        %p296 = pneg %p66
        %p297 = pneg %p90
        %p298 = pneg %p87
        %p299 = pneg %p111
        %p300 = pneg %p108
        %p301 = pneg %p132
        %p302 = pneg %p129
        %p303 = pneg %p153
        %p304 = pneg %p150
        %p305 = pneg %p174
        %p306 = pneg %p171
        %p307 = pneg %p195
        %p308 = pneg %p192
        %p309 = pneg %p221
        %p310 = pneg %p218
        %s311 = sand.u32 %s208, 1
        %s312 = scalar_lea.sflag [#allocation3], %s311
        %s313 = sand.u32 %s208, 1
        %s314 = smul.addr %s313, 128
        %s315 = scalar_lea.vmem [#allocation2], %s314
        %s316 = smul.u32 32, %s22
        %p317 = scmp.lt.s32.totalorder %s316, 63
        %s318 = scalar_select %p317, %s316, 63
        %s319 = smul.addr %s318, 8
        %s320 = scalar_lea.vmem %s0, %s319
        %s321 = smul.u32 32, %s22
        %s322 = smul.u32 32, %s22
        %p323 = scmp.lt.s32.totalorder %s322, 63
        %s324 = scalar_select %p323, %s322, 63
        %s325 = smul.addr %s324, 8
        %s326 = scalar_lea.vmem %s1, %s325
        %s327 = smul.u32 32, %s22
        %s328 = smul.u32 32, %s22
        %v330 = vlaneseq
        %v331 = vand.u32 %v330, 127
        %v332 = vadd.s32 %v331, 1
        loop: start=0, step=1, limit=2
        $region53: #{tpu_custom_call.1} parent=51 // loop_pre_header
          _
        $region54: #{tpu_custom_call.1} parent=51 // loop_header
          %s334 = sphi 0, %s338
          %p335 = scmp.ge.s32.totalorder %s334, 2
        $region55: #{tpu_custom_call.1} parent=51 // loop_header_branch
          %337 = sbr.rel (%p335) target = $region59
        $region56: #{tpu_custom_call.1} parent=51 // loop_body
          %s339 = smul.u32 %s334, 128
          %s340 = scalar_lea.vmem %s320, %s339
          %v341 = vld [vmem:[%s340] sm:$0xff]
          %v342 = vld [vmem:[%s340 + $0x8] sm:$0xff]
          %v343 = vld [vmem:[%s340 + $0x10] sm:$0xff]
          %v344 = vld [vmem:[%s340 + $0x18] sm:$0xff]
          %v345 = vld [vmem:[%s340 + $0x20] sm:$0xff]
          %v346 = vld [vmem:[%s340 + $0x28] sm:$0xff]
          %v347 = vld [vmem:[%s340 + $0x30] sm:$0xff]
          %v348 = vld [vmem:[%s340 + $0x38] sm:$0xff]
          %v349 = vld [vmem:[%s340 + $0x40] sm:$0xff]
          %v350 = vld [vmem:[%s340 + $0x48] sm:$0xff]
          %v351 = vld [vmem:[%s340 + $0x50] sm:$0xff]
          %v352 = vld [vmem:[%s340 + $0x58] sm:$0xff]
          %v353 = vld [vmem:[%s340 + $0x60] sm:$0xff]
          %v354 = vld [vmem:[%s340 + $0x68] sm:$0xff]
          %v355 = vld [vmem:[%s340 + $0x70] sm:$0xff]
          %v356 = vld [vmem:[%s340 + $0x78] sm:$0xff]
          %s357 = scalar_lea.vmem %s326, %s339
          %v358 = vld [vmem:[%s357] sm:$0xff]
          %v359 = vld [vmem:[%s357 + $0x8] sm:$0xff]
          %v360 = vld [vmem:[%s357 + $0x10] sm:$0xff]
          %v361 = vld [vmem:[%s357 + $0x18] sm:$0xff]
          %v362 = vld [vmem:[%s357 + $0x20] sm:$0xff]
          %v363 = vld [vmem:[%s357 + $0x28] sm:$0xff]
          %v364 = vld [vmem:[%s357 + $0x30] sm:$0xff]
          %v365 = vld [vmem:[%s357 + $0x38] sm:$0xff]
          %v366 = vld [vmem:[%s357 + $0x40] sm:$0xff]
          %v367 = vld [vmem:[%s357 + $0x48] sm:$0xff]
          %v368 = vld [vmem:[%s357 + $0x50] sm:$0xff]
          %v369 = vld [vmem:[%s357 + $0x58] sm:$0xff]
          %v370 = vld [vmem:[%s357 + $0x60] sm:$0xff]
          %v371 = vld [vmem:[%s357 + $0x68] sm:$0xff]
          %v372 = vld [vmem:[%s357 + $0x70] sm:$0xff]
          %v373 = vld [vmem:[%s357 + $0x78] sm:$0xff]
          %374 = vset.pattern.permute.xlu0 0
          %375 = vperm.xlu0 %374, %v341
          %v376 = vpop.permute.xlu0 %375
          %377 = vset.pattern.permute.xlu0 0
          %378 = vperm.xlu0 %377, %v342
          %v379 = vpop.permute.xlu0 %378
          %380 = vset.pattern.permute.xlu0 0
          %381 = vperm.xlu0 %380, %v343
          %v382 = vpop.permute.xlu0 %381
          %383 = vset.pattern.permute.xlu0 0
          %384 = vperm.xlu0 %383, %v344
          %v385 = vpop.permute.xlu0 %384
          %386 = vset.pattern.permute.xlu0 0
          %387 = vperm.xlu0 %386, %v345
          %v388 = vpop.permute.xlu0 %387
          %389 = vset.pattern.permute.xlu0 0
          %390 = vperm.xlu0 %389, %v346
          %v391 = vpop.permute.xlu0 %390
          %392 = vset.pattern.permute.xlu0 0
          %393 = vperm.xlu0 %392, %v347
          %v394 = vpop.permute.xlu0 %393
          %395 = vset.pattern.permute.xlu0 0
          %396 = vperm.xlu0 %395, %v348
          %v397 = vpop.permute.xlu0 %396
          %398 = vset.pattern.permute.xlu0 0
          %399 = vperm.xlu0 %398, %v349
          %v400 = vpop.permute.xlu0 %399
          %401 = vset.pattern.permute.xlu0 0
          %402 = vperm.xlu0 %401, %v350
          %v403 = vpop.permute.xlu0 %402
          %404 = vset.pattern.permute.xlu0 0
          %405 = vperm.xlu0 %404, %v351
          %v406 = vpop.permute.xlu0 %405
          %407 = vset.pattern.permute.xlu0 0
          %408 = vperm.xlu0 %407, %v352
          %v409 = vpop.permute.xlu0 %408
          %410 = vset.pattern.permute.xlu0 0
          %411 = vperm.xlu0 %410, %v353
          %v412 = vpop.permute.xlu0 %411
          %413 = vset.pattern.permute.xlu0 0
          %414 = vperm.xlu0 %413, %v354
          %v415 = vpop.permute.xlu0 %414
          %416 = vset.pattern.permute.xlu0 0
          %417 = vperm.xlu0 %416, %v355
          %v418 = vpop.permute.xlu0 %417
          %419 = vset.pattern.permute.xlu0 0
          %420 = vperm.xlu0 %419, %v356
          %v421 = vpop.permute.xlu0 %420
          %vm422 = vcmp.eq.s32.totalorder %v376, %v332
          %vm423 = vcmp.eq.s32.totalorder %v379, %v332
          %vm424 = vcmp.eq.s32.totalorder %v382, %v332
          %vm425 = vcmp.eq.s32.totalorder %v385, %v332
          %vm426 = vcmp.eq.s32.totalorder %v388, %v332
          %vm427 = vcmp.eq.s32.totalorder %v391, %v332
          %vm428 = vcmp.eq.s32.totalorder %v394, %v332
          %vm429 = vcmp.eq.s32.totalorder %v397, %v332
          %vm430 = vcmp.eq.s32.totalorder %v400, %v332
          %vm431 = vcmp.eq.s32.totalorder %v403, %v332
          %vm432 = vcmp.eq.s32.totalorder %v406, %v332
          %vm433 = vcmp.eq.s32.totalorder %v409, %v332
          %vm434 = vcmp.eq.s32.totalorder %v412, %v332
          %vm435 = vcmp.eq.s32.totalorder %v415, %v332
          %vm436 = vcmp.eq.s32.totalorder %v418, %v332
          %vm437 = vcmp.eq.s32.totalorder %v421, %v332
          %v438 = vsel %vm422, 1.0, 0.0
          %v439 = vsel %vm423, 1.0, 0.0
          %v440 = vsel %vm424, 1.0, 0.0
          %v441 = vsel %vm425, 1.0, 0.0
          %v442 = vsel %vm426, 1.0, 0.0
          %v443 = vsel %vm427, 1.0, 0.0
          %v444 = vsel %vm428, 1.0, 0.0
          %v445 = vsel %vm429, 1.0, 0.0
          %v446 = vsel %vm430, 1.0, 0.0
          %v447 = vsel %vm431, 1.0, 0.0
          %v448 = vsel %vm432, 1.0, 0.0
          %v449 = vsel %vm433, 1.0, 0.0
          %v450 = vsel %vm434, 1.0, 0.0
          %v451 = vsel %vm435, 1.0, 0.0
          %v452 = vsel %vm436, 1.0, 0.0
          %v453 = vsel %vm437, 1.0, 0.0
          %454 = vset.pattern.permute.xlu0 1
          %455 = vperm.xlu0 %454, %v341
          %v456 = vpop.permute.xlu0 %455
          %457 = vset.pattern.permute.xlu0 1
          %458 = vperm.xlu0 %457, %v342
          %v459 = vpop.permute.xlu0 %458
          %460 = vset.pattern.permute.xlu0 1
          %461 = vperm.xlu0 %460, %v343
          %v462 = vpop.permute.xlu0 %461
          %463 = vset.pattern.permute.xlu0 1
          %464 = vperm.xlu0 %463, %v344
          %v465 = vpop.permute.xlu0 %464
          %466 = vset.pattern.permute.xlu0 1
          %467 = vperm.xlu0 %466, %v345
          %v468 = vpop.permute.xlu0 %467
          %469 = vset.pattern.permute.xlu0 1
          %470 = vperm.xlu0 %469, %v346
          %v471 = vpop.permute.xlu0 %470
          %472 = vset.pattern.permute.xlu0 1
          %473 = vperm.xlu0 %472, %v347
          %v474 = vpop.permute.xlu0 %473
          %475 = vset.pattern.permute.xlu0 1
          %476 = vperm.xlu0 %475, %v348
          %v477 = vpop.permute.xlu0 %476
          %478 = vset.pattern.permute.xlu0 1
          %479 = vperm.xlu0 %478, %v349
          %v480 = vpop.permute.xlu0 %479
          %481 = vset.pattern.permute.xlu0 1
          %482 = vperm.xlu0 %481, %v350
          %v483 = vpop.permute.xlu0 %482
          %484 = vset.pattern.permute.xlu0 1
          %485 = vperm.xlu0 %484, %v351
          %v486 = vpop.permute.xlu0 %485
          %487 = vset.pattern.permute.xlu0 1
          %488 = vperm.xlu0 %487, %v352
          %v489 = vpop.permute.xlu0 %488
          %490 = vset.pattern.permute.xlu0 1
          %491 = vperm.xlu0 %490, %v353
          %v492 = vpop.permute.xlu0 %491
          %493 = vset.pattern.permute.xlu0 1
          %494 = vperm.xlu0 %493, %v354
          %v495 = vpop.permute.xlu0 %494
          %496 = vset.pattern.permute.xlu0 1
          %497 = vperm.xlu0 %496, %v355
          %v498 = vpop.permute.xlu0 %497
          %499 = vset.pattern.permute.xlu0 1
          %500 = vperm.xlu0 %499, %v356
          %v501 = vpop.permute.xlu0 %500
          %vm502 = vcmp.eq.s32.totalorder %v456, %v332
          %vm503 = vcmp.eq.s32.totalorder %v459, %v332
          %vm504 = vcmp.eq.s32.totalorder %v462, %v332
          %vm505 = vcmp.eq.s32.totalorder %v465, %v332
          %vm506 = vcmp.eq.s32.totalorder %v468, %v332
          %vm507 = vcmp.eq.s32.totalorder %v471, %v332
          %vm508 = vcmp.eq.s32.totalorder %v474, %v332
          %vm509 = vcmp.eq.s32.totalorder %v477, %v332
          %vm510 = vcmp.eq.s32.totalorder %v480, %v332
          %vm511 = vcmp.eq.s32.totalorder %v483, %v332
          %vm512 = vcmp.eq.s32.totalorder %v486, %v332
          %vm513 = vcmp.eq.s32.totalorder %v489, %v332
          %vm514 = vcmp.eq.s32.totalorder %v492, %v332
          %vm515 = vcmp.eq.s32.totalorder %v495, %v332
          %vm516 = vcmp.eq.s32.totalorder %v498, %v332
          %vm517 = vcmp.eq.s32.totalorder %v501, %v332
          %v518 = vsel %vm502, 1.0, 0.0
          %v519 = vsel %vm503, 1.0, 0.0
          %v520 = vsel %vm504, 1.0, 0.0
          %v521 = vsel %vm505, 1.0, 0.0
          %v522 = vsel %vm506, 1.0, 0.0
          %v523 = vsel %vm507, 1.0, 0.0
          %v524 = vsel %vm508, 1.0, 0.0
          %v525 = vsel %vm509, 1.0, 0.0
          %v526 = vsel %vm510, 1.0, 0.0
          %v527 = vsel %vm511, 1.0, 0.0
          %v528 = vsel %vm512, 1.0, 0.0
          %v529 = vsel %vm513, 1.0, 0.0
          %v530 = vsel %vm514, 1.0, 0.0
          %v531 = vsel %vm515, 1.0, 0.0
          %v532 = vsel %vm516, 1.0, 0.0
          %v533 = vsel %vm517, 1.0, 0.0
          %v534 = vadd.f32 %v438, %v518
          %v535 = vadd.f32 %v439, %v519
          %v536 = vadd.f32 %v440, %v520
          %v537 = vadd.f32 %v441, %v521
          %v538 = vadd.f32 %v442, %v522
          %v539 = vadd.f32 %v443, %v523
          %v540 = vadd.f32 %v444, %v524
          %v541 = vadd.f32 %v445, %v525
          %v542 = vadd.f32 %v446, %v526
          %v543 = vadd.f32 %v447, %v527
          %v544 = vadd.f32 %v448, %v528
          %v545 = vadd.f32 %v449, %v529
          %v546 = vadd.f32 %v450, %v530
          %v547 = vadd.f32 %v451, %v531
          %v548 = vadd.f32 %v452, %v532
          %v549 = vadd.f32 %v453, %v533
          %550 = vset.pattern.permute.xlu0 2
          %551 = vperm.xlu0 %550, %v341
          %v552 = vpop.permute.xlu0 %551
          %553 = vset.pattern.permute.xlu0 2
          %554 = vperm.xlu0 %553, %v342
          %v555 = vpop.permute.xlu0 %554
          %556 = vset.pattern.permute.xlu0 2
          %557 = vperm.xlu0 %556, %v343
          %v558 = vpop.permute.xlu0 %557
          %559 = vset.pattern.permute.xlu0 2
          %560 = vperm.xlu0 %559, %v344
          %v561 = vpop.permute.xlu0 %560
          %562 = vset.pattern.permute.xlu0 2
          %563 = vperm.xlu0 %562, %v345
          %v564 = vpop.permute.xlu0 %563
          %565 = vset.pattern.permute.xlu0 2
          %566 = vperm.xlu0 %565, %v346
          %v567 = vpop.permute.xlu0 %566
          %568 = vset.pattern.permute.xlu0 2
          %569 = vperm.xlu0 %568, %v347
          %v570 = vpop.permute.xlu0 %569
          %571 = vset.pattern.permute.xlu0 2
          %572 = vperm.xlu0 %571, %v348
          %v573 = vpop.permute.xlu0 %572
          %574 = vset.pattern.permute.xlu0 2
          %575 = vperm.xlu0 %574, %v349
          %v576 = vpop.permute.xlu0 %575
          %577 = vset.pattern.permute.xlu0 2
          %578 = vperm.xlu0 %577, %v350
          %v579 = vpop.permute.xlu0 %578
          %580 = vset.pattern.permute.xlu0 2
          %581 = vperm.xlu0 %580, %v351
          %v582 = vpop.permute.xlu0 %581
          %583 = vset.pattern.permute.xlu0 2
          %584 = vperm.xlu0 %583, %v352
          %v585 = vpop.permute.xlu0 %584
          %586 = vset.pattern.permute.xlu0 2
          %587 = vperm.xlu0 %586, %v353
          %v588 = vpop.permute.xlu0 %587
          %589 = vset.pattern.permute.xlu0 2
          %590 = vperm.xlu0 %589, %v354
          %v591 = vpop.permute.xlu0 %590
          %592 = vset.pattern.permute.xlu0 2
          %593 = vperm.xlu0 %592, %v355
          %v594 = vpop.permute.xlu0 %593
          %595 = vset.pattern.permute.xlu0 2
          %596 = vperm.xlu0 %595, %v356
          %v597 = vpop.permute.xlu0 %596
          %vm598 = vcmp.eq.s32.totalorder %v552, %v332
          %vm599 = vcmp.eq.s32.totalorder %v555, %v332
          %vm600 = vcmp.eq.s32.totalorder %v558, %v332
          %vm601 = vcmp.eq.s32.totalorder %v561, %v332
          %vm602 = vcmp.eq.s32.totalorder %v564, %v332
          %vm603 = vcmp.eq.s32.totalorder %v567, %v332
          %vm604 = vcmp.eq.s32.totalorder %v570, %v332
          %vm605 = vcmp.eq.s32.totalorder %v573, %v332
          %vm606 = vcmp.eq.s32.totalorder %v576, %v332
          %vm607 = vcmp.eq.s32.totalorder %v579, %v332
          %vm608 = vcmp.eq.s32.totalorder %v582, %v332
          %vm609 = vcmp.eq.s32.totalorder %v585, %v332
          %vm610 = vcmp.eq.s32.totalorder %v588, %v332
          %vm611 = vcmp.eq.s32.totalorder %v591, %v332
          %vm612 = vcmp.eq.s32.totalorder %v594, %v332
          %vm613 = vcmp.eq.s32.totalorder %v597, %v332
          %v614 = vsel %vm598, 1.0, 0.0
          %v615 = vsel %vm599, 1.0, 0.0
          %v616 = vsel %vm600, 1.0, 0.0
          %v617 = vsel %vm601, 1.0, 0.0
          %v618 = vsel %vm602, 1.0, 0.0
          %v619 = vsel %vm603, 1.0, 0.0
          %v620 = vsel %vm604, 1.0, 0.0
          %v621 = vsel %vm605, 1.0, 0.0
          %v622 = vsel %vm606, 1.0, 0.0
          %v623 = vsel %vm607, 1.0, 0.0
          %v624 = vsel %vm608, 1.0, 0.0
          %v625 = vsel %vm609, 1.0, 0.0
          %v626 = vsel %vm610, 1.0, 0.0
          %v627 = vsel %vm611, 1.0, 0.0
          %v628 = vsel %vm612, 1.0, 0.0
          %v629 = vsel %vm613, 1.0, 0.0
          %v630 = vadd.f32 %v534, %v614
          %v631 = vadd.f32 %v535, %v615
          %v632 = vadd.f32 %v536, %v616
          %v633 = vadd.f32 %v537, %v617
          %v634 = vadd.f32 %v538, %v618
          %v635 = vadd.f32 %v539, %v619
          %v636 = vadd.f32 %v540, %v620
          %v637 = vadd.f32 %v541, %v621
          %v638 = vadd.f32 %v542, %v622
          %v639 = vadd.f32 %v543, %v623
          %v640 = vadd.f32 %v544, %v624
          %v641 = vadd.f32 %v545, %v625
          %v642 = vadd.f32 %v546, %v626
          %v643 = vadd.f32 %v547, %v627
          %v644 = vadd.f32 %v548, %v628
          %v645 = vadd.f32 %v549, %v629
          %646 = vset.pattern.permute.xlu0 3
          %647 = vperm.xlu0 %646, %v341
          %v648 = vpop.permute.xlu0 %647
          %649 = vset.pattern.permute.xlu0 3
          %650 = vperm.xlu0 %649, %v342
          %v651 = vpop.permute.xlu0 %650
          %652 = vset.pattern.permute.xlu0 3
          %653 = vperm.xlu0 %652, %v343
          %v654 = vpop.permute.xlu0 %653
          %655 = vset.pattern.permute.xlu0 3
          %656 = vperm.xlu0 %655, %v344
          %v657 = vpop.permute.xlu0 %656
          %658 = vset.pattern.permute.xlu0 3
          %659 = vperm.xlu0 %658, %v345
          %v660 = vpop.permute.xlu0 %659
          %661 = vset.pattern.permute.xlu0 3
          %662 = vperm.xlu0 %661, %v346
          %v663 = vpop.permute.xlu0 %662
          %664 = vset.pattern.permute.xlu0 3
          %665 = vperm.xlu0 %664, %v347
          %v666 = vpop.permute.xlu0 %665
          %667 = vset.pattern.permute.xlu0 3
          %668 = vperm.xlu0 %667, %v348
          %v669 = vpop.permute.xlu0 %668
          %670 = vset.pattern.permute.xlu0 3
          %671 = vperm.xlu0 %670, %v349
          %v672 = vpop.permute.xlu0 %671
          %673 = vset.pattern.permute.xlu0 3
          %674 = vperm.xlu0 %673, %v350
          %v675 = vpop.permute.xlu0 %674
          %676 = vset.pattern.permute.xlu0 3
          %677 = vperm.xlu0 %676, %v351
          %v678 = vpop.permute.xlu0 %677
          %679 = vset.pattern.permute.xlu0 3
          %680 = vperm.xlu0 %679, %v352
          %v681 = vpop.permute.xlu0 %680
          %682 = vset.pattern.permute.xlu0 3
          %683 = vperm.xlu0 %682, %v353
          %v684 = vpop.permute.xlu0 %683
          %685 = vset.pattern.permute.xlu0 3
          %686 = vperm.xlu0 %685, %v354
          %v687 = vpop.permute.xlu0 %686
          %688 = vset.pattern.permute.xlu0 3
          %689 = vperm.xlu0 %688, %v355
          %v690 = vpop.permute.xlu0 %689
          %691 = vset.pattern.permute.xlu0 3
          %692 = vperm.xlu0 %691, %v356
          %v693 = vpop.permute.xlu0 %692
          %vm694 = vcmp.eq.s32.totalorder %v648, %v332
          %vm695 = vcmp.eq.s32.totalorder %v651, %v332
          %vm696 = vcmp.eq.s32.totalorder %v654, %v332
          %vm697 = vcmp.eq.s32.totalorder %v657, %v332
          %vm698 = vcmp.eq.s32.totalorder %v660, %v332
          %vm699 = vcmp.eq.s32.totalorder %v663, %v332
          %vm700 = vcmp.eq.s32.totalorder %v666, %v332
          %vm701 = vcmp.eq.s32.totalorder %v669, %v332
          %vm702 = vcmp.eq.s32.totalorder %v672, %v332
          %vm703 = vcmp.eq.s32.totalorder %v675, %v332
          %vm704 = vcmp.eq.s32.totalorder %v678, %v332
          %vm705 = vcmp.eq.s32.totalorder %v681, %v332
          %vm706 = vcmp.eq.s32.totalorder %v684, %v332
          %vm707 = vcmp.eq.s32.totalorder %v687, %v332
          %vm708 = vcmp.eq.s32.totalorder %v690, %v332
          %vm709 = vcmp.eq.s32.totalorder %v693, %v332
          %v710 = vsel %vm694, 1.0, 0.0
          %v711 = vsel %vm695, 1.0, 0.0
          %v712 = vsel %vm696, 1.0, 0.0
          %v713 = vsel %vm697, 1.0, 0.0
          %v714 = vsel %vm698, 1.0, 0.0
          %v715 = vsel %vm699, 1.0, 0.0
          %v716 = vsel %vm700, 1.0, 0.0
          %v717 = vsel %vm701, 1.0, 0.0
          %v718 = vsel %vm702, 1.0, 0.0
          %v719 = vsel %vm703, 1.0, 0.0
          %v720 = vsel %vm704, 1.0, 0.0
          %v721 = vsel %vm705, 1.0, 0.0
          %v722 = vsel %vm706, 1.0, 0.0
          %v723 = vsel %vm707, 1.0, 0.0
          %v724 = vsel %vm708, 1.0, 0.0
          %v725 = vsel %vm709, 1.0, 0.0
          %v726 = vadd.f32 %v630, %v710
          %v727 = vadd.f32 %v631, %v711
          %v728 = vadd.f32 %v632, %v712
          %v729 = vadd.f32 %v633, %v713
          %v730 = vadd.f32 %v634, %v714
          %v731 = vadd.f32 %v635, %v715
          %v732 = vadd.f32 %v636, %v716
          %v733 = vadd.f32 %v637, %v717
          %v734 = vadd.f32 %v638, %v718
          %v735 = vadd.f32 %v639, %v719
          %v736 = vadd.f32 %v640, %v720
          %v737 = vadd.f32 %v641, %v721
          %v738 = vadd.f32 %v642, %v722
          %v739 = vadd.f32 %v643, %v723
          %v740 = vadd.f32 %v644, %v724
          %v741 = vadd.f32 %v645, %v725
          %742 = vset.pattern.permute.xlu0 4
          %743 = vperm.xlu0 %742, %v341
          %v744 = vpop.permute.xlu0 %743
          %745 = vset.pattern.permute.xlu0 4
          %746 = vperm.xlu0 %745, %v342
          %v747 = vpop.permute.xlu0 %746
          %748 = vset.pattern.permute.xlu0 4
          %749 = vperm.xlu0 %748, %v343
          %v750 = vpop.permute.xlu0 %749
          %751 = vset.pattern.permute.xlu0 4
          %752 = vperm.xlu0 %751, %v344
          %v753 = vpop.permute.xlu0 %752
          %754 = vset.pattern.permute.xlu0 4
          %755 = vperm.xlu0 %754, %v345
          %v756 = vpop.permute.xlu0 %755
          %757 = vset.pattern.permute.xlu0 4
          %758 = vperm.xlu0 %757, %v346
          %v759 = vpop.permute.xlu0 %758
          %760 = vset.pattern.permute.xlu0 4
          %761 = vperm.xlu0 %760, %v347
          %v762 = vpop.permute.xlu0 %761
          %763 = vset.pattern.permute.xlu0 4
          %764 = vperm.xlu0 %763, %v348
          %v765 = vpop.permute.xlu0 %764
          %766 = vset.pattern.permute.xlu0 4
          %767 = vperm.xlu0 %766, %v349
          %v768 = vpop.permute.xlu0 %767
          %769 = vset.pattern.permute.xlu0 4
          %770 = vperm.xlu0 %769, %v350
          %v771 = vpop.permute.xlu0 %770
          %772 = vset.pattern.permute.xlu0 4
          %773 = vperm.xlu0 %772, %v351
          %v774 = vpop.permute.xlu0 %773
          %775 = vset.pattern.permute.xlu0 4
          %776 = vperm.xlu0 %775, %v352
          %v777 = vpop.permute.xlu0 %776
          %778 = vset.pattern.permute.xlu0 4
          %779 = vperm.xlu0 %778, %v353
          %v780 = vpop.permute.xlu0 %779
          %781 = vset.pattern.permute.xlu0 4
          %782 = vperm.xlu0 %781, %v354
          %v783 = vpop.permute.xlu0 %782
          %784 = vset.pattern.permute.xlu0 4
          %785 = vperm.xlu0 %784, %v355
          %v786 = vpop.permute.xlu0 %785
          %787 = vset.pattern.permute.xlu0 4
          %788 = vperm.xlu0 %787, %v356
          %v789 = vpop.permute.xlu0 %788
          %vm790 = vcmp.eq.s32.totalorder %v744, %v332
          %vm791 = vcmp.eq.s32.totalorder %v747, %v332
          %vm792 = vcmp.eq.s32.totalorder %v750, %v332
          %vm793 = vcmp.eq.s32.totalorder %v753, %v332
          %vm794 = vcmp.eq.s32.totalorder %v756, %v332
          %vm795 = vcmp.eq.s32.totalorder %v759, %v332
          %vm796 = vcmp.eq.s32.totalorder %v762, %v332
          %vm797 = vcmp.eq.s32.totalorder %v765, %v332
          %vm798 = vcmp.eq.s32.totalorder %v768, %v332
          %vm799 = vcmp.eq.s32.totalorder %v771, %v332
          %vm800 = vcmp.eq.s32.totalorder %v774, %v332
          %vm801 = vcmp.eq.s32.totalorder %v777, %v332
          %vm802 = vcmp.eq.s32.totalorder %v780, %v332
          %vm803 = vcmp.eq.s32.totalorder %v783, %v332
          %vm804 = vcmp.eq.s32.totalorder %v786, %v332
          %vm805 = vcmp.eq.s32.totalorder %v789, %v332
          %v806 = vsel %vm790, 1.0, 0.0
          %v807 = vsel %vm791, 1.0, 0.0
          %v808 = vsel %vm792, 1.0, 0.0
          %v809 = vsel %vm793, 1.0, 0.0
          %v810 = vsel %vm794, 1.0, 0.0
          %v811 = vsel %vm795, 1.0, 0.0
          %v812 = vsel %vm796, 1.0, 0.0
          %v813 = vsel %vm797, 1.0, 0.0
          %v814 = vsel %vm798, 1.0, 0.0
          %v815 = vsel %vm799, 1.0, 0.0
          %v816 = vsel %vm800, 1.0, 0.0
          %v817 = vsel %vm801, 1.0, 0.0
          %v818 = vsel %vm802, 1.0, 0.0
          %v819 = vsel %vm803, 1.0, 0.0
          %v820 = vsel %vm804, 1.0, 0.0
          %v821 = vsel %vm805, 1.0, 0.0
          %822 = vset.pattern.permute.xlu0 5
          %823 = vperm.xlu0 %822, %v341
          %v824 = vpop.permute.xlu0 %823
          %825 = vset.pattern.permute.xlu0 5
          %826 = vperm.xlu0 %825, %v342
          %v827 = vpop.permute.xlu0 %826
          %828 = vset.pattern.permute.xlu0 5
          %829 = vperm.xlu0 %828, %v343
          %v830 = vpop.permute.xlu0 %829
          %831 = vset.pattern.permute.xlu0 5
          %832 = vperm.xlu0 %831, %v344
          %v833 = vpop.permute.xlu0 %832
          %834 = vset.pattern.permute.xlu0 5
          %835 = vperm.xlu0 %834, %v345
          %v836 = vpop.permute.xlu0 %835
          %837 = vset.pattern.permute.xlu0 5
          %838 = vperm.xlu0 %837, %v346
          %v839 = vpop.permute.xlu0 %838
          %840 = vset.pattern.permute.xlu0 5
          %841 = vperm.xlu0 %840, %v347
          %v842 = vpop.permute.xlu0 %841
          %843 = vset.pattern.permute.xlu0 5
          %844 = vperm.xlu0 %843, %v348
          %v845 = vpop.permute.xlu0 %844
          %846 = vset.pattern.permute.xlu0 5
          %847 = vperm.xlu0 %846, %v349
          %v848 = vpop.permute.xlu0 %847
          %849 = vset.pattern.permute.xlu0 5
          %850 = vperm.xlu0 %849, %v350
          %v851 = vpop.permute.xlu0 %850
          %852 = vset.pattern.permute.xlu0 5
          %853 = vperm.xlu0 %852, %v351
          %v854 = vpop.permute.xlu0 %853
          %855 = vset.pattern.permute.xlu0 5
          %856 = vperm.xlu0 %855, %v352
          %v857 = vpop.permute.xlu0 %856
          %858 = vset.pattern.permute.xlu0 5
          %859 = vperm.xlu0 %858, %v353
          %v860 = vpop.permute.xlu0 %859
          %861 = vset.pattern.permute.xlu0 5
          %862 = vperm.xlu0 %861, %v354
          %v863 = vpop.permute.xlu0 %862
          %864 = vset.pattern.permute.xlu0 5
          %865 = vperm.xlu0 %864, %v355
          %v866 = vpop.permute.xlu0 %865
          %867 = vset.pattern.permute.xlu0 5
          %868 = vperm.xlu0 %867, %v356
          %v869 = vpop.permute.xlu0 %868
          %vm870 = vcmp.eq.s32.totalorder %v824, %v332
          %vm871 = vcmp.eq.s32.totalorder %v827, %v332
          %vm872 = vcmp.eq.s32.totalorder %v830, %v332
          %vm873 = vcmp.eq.s32.totalorder %v833, %v332
          %vm874 = vcmp.eq.s32.totalorder %v836, %v332
          %vm875 = vcmp.eq.s32.totalorder %v839, %v332
          %vm876 = vcmp.eq.s32.totalorder %v842, %v332
          %vm877 = vcmp.eq.s32.totalorder %v845, %v332
          %vm878 = vcmp.eq.s32.totalorder %v848, %v332
          %vm879 = vcmp.eq.s32.totalorder %v851, %v332
          %vm880 = vcmp.eq.s32.totalorder %v854, %v332
          %vm881 = vcmp.eq.s32.totalorder %v857, %v332
          %vm882 = vcmp.eq.s32.totalorder %v860, %v332
          %vm883 = vcmp.eq.s32.totalorder %v863, %v332
          %vm884 = vcmp.eq.s32.totalorder %v866, %v332
          %vm885 = vcmp.eq.s32.totalorder %v869, %v332
          %v886 = vsel %vm870, 1.0, 0.0
          %v887 = vsel %vm871, 1.0, 0.0
          %v888 = vsel %vm872, 1.0, 0.0
          %v889 = vsel %vm873, 1.0, 0.0
          %v890 = vsel %vm874, 1.0, 0.0
          %v891 = vsel %vm875, 1.0, 0.0
          %v892 = vsel %vm876, 1.0, 0.0
          %v893 = vsel %vm877, 1.0, 0.0
          %v894 = vsel %vm878, 1.0, 0.0
          %v895 = vsel %vm879, 1.0, 0.0
          %v896 = vsel %vm880, 1.0, 0.0
          %v897 = vsel %vm881, 1.0, 0.0
          %v898 = vsel %vm882, 1.0, 0.0
          %v899 = vsel %vm883, 1.0, 0.0
          %v900 = vsel %vm884, 1.0, 0.0
          %v901 = vsel %vm885, 1.0, 0.0
          %v902 = vadd.f32 %v806, %v886
          %v903 = vadd.f32 %v807, %v887
          %v904 = vadd.f32 %v808, %v888
          %v905 = vadd.f32 %v809, %v889
          %v906 = vadd.f32 %v810, %v890
          %v907 = vadd.f32 %v811, %v891
          %v908 = vadd.f32 %v812, %v892
          %v909 = vadd.f32 %v813, %v893
          %v910 = vadd.f32 %v814, %v894
          %v911 = vadd.f32 %v815, %v895
          %v912 = vadd.f32 %v816, %v896
          %v913 = vadd.f32 %v817, %v897
          %v914 = vadd.f32 %v818, %v898
          %v915 = vadd.f32 %v819, %v899
          %v916 = vadd.f32 %v820, %v900
          %v917 = vadd.f32 %v821, %v901
          %918 = vset.pattern.permute.xlu0 6
          %919 = vperm.xlu0 %918, %v341
          %v920 = vpop.permute.xlu0 %919
          %921 = vset.pattern.permute.xlu0 6
          %922 = vperm.xlu0 %921, %v342
          %v923 = vpop.permute.xlu0 %922
          %924 = vset.pattern.permute.xlu0 6
          %925 = vperm.xlu0 %924, %v343
          %v926 = vpop.permute.xlu0 %925
          %927 = vset.pattern.permute.xlu0 6
          %928 = vperm.xlu0 %927, %v344
          %v929 = vpop.permute.xlu0 %928
          %930 = vset.pattern.permute.xlu0 6
          %931 = vperm.xlu0 %930, %v345
          %v932 = vpop.permute.xlu0 %931
          %933 = vset.pattern.permute.xlu0 6
          %934 = vperm.xlu0 %933, %v346
          %v935 = vpop.permute.xlu0 %934
          %936 = vset.pattern.permute.xlu0 6
          %937 = vperm.xlu0 %936, %v347
          %v938 = vpop.permute.xlu0 %937
          %939 = vset.pattern.permute.xlu0 6
          %940 = vperm.xlu0 %939, %v348
          %v941 = vpop.permute.xlu0 %940
          %942 = vset.pattern.permute.xlu0 6
          %943 = vperm.xlu0 %942, %v349
          %v944 = vpop.permute.xlu0 %943
          %945 = vset.pattern.permute.xlu0 6
          %946 = vperm.xlu0 %945, %v350
          %v947 = vpop.permute.xlu0 %946
          %948 = vset.pattern.permute.xlu0 6
          %949 = vperm.xlu0 %948, %v351
          %v950 = vpop.permute.xlu0 %949
          %951 = vset.pattern.permute.xlu0 6
          %952 = vperm.xlu0 %951, %v352
          %v953 = vpop.permute.xlu0 %952
          %954 = vset.pattern.permute.xlu0 6
          %955 = vperm.xlu0 %954, %v353
          %v956 = vpop.permute.xlu0 %955
          %957 = vset.pattern.permute.xlu0 6
          %958 = vperm.xlu0 %957, %v354
          %v959 = vpop.permute.xlu0 %958
          %960 = vset.pattern.permute.xlu0 6
          %961 = vperm.xlu0 %960, %v355
          %v962 = vpop.permute.xlu0 %961
          %963 = vset.pattern.permute.xlu0 6
          %964 = vperm.xlu0 %963, %v356
          %v965 = vpop.permute.xlu0 %964
          %vm966 = vcmp.eq.s32.totalorder %v920, %v332
          %vm967 = vcmp.eq.s32.totalorder %v923, %v332
          %vm968 = vcmp.eq.s32.totalorder %v926, %v332
          %vm969 = vcmp.eq.s32.totalorder %v929, %v332
          %vm970 = vcmp.eq.s32.totalorder %v932, %v332
          %vm971 = vcmp.eq.s32.totalorder %v935, %v332
          %vm972 = vcmp.eq.s32.totalorder %v938, %v332
          %vm973 = vcmp.eq.s32.totalorder %v941, %v332
          %vm974 = vcmp.eq.s32.totalorder %v944, %v332
          %vm975 = vcmp.eq.s32.totalorder %v947, %v332
          %vm976 = vcmp.eq.s32.totalorder %v950, %v332
          %vm977 = vcmp.eq.s32.totalorder %v953, %v332
          %vm978 = vcmp.eq.s32.totalorder %v956, %v332
          %vm979 = vcmp.eq.s32.totalorder %v959, %v332
          %vm980 = vcmp.eq.s32.totalorder %v962, %v332
          %vm981 = vcmp.eq.s32.totalorder %v965, %v332
          %v982 = vsel %vm966, 1.0, 0.0
          %v983 = vsel %vm967, 1.0, 0.0
          %v984 = vsel %vm968, 1.0, 0.0
          %v985 = vsel %vm969, 1.0, 0.0
          %v986 = vsel %vm970, 1.0, 0.0
          %v987 = vsel %vm971, 1.0, 0.0
          %v988 = vsel %vm972, 1.0, 0.0
          %v989 = vsel %vm973, 1.0, 0.0
          %v990 = vsel %vm974, 1.0, 0.0
          %v991 = vsel %vm975, 1.0, 0.0
          %v992 = vsel %vm976, 1.0, 0.0
          %v993 = vsel %vm977, 1.0, 0.0
          %v994 = vsel %vm978, 1.0, 0.0
          %v995 = vsel %vm979, 1.0, 0.0
          %v996 = vsel %vm980, 1.0, 0.0
          %v997 = vsel %vm981, 1.0, 0.0
          %v998 = vadd.f32 %v902, %v982
          %v999 = vadd.f32 %v903, %v983
          %v1000 = vadd.f32 %v904, %v984
          %v1001 = vadd.f32 %v905, %v985
          %v1002 = vadd.f32 %v906, %v986
          %v1003 = vadd.f32 %v907, %v987
          %v1004 = vadd.f32 %v908, %v988
          %v1005 = vadd.f32 %v909, %v989
          %v1006 = vadd.f32 %v910, %v990
          %v1007 = vadd.f32 %v911, %v991
          %v1008 = vadd.f32 %v912, %v992
          %v1009 = vadd.f32 %v913, %v993
          %v1010 = vadd.f32 %v914, %v994
          %v1011 = vadd.f32 %v915, %v995
          %v1012 = vadd.f32 %v916, %v996
          %v1013 = vadd.f32 %v917, %v997
          %1014 = vset.pattern.permute.xlu0 7
          %1015 = vperm.xlu0 %1014, %v341
          %v1016 = vpop.permute.xlu0 %1015
          %1017 = vset.pattern.permute.xlu0 7
          %1018 = vperm.xlu0 %1017, %v342
          %v1019 = vpop.permute.xlu0 %1018
          %1020 = vset.pattern.permute.xlu0 7
          %1021 = vperm.xlu0 %1020, %v343
          %v1022 = vpop.permute.xlu0 %1021
          %1023 = vset.pattern.permute.xlu0 7
          %1024 = vperm.xlu0 %1023, %v344
          %v1025 = vpop.permute.xlu0 %1024
          %1026 = vset.pattern.permute.xlu0 7
          %1027 = vperm.xlu0 %1026, %v345
          %v1028 = vpop.permute.xlu0 %1027
          %1029 = vset.pattern.permute.xlu0 7
          %1030 = vperm.xlu0 %1029, %v346
          %v1031 = vpop.permute.xlu0 %1030
          %1032 = vset.pattern.permute.xlu0 7
          %1033 = vperm.xlu0 %1032, %v347
          %v1034 = vpop.permute.xlu0 %1033
          %1035 = vset.pattern.permute.xlu0 7
          %1036 = vperm.xlu0 %1035, %v348
          %v1037 = vpop.permute.xlu0 %1036
          %1038 = vset.pattern.permute.xlu0 7
          %1039 = vperm.xlu0 %1038, %v349
          %v1040 = vpop.permute.xlu0 %1039
          %1041 = vset.pattern.permute.xlu0 7
          %1042 = vperm.xlu0 %1041, %v350
          %v1043 = vpop.permute.xlu0 %1042
          %1044 = vset.pattern.permute.xlu0 7
          %1045 = vperm.xlu0 %1044, %v351
          %v1046 = vpop.permute.xlu0 %1045
          %1047 = vset.pattern.permute.xlu0 7
          %1048 = vperm.xlu0 %1047, %v352
          %v1049 = vpop.permute.xlu0 %1048
          %1050 = vset.pattern.permute.xlu0 7
          %1051 = vperm.xlu0 %1050, %v353
          %v1052 = vpop.permute.xlu0 %1051
          %1053 = vset.pattern.permute.xlu0 7
          %1054 = vperm.xlu0 %1053, %v354
          %v1055 = vpop.permute.xlu0 %1054
          %1056 = vset.pattern.permute.xlu0 7
          %1057 = vperm.xlu0 %1056, %v355
          %v1058 = vpop.permute.xlu0 %1057
          %1059 = vset.pattern.permute.xlu0 7
          %1060 = vperm.xlu0 %1059, %v356
          %v1061 = vpop.permute.xlu0 %1060
          %vm1062 = vcmp.eq.s32.totalorder %v1016, %v332
          %vm1063 = vcmp.eq.s32.totalorder %v1019, %v332
          %vm1064 = vcmp.eq.s32.totalorder %v1022, %v332
          %vm1065 = vcmp.eq.s32.totalorder %v1025, %v332
          %vm1066 = vcmp.eq.s32.totalorder %v1028, %v332
          %vm1067 = vcmp.eq.s32.totalorder %v1031, %v332
          %vm1068 = vcmp.eq.s32.totalorder %v1034, %v332
          %vm1069 = vcmp.eq.s32.totalorder %v1037, %v332
          %vm1070 = vcmp.eq.s32.totalorder %v1040, %v332
          %vm1071 = vcmp.eq.s32.totalorder %v1043, %v332
          %vm1072 = vcmp.eq.s32.totalorder %v1046, %v332
          %vm1073 = vcmp.eq.s32.totalorder %v1049, %v332
          %vm1074 = vcmp.eq.s32.totalorder %v1052, %v332
          %vm1075 = vcmp.eq.s32.totalorder %v1055, %v332
          %vm1076 = vcmp.eq.s32.totalorder %v1058, %v332
          %vm1077 = vcmp.eq.s32.totalorder %v1061, %v332
          %v1078 = vsel %vm1062, 1.0, 0.0
          %v1079 = vsel %vm1063, 1.0, 0.0
          %v1080 = vsel %vm1064, 1.0, 0.0
          %v1081 = vsel %vm1065, 1.0, 0.0
          %v1082 = vsel %vm1066, 1.0, 0.0
          %v1083 = vsel %vm1067, 1.0, 0.0
          %v1084 = vsel %vm1068, 1.0, 0.0
          %v1085 = vsel %vm1069, 1.0, 0.0
          %v1086 = vsel %vm1070, 1.0, 0.0
          %v1087 = vsel %vm1071, 1.0, 0.0
          %v1088 = vsel %vm1072, 1.0, 0.0
          %v1089 = vsel %vm1073, 1.0, 0.0
          %v1090 = vsel %vm1074, 1.0, 0.0
          %v1091 = vsel %vm1075, 1.0, 0.0
          %v1092 = vsel %vm1076, 1.0, 0.0
          %v1093 = vsel %vm1077, 1.0, 0.0
          %v1094 = vadd.f32 %v998, %v1078
          %v1095 = vadd.f32 %v999, %v1079
          %v1096 = vadd.f32 %v1000, %v1080
          %v1097 = vadd.f32 %v1001, %v1081
          %v1098 = vadd.f32 %v1002, %v1082
          %v1099 = vadd.f32 %v1003, %v1083
          %v1100 = vadd.f32 %v1004, %v1084
          %v1101 = vadd.f32 %v1005, %v1085
          %v1102 = vadd.f32 %v1006, %v1086
          %v1103 = vadd.f32 %v1007, %v1087
          %v1104 = vadd.f32 %v1008, %v1088
          %v1105 = vadd.f32 %v1009, %v1089
          %v1106 = vadd.f32 %v1010, %v1090
          %v1107 = vadd.f32 %v1011, %v1091
          %v1108 = vadd.f32 %v1012, %v1092
          %v1109 = vadd.f32 %v1013, %v1093
          %v1110 = vadd.f32 %v726, %v1094
          %v1111 = vadd.f32 %v727, %v1095
          %v1112 = vadd.f32 %v728, %v1096
          %v1113 = vadd.f32 %v729, %v1097
          %v1114 = vadd.f32 %v730, %v1098
          %v1115 = vadd.f32 %v731, %v1099
          %v1116 = vadd.f32 %v732, %v1100
          %v1117 = vadd.f32 %v733, %v1101
          %v1118 = vadd.f32 %v734, %v1102
          %v1119 = vadd.f32 %v735, %v1103
          %v1120 = vadd.f32 %v736, %v1104
          %v1121 = vadd.f32 %v737, %v1105
          %v1122 = vadd.f32 %v738, %v1106
          %v1123 = vadd.f32 %v739, %v1107
          %v1124 = vadd.f32 %v740, %v1108
          %v1125 = vadd.f32 %v741, %v1109
          %1126 = vset.pattern.permute.xlu0 8
          %1127 = vperm.xlu0 %1126, %v341
          %v1128 = vpop.permute.xlu0 %1127
          %1129 = vset.pattern.permute.xlu0 8
          %1130 = vperm.xlu0 %1129, %v342
          %v1131 = vpop.permute.xlu0 %1130
          %1132 = vset.pattern.permute.xlu0 8
          %1133 = vperm.xlu0 %1132, %v343
          %v1134 = vpop.permute.xlu0 %1133
          %1135 = vset.pattern.permute.xlu0 8
          %1136 = vperm.xlu0 %1135, %v344
          %v1137 = vpop.permute.xlu0 %1136
          %1138 = vset.pattern.permute.xlu0 8
          %1139 = vperm.xlu0 %1138, %v345
          %v1140 = vpop.permute.xlu0 %1139
          %1141 = vset.pattern.permute.xlu0 8
          %1142 = vperm.xlu0 %1141, %v346
          %v1143 = vpop.permute.xlu0 %1142
          %1144 = vset.pattern.permute.xlu0 8
          %1145 = vperm.xlu0 %1144, %v347
          %v1146 = vpop.permute.xlu0 %1145
          %1147 = vset.pattern.permute.xlu0 8
          %1148 = vperm.xlu0 %1147, %v348
          %v1149 = vpop.permute.xlu0 %1148
          %1150 = vset.pattern.permute.xlu0 8
          %1151 = vperm.xlu0 %1150, %v349
          %v1152 = vpop.permute.xlu0 %1151
          %1153 = vset.pattern.permute.xlu0 8
          %1154 = vperm.xlu0 %1153, %v350
          %v1155 = vpop.permute.xlu0 %1154
          %1156 = vset.pattern.permute.xlu0 8
          %1157 = vperm.xlu0 %1156, %v351
          %v1158 = vpop.permute.xlu0 %1157
          %1159 = vset.pattern.permute.xlu0 8
          %1160 = vperm.xlu0 %1159, %v352
          %v1161 = vpop.permute.xlu0 %1160
          %1162 = vset.pattern.permute.xlu0 8
          %1163 = vperm.xlu0 %1162, %v353
          %v1164 = vpop.permute.xlu0 %1163
          %1165 = vset.pattern.permute.xlu0 8
          %1166 = vperm.xlu0 %1165, %v354
          %v1167 = vpop.permute.xlu0 %1166
          %1168 = vset.pattern.permute.xlu0 8
          %1169 = vperm.xlu0 %1168, %v355
          %v1170 = vpop.permute.xlu0 %1169
          %1171 = vset.pattern.permute.xlu0 8
          %1172 = vperm.xlu0 %1171, %v356
          %v1173 = vpop.permute.xlu0 %1172
          %vm1174 = vcmp.eq.s32.totalorder %v1128, %v332
          %vm1175 = vcmp.eq.s32.totalorder %v1131, %v332
          %vm1176 = vcmp.eq.s32.totalorder %v1134, %v332
          %vm1177 = vcmp.eq.s32.totalorder %v1137, %v332
          %vm1178 = vcmp.eq.s32.totalorder %v1140, %v332
          %vm1179 = vcmp.eq.s32.totalorder %v1143, %v332
          %vm1180 = vcmp.eq.s32.totalorder %v1146, %v332
          %vm1181 = vcmp.eq.s32.totalorder %v1149, %v332
          %vm1182 = vcmp.eq.s32.totalorder %v1152, %v332
          %vm1183 = vcmp.eq.s32.totalorder %v1155, %v332
          %vm1184 = vcmp.eq.s32.totalorder %v1158, %v332
          %vm1185 = vcmp.eq.s32.totalorder %v1161, %v332
          %vm1186 = vcmp.eq.s32.totalorder %v1164, %v332
          %vm1187 = vcmp.eq.s32.totalorder %v1167, %v332
          %vm1188 = vcmp.eq.s32.totalorder %v1170, %v332
          %vm1189 = vcmp.eq.s32.totalorder %v1173, %v332
          %v1190 = vsel %vm1174, 1.0, 0.0
          %v1191 = vsel %vm1175, 1.0, 0.0
          %v1192 = vsel %vm1176, 1.0, 0.0
          %v1193 = vsel %vm1177, 1.0, 0.0
          %v1194 = vsel %vm1178, 1.0, 0.0
          %v1195 = vsel %vm1179, 1.0, 0.0
          %v1196 = vsel %vm1180, 1.0, 0.0
          %v1197 = vsel %vm1181, 1.0, 0.0
          %v1198 = vsel %vm1182, 1.0, 0.0
          %v1199 = vsel %vm1183, 1.0, 0.0
          %v1200 = vsel %vm1184, 1.0, 0.0
          %v1201 = vsel %vm1185, 1.0, 0.0
          %v1202 = vsel %vm1186, 1.0, 0.0
          %v1203 = vsel %vm1187, 1.0, 0.0
          %v1204 = vsel %vm1188, 1.0, 0.0
          %v1205 = vsel %vm1189, 1.0, 0.0
          %1206 = vset.pattern.permute.xlu0 9
          %1207 = vperm.xlu0 %1206, %v341
          %v1208 = vpop.permute.xlu0 %1207
          %1209 = vset.pattern.permute.xlu0 9
          %1210 = vperm.xlu0 %1209, %v342
          %v1211 = vpop.permute.xlu0 %1210
          %1212 = vset.pattern.permute.xlu0 9
          %1213 = vperm.xlu0 %1212, %v343
          %v1214 = vpop.permute.xlu0 %1213
          %1215 = vset.pattern.permute.xlu0 9
          %1216 = vperm.xlu0 %1215, %v344
          %v1217 = vpop.permute.xlu0 %1216
          %1218 = vset.pattern.permute.xlu0 9
          %1219 = vperm.xlu0 %1218, %v345
          %v1220 = vpop.permute.xlu0 %1219
          %1221 = vset.pattern.permute.xlu0 9
          %1222 = vperm.xlu0 %1221, %v346
          %v1223 = vpop.permute.xlu0 %1222
          %1224 = vset.pattern.permute.xlu0 9
          %1225 = vperm.xlu0 %1224, %v347
          %v1226 = vpop.permute.xlu0 %1225
          %1227 = vset.pattern.permute.xlu0 9
          %1228 = vperm.xlu0 %1227, %v348
          %v1229 = vpop.permute.xlu0 %1228
          %1230 = vset.pattern.permute.xlu0 9
          %1231 = vperm.xlu0 %1230, %v349
          %v1232 = vpop.permute.xlu0 %1231
          %1233 = vset.pattern.permute.xlu0 9
          %1234 = vperm.xlu0 %1233, %v350
          %v1235 = vpop.permute.xlu0 %1234
          %1236 = vset.pattern.permute.xlu0 9
          %1237 = vperm.xlu0 %1236, %v351
          %v1238 = vpop.permute.xlu0 %1237
          %1239 = vset.pattern.permute.xlu0 9
          %1240 = vperm.xlu0 %1239, %v352
          %v1241 = vpop.permute.xlu0 %1240
          %1242 = vset.pattern.permute.xlu0 9
          %1243 = vperm.xlu0 %1242, %v353
          %v1244 = vpop.permute.xlu0 %1243
          %1245 = vset.pattern.permute.xlu0 9
          %1246 = vperm.xlu0 %1245, %v354
          %v1247 = vpop.permute.xlu0 %1246
          %1248 = vset.pattern.permute.xlu0 9
          %1249 = vperm.xlu0 %1248, %v355
          %v1250 = vpop.permute.xlu0 %1249
          %1251 = vset.pattern.permute.xlu0 9
          %1252 = vperm.xlu0 %1251, %v356
          %v1253 = vpop.permute.xlu0 %1252
          %vm1254 = vcmp.eq.s32.totalorder %v1208, %v332
          %vm1255 = vcmp.eq.s32.totalorder %v1211, %v332
          %vm1256 = vcmp.eq.s32.totalorder %v1214, %v332
          %vm1257 = vcmp.eq.s32.totalorder %v1217, %v332
          %vm1258 = vcmp.eq.s32.totalorder %v1220, %v332
          %vm1259 = vcmp.eq.s32.totalorder %v1223, %v332
          %vm1260 = vcmp.eq.s32.totalorder %v1226, %v332
          %vm1261 = vcmp.eq.s32.totalorder %v1229, %v332
          %vm1262 = vcmp.eq.s32.totalorder %v1232, %v332
          %vm1263 = vcmp.eq.s32.totalorder %v1235, %v332
          %vm1264 = vcmp.eq.s32.totalorder %v1238, %v332
          %vm1265 = vcmp.eq.s32.totalorder %v1241, %v332
          %vm1266 = vcmp.eq.s32.totalorder %v1244, %v332
          %vm1267 = vcmp.eq.s32.totalorder %v1247, %v332
          %vm1268 = vcmp.eq.s32.totalorder %v1250, %v332
          %vm1269 = vcmp.eq.s32.totalorder %v1253, %v332
          %v1270 = vsel %vm1254, 1.0, 0.0
          %v1271 = vsel %vm1255, 1.0, 0.0
          %v1272 = vsel %vm1256, 1.0, 0.0
          %v1273 = vsel %vm1257, 1.0, 0.0
          %v1274 = vsel %vm1258, 1.0, 0.0
          %v1275 = vsel %vm1259, 1.0, 0.0
          %v1276 = vsel %vm1260, 1.0, 0.0
          %v1277 = vsel %vm1261, 1.0, 0.0
          %v1278 = vsel %vm1262, 1.0, 0.0
          %v1279 = vsel %vm1263, 1.0, 0.0
          %v1280 = vsel %vm1264, 1.0, 0.0
          %v1281 = vsel %vm1265, 1.0, 0.0
          %v1282 = vsel %vm1266, 1.0, 0.0
          %v1283 = vsel %vm1267, 1.0, 0.0
          %v1284 = vsel %vm1268, 1.0, 0.0
          %v1285 = vsel %vm1269, 1.0, 0.0
          %v1286 = vadd.f32 %v1190, %v1270
          %v1287 = vadd.f32 %v1191, %v1271
          %v1288 = vadd.f32 %v1192, %v1272
          %v1289 = vadd.f32 %v1193, %v1273
          %v1290 = vadd.f32 %v1194, %v1274
          %v1291 = vadd.f32 %v1195, %v1275
          %v1292 = vadd.f32 %v1196, %v1276
          %v1293 = vadd.f32 %v1197, %v1277
          %v1294 = vadd.f32 %v1198, %v1278
          %v1295 = vadd.f32 %v1199, %v1279
          %v1296 = vadd.f32 %v1200, %v1280
          %v1297 = vadd.f32 %v1201, %v1281
          %v1298 = vadd.f32 %v1202, %v1282
          %v1299 = vadd.f32 %v1203, %v1283
          %v1300 = vadd.f32 %v1204, %v1284
          %v1301 = vadd.f32 %v1205, %v1285
          %1302 = vset.pattern.permute.xlu0 10
          %1303 = vperm.xlu0 %1302, %v341
          %v1304 = vpop.permute.xlu0 %1303
          %1305 = vset.pattern.permute.xlu0 10
          %1306 = vperm.xlu0 %1305, %v342
          %v1307 = vpop.permute.xlu0 %1306
          %1308 = vset.pattern.permute.xlu0 10
          %1309 = vperm.xlu0 %1308, %v343
          %v1310 = vpop.permute.xlu0 %1309
          %1311 = vset.pattern.permute.xlu0 10
          %1312 = vperm.xlu0 %1311, %v344
          %v1313 = vpop.permute.xlu0 %1312
          %1314 = vset.pattern.permute.xlu0 10
          %1315 = vperm.xlu0 %1314, %v345
          %v1316 = vpop.permute.xlu0 %1315
          %1317 = vset.pattern.permute.xlu0 10
          %1318 = vperm.xlu0 %1317, %v346
          %v1319 = vpop.permute.xlu0 %1318
          %1320 = vset.pattern.permute.xlu0 10
          %1321 = vperm.xlu0 %1320, %v347
          %v1322 = vpop.permute.xlu0 %1321
          %1323 = vset.pattern.permute.xlu0 10
          %1324 = vperm.xlu0 %1323, %v348
          %v1325 = vpop.permute.xlu0 %1324
          %1326 = vset.pattern.permute.xlu0 10
          %1327 = vperm.xlu0 %1326, %v349
          %v1328 = vpop.permute.xlu0 %1327
          %1329 = vset.pattern.permute.xlu0 10
          %1330 = vperm.xlu0 %1329, %v350
          %v1331 = vpop.permute.xlu0 %1330
          %1332 = vset.pattern.permute.xlu0 10
          %1333 = vperm.xlu0 %1332, %v351
          %v1334 = vpop.permute.xlu0 %1333
          %1335 = vset.pattern.permute.xlu0 10
          %1336 = vperm.xlu0 %1335, %v352
          %v1337 = vpop.permute.xlu0 %1336
          %1338 = vset.pattern.permute.xlu0 10
          %1339 = vperm.xlu0 %1338, %v353
          %v1340 = vpop.permute.xlu0 %1339
          %1341 = vset.pattern.permute.xlu0 10
          %1342 = vperm.xlu0 %1341, %v354
          %v1343 = vpop.permute.xlu0 %1342
          %1344 = vset.pattern.permute.xlu0 10
          %1345 = vperm.xlu0 %1344, %v355
          %v1346 = vpop.permute.xlu0 %1345
          %1347 = vset.pattern.permute.xlu0 10
          %1348 = vperm.xlu0 %1347, %v356
          %v1349 = vpop.permute.xlu0 %1348
          %vm1350 = vcmp.eq.s32.totalorder %v1304, %v332
          %vm1351 = vcmp.eq.s32.totalorder %v1307, %v332
          %vm1352 = vcmp.eq.s32.totalorder %v1310, %v332
          %vm1353 = vcmp.eq.s32.totalorder %v1313, %v332
          %vm1354 = vcmp.eq.s32.totalorder %v1316, %v332
          %vm1355 = vcmp.eq.s32.totalorder %v1319, %v332
          %vm1356 = vcmp.eq.s32.totalorder %v1322, %v332
          %vm1357 = vcmp.eq.s32.totalorder %v1325, %v332
          %vm1358 = vcmp.eq.s32.totalorder %v1328, %v332
          %vm1359 = vcmp.eq.s32.totalorder %v1331, %v332
          %vm1360 = vcmp.eq.s32.totalorder %v1334, %v332
          %vm1361 = vcmp.eq.s32.totalorder %v1337, %v332
          %vm1362 = vcmp.eq.s32.totalorder %v1340, %v332
          %vm1363 = vcmp.eq.s32.totalorder %v1343, %v332
          %vm1364 = vcmp.eq.s32.totalorder %v1346, %v332
          %vm1365 = vcmp.eq.s32.totalorder %v1349, %v332
          %v1366 = vsel %vm1350, 1.0, 0.0
          %v1367 = vsel %vm1351, 1.0, 0.0
          %v1368 = vsel %vm1352, 1.0, 0.0
          %v1369 = vsel %vm1353, 1.0, 0.0
          %v1370 = vsel %vm1354, 1.0, 0.0
          %v1371 = vsel %vm1355, 1.0, 0.0
          %v1372 = vsel %vm1356, 1.0, 0.0
          %v1373 = vsel %vm1357, 1.0, 0.0
          %v1374 = vsel %vm1358, 1.0, 0.0
          %v1375 = vsel %vm1359, 1.0, 0.0
          %v1376 = vsel %vm1360, 1.0, 0.0
          %v1377 = vsel %vm1361, 1.0, 0.0
          %v1378 = vsel %vm1362, 1.0, 0.0
          %v1379 = vsel %vm1363, 1.0, 0.0
          %v1380 = vsel %vm1364, 1.0, 0.0
          %v1381 = vsel %vm1365, 1.0, 0.0
          %v1382 = vadd.f32 %v1286, %v1366
          %v1383 = vadd.f32 %v1287, %v1367
          %v1384 = vadd.f32 %v1288, %v1368
          %v1385 = vadd.f32 %v1289, %v1369
          %v1386 = vadd.f32 %v1290, %v1370
          %v1387 = vadd.f32 %v1291, %v1371
          %v1388 = vadd.f32 %v1292, %v1372
          %v1389 = vadd.f32 %v1293, %v1373
          %v1390 = vadd.f32 %v1294, %v1374
          %v1391 = vadd.f32 %v1295, %v1375
          %v1392 = vadd.f32 %v1296, %v1376
          %v1393 = vadd.f32 %v1297, %v1377
          %v1394 = vadd.f32 %v1298, %v1378
          %v1395 = vadd.f32 %v1299, %v1379
          %v1396 = vadd.f32 %v1300, %v1380
          %v1397 = vadd.f32 %v1301, %v1381
          %1398 = vset.pattern.permute.xlu0 11
          %1399 = vperm.xlu0 %1398, %v341
          %v1400 = vpop.permute.xlu0 %1399
          %1401 = vset.pattern.permute.xlu0 11
          %1402 = vperm.xlu0 %1401, %v342
          %v1403 = vpop.permute.xlu0 %1402
          %1404 = vset.pattern.permute.xlu0 11
          %1405 = vperm.xlu0 %1404, %v343
          %v1406 = vpop.permute.xlu0 %1405
          %1407 = vset.pattern.permute.xlu0 11
          %1408 = vperm.xlu0 %1407, %v344
          %v1409 = vpop.permute.xlu0 %1408
          %1410 = vset.pattern.permute.xlu0 11
          %1411 = vperm.xlu0 %1410, %v345
          %v1412 = vpop.permute.xlu0 %1411
          %1413 = vset.pattern.permute.xlu0 11
          %1414 = vperm.xlu0 %1413, %v346
          %v1415 = vpop.permute.xlu0 %1414
          %1416 = vset.pattern.permute.xlu0 11
          %1417 = vperm.xlu0 %1416, %v347
          %v1418 = vpop.permute.xlu0 %1417
          %1419 = vset.pattern.permute.xlu0 11
          %1420 = vperm.xlu0 %1419, %v348
          %v1421 = vpop.permute.xlu0 %1420
          %1422 = vset.pattern.permute.xlu0 11
          %1423 = vperm.xlu0 %1422, %v349
          %v1424 = vpop.permute.xlu0 %1423
          %1425 = vset.pattern.permute.xlu0 11
          %1426 = vperm.xlu0 %1425, %v350
          %v1427 = vpop.permute.xlu0 %1426
          %1428 = vset.pattern.permute.xlu0 11
          %1429 = vperm.xlu0 %1428, %v351
          %v1430 = vpop.permute.xlu0 %1429
          %1431 = vset.pattern.permute.xlu0 11
          %1432 = vperm.xlu0 %1431, %v352
          %v1433 = vpop.permute.xlu0 %1432
          %1434 = vset.pattern.permute.xlu0 11
          %1435 = vperm.xlu0 %1434, %v353
          %v1436 = vpop.permute.xlu0 %1435
          %1437 = vset.pattern.permute.xlu0 11
          %1438 = vperm.xlu0 %1437, %v354
          %v1439 = vpop.permute.xlu0 %1438
          %1440 = vset.pattern.permute.xlu0 11
          %1441 = vperm.xlu0 %1440, %v355
          %v1442 = vpop.permute.xlu0 %1441
          %1443 = vset.pattern.permute.xlu0 11
          %1444 = vperm.xlu0 %1443, %v356
          %v1445 = vpop.permute.xlu0 %1444
          %vm1446 = vcmp.eq.s32.totalorder %v1400, %v332
          %vm1447 = vcmp.eq.s32.totalorder %v1403, %v332
          %vm1448 = vcmp.eq.s32.totalorder %v1406, %v332
          %vm1449 = vcmp.eq.s32.totalorder %v1409, %v332
          %vm1450 = vcmp.eq.s32.totalorder %v1412, %v332
          %vm1451 = vcmp.eq.s32.totalorder %v1415, %v332
          %vm1452 = vcmp.eq.s32.totalorder %v1418, %v332
          %vm1453 = vcmp.eq.s32.totalorder %v1421, %v332
          %vm1454 = vcmp.eq.s32.totalorder %v1424, %v332
          %vm1455 = vcmp.eq.s32.totalorder %v1427, %v332
          %vm1456 = vcmp.eq.s32.totalorder %v1430, %v332
          %vm1457 = vcmp.eq.s32.totalorder %v1433, %v332
          %vm1458 = vcmp.eq.s32.totalorder %v1436, %v332
          %vm1459 = vcmp.eq.s32.totalorder %v1439, %v332
          %vm1460 = vcmp.eq.s32.totalorder %v1442, %v332
          %vm1461 = vcmp.eq.s32.totalorder %v1445, %v332
          %v1462 = vsel %vm1446, 1.0, 0.0
          %v1463 = vsel %vm1447, 1.0, 0.0
          %v1464 = vsel %vm1448, 1.0, 0.0
          %v1465 = vsel %vm1449, 1.0, 0.0
          %v1466 = vsel %vm1450, 1.0, 0.0
          %v1467 = vsel %vm1451, 1.0, 0.0
          %v1468 = vsel %vm1452, 1.0, 0.0
          %v1469 = vsel %vm1453, 1.0, 0.0
          %v1470 = vsel %vm1454, 1.0, 0.0
          %v1471 = vsel %vm1455, 1.0, 0.0
          %v1472 = vsel %vm1456, 1.0, 0.0
          %v1473 = vsel %vm1457, 1.0, 0.0
          %v1474 = vsel %vm1458, 1.0, 0.0
          %v1475 = vsel %vm1459, 1.0, 0.0
          %v1476 = vsel %vm1460, 1.0, 0.0
          %v1477 = vsel %vm1461, 1.0, 0.0
          %v1478 = vadd.f32 %v1382, %v1462
          %v1479 = vadd.f32 %v1383, %v1463
          %v1480 = vadd.f32 %v1384, %v1464
          %v1481 = vadd.f32 %v1385, %v1465
          %v1482 = vadd.f32 %v1386, %v1466
          %v1483 = vadd.f32 %v1387, %v1467
          %v1484 = vadd.f32 %v1388, %v1468
          %v1485 = vadd.f32 %v1389, %v1469
          %v1486 = vadd.f32 %v1390, %v1470
          %v1487 = vadd.f32 %v1391, %v1471
          %v1488 = vadd.f32 %v1392, %v1472
          %v1489 = vadd.f32 %v1393, %v1473
          %v1490 = vadd.f32 %v1394, %v1474
          %v1491 = vadd.f32 %v1395, %v1475
          %v1492 = vadd.f32 %v1396, %v1476
          %v1493 = vadd.f32 %v1397, %v1477
          %v1494 = vadd.f32 %v1110, %v1478
          %v1495 = vadd.f32 %v1111, %v1479
          %v1496 = vadd.f32 %v1112, %v1480
          %v1497 = vadd.f32 %v1113, %v1481
          %v1498 = vadd.f32 %v1114, %v1482
          %v1499 = vadd.f32 %v1115, %v1483
          %v1500 = vadd.f32 %v1116, %v1484
          %v1501 = vadd.f32 %v1117, %v1485
          %v1502 = vadd.f32 %v1118, %v1486
          %v1503 = vadd.f32 %v1119, %v1487
          %v1504 = vadd.f32 %v1120, %v1488
          %v1505 = vadd.f32 %v1121, %v1489
          %v1506 = vadd.f32 %v1122, %v1490
          %v1507 = vadd.f32 %v1123, %v1491
          %v1508 = vadd.f32 %v1124, %v1492
          %v1509 = vadd.f32 %v1125, %v1493
          %1510 = vset.pattern.permute.xlu0 12
          %1511 = vperm.xlu0 %1510, %v341
          %v1512 = vpop.permute.xlu0 %1511
          %1513 = vset.pattern.permute.xlu0 12
          %1514 = vperm.xlu0 %1513, %v342
          %v1515 = vpop.permute.xlu0 %1514
          %1516 = vset.pattern.permute.xlu0 12
          %1517 = vperm.xlu0 %1516, %v343
          %v1518 = vpop.permute.xlu0 %1517
          %1519 = vset.pattern.permute.xlu0 12
          %1520 = vperm.xlu0 %1519, %v344
          %v1521 = vpop.permute.xlu0 %1520
          %1522 = vset.pattern.permute.xlu0 12
          %1523 = vperm.xlu0 %1522, %v345
          %v1524 = vpop.permute.xlu0 %1523
          %1525 = vset.pattern.permute.xlu0 12
          %1526 = vperm.xlu0 %1525, %v346
          %v1527 = vpop.permute.xlu0 %1526
          %1528 = vset.pattern.permute.xlu0 12
          %1529 = vperm.xlu0 %1528, %v347
          %v1530 = vpop.permute.xlu0 %1529
          %1531 = vset.pattern.permute.xlu0 12
          %1532 = vperm.xlu0 %1531, %v348
          %v1533 = vpop.permute.xlu0 %1532
          %1534 = vset.pattern.permute.xlu0 12
          %1535 = vperm.xlu0 %1534, %v349
          %v1536 = vpop.permute.xlu0 %1535
          %1537 = vset.pattern.permute.xlu0 12
          %1538 = vperm.xlu0 %1537, %v350
          %v1539 = vpop.permute.xlu0 %1538
          %1540 = vset.pattern.permute.xlu0 12
          %1541 = vperm.xlu0 %1540, %v351
          %v1542 = vpop.permute.xlu0 %1541
          %1543 = vset.pattern.permute.xlu0 12
          %1544 = vperm.xlu0 %1543, %v352
          %v1545 = vpop.permute.xlu0 %1544
          %1546 = vset.pattern.permute.xlu0 12
          %1547 = vperm.xlu0 %1546, %v353
          %v1548 = vpop.permute.xlu0 %1547
          %1549 = vset.pattern.permute.xlu0 12
          %1550 = vperm.xlu0 %1549, %v354
          %v1551 = vpop.permute.xlu0 %1550
          %1552 = vset.pattern.permute.xlu0 12
          %1553 = vperm.xlu0 %1552, %v355
          %v1554 = vpop.permute.xlu0 %1553
          %1555 = vset.pattern.permute.xlu0 12
          %1556 = vperm.xlu0 %1555, %v356
          %v1557 = vpop.permute.xlu0 %1556
          %vm1558 = vcmp.eq.s32.totalorder %v1512, %v332
          %vm1559 = vcmp.eq.s32.totalorder %v1515, %v332
          %vm1560 = vcmp.eq.s32.totalorder %v1518, %v332
          %vm1561 = vcmp.eq.s32.totalorder %v1521, %v332
          %vm1562 = vcmp.eq.s32.totalorder %v1524, %v332
          %vm1563 = vcmp.eq.s32.totalorder %v1527, %v332
          %vm1564 = vcmp.eq.s32.totalorder %v1530, %v332
          %vm1565 = vcmp.eq.s32.totalorder %v1533, %v332
          %vm1566 = vcmp.eq.s32.totalorder %v1536, %v332
          %vm1567 = vcmp.eq.s32.totalorder %v1539, %v332
          %vm1568 = vcmp.eq.s32.totalorder %v1542, %v332
          %vm1569 = vcmp.eq.s32.totalorder %v1545, %v332
          %vm1570 = vcmp.eq.s32.totalorder %v1548, %v332
          %vm1571 = vcmp.eq.s32.totalorder %v1551, %v332
          %vm1572 = vcmp.eq.s32.totalorder %v1554, %v332
          %vm1573 = vcmp.eq.s32.totalorder %v1557, %v332
          %v1574 = vsel %vm1558, 1.0, 0.0
          %v1575 = vsel %vm1559, 1.0, 0.0
          %v1576 = vsel %vm1560, 1.0, 0.0
          %v1577 = vsel %vm1561, 1.0, 0.0
          %v1578 = vsel %vm1562, 1.0, 0.0
          %v1579 = vsel %vm1563, 1.0, 0.0
          %v1580 = vsel %vm1564, 1.0, 0.0
          %v1581 = vsel %vm1565, 1.0, 0.0
          %v1582 = vsel %vm1566, 1.0, 0.0
          %v1583 = vsel %vm1567, 1.0, 0.0
          %v1584 = vsel %vm1568, 1.0, 0.0
          %v1585 = vsel %vm1569, 1.0, 0.0
          %v1586 = vsel %vm1570, 1.0, 0.0
          %v1587 = vsel %vm1571, 1.0, 0.0
          %v1588 = vsel %vm1572, 1.0, 0.0
          %v1589 = vsel %vm1573, 1.0, 0.0
          %1590 = vset.pattern.permute.xlu0 13
          %1591 = vperm.xlu0 %1590, %v341
          %v1592 = vpop.permute.xlu0 %1591
          %1593 = vset.pattern.permute.xlu0 13
          %1594 = vperm.xlu0 %1593, %v342
          %v1595 = vpop.permute.xlu0 %1594
          %1596 = vset.pattern.permute.xlu0 13
          %1597 = vperm.xlu0 %1596, %v343
          %v1598 = vpop.permute.xlu0 %1597
          %1599 = vset.pattern.permute.xlu0 13
          %1600 = vperm.xlu0 %1599, %v344
          %v1601 = vpop.permute.xlu0 %1600
          %1602 = vset.pattern.permute.xlu0 13
          %1603 = vperm.xlu0 %1602, %v345
          %v1604 = vpop.permute.xlu0 %1603
          %1605 = vset.pattern.permute.xlu0 13
          %1606 = vperm.xlu0 %1605, %v346
          %v1607 = vpop.permute.xlu0 %1606
          %1608 = vset.pattern.permute.xlu0 13
          %1609 = vperm.xlu0 %1608, %v347
          %v1610 = vpop.permute.xlu0 %1609
          %1611 = vset.pattern.permute.xlu0 13
          %1612 = vperm.xlu0 %1611, %v348
          %v1613 = vpop.permute.xlu0 %1612
          %1614 = vset.pattern.permute.xlu0 13
          %1615 = vperm.xlu0 %1614, %v349
          %v1616 = vpop.permute.xlu0 %1615
          %1617 = vset.pattern.permute.xlu0 13
          %1618 = vperm.xlu0 %1617, %v350
          %v1619 = vpop.permute.xlu0 %1618
          %1620 = vset.pattern.permute.xlu0 13
          %1621 = vperm.xlu0 %1620, %v351
          %v1622 = vpop.permute.xlu0 %1621
          %1623 = vset.pattern.permute.xlu0 13
          %1624 = vperm.xlu0 %1623, %v352
          %v1625 = vpop.permute.xlu0 %1624
          %1626 = vset.pattern.permute.xlu0 13
          %1627 = vperm.xlu0 %1626, %v353
          %v1628 = vpop.permute.xlu0 %1627
          %1629 = vset.pattern.permute.xlu0 13
          %1630 = vperm.xlu0 %1629, %v354
          %v1631 = vpop.permute.xlu0 %1630
          %1632 = vset.pattern.permute.xlu0 13
          %1633 = vperm.xlu0 %1632, %v355
          %v1634 = vpop.permute.xlu0 %1633
          %1635 = vset.pattern.permute.xlu0 13
          %1636 = vperm.xlu0 %1635, %v356
          %v1637 = vpop.permute.xlu0 %1636
          %vm1638 = vcmp.eq.s32.totalorder %v1592, %v332
          %vm1639 = vcmp.eq.s32.totalorder %v1595, %v332
          %vm1640 = vcmp.eq.s32.totalorder %v1598, %v332
          %vm1641 = vcmp.eq.s32.totalorder %v1601, %v332
          %vm1642 = vcmp.eq.s32.totalorder %v1604, %v332
          %vm1643 = vcmp.eq.s32.totalorder %v1607, %v332
          %vm1644 = vcmp.eq.s32.totalorder %v1610, %v332
          %vm1645 = vcmp.eq.s32.totalorder %v1613, %v332
          %vm1646 = vcmp.eq.s32.totalorder %v1616, %v332
          %vm1647 = vcmp.eq.s32.totalorder %v1619, %v332
          %vm1648 = vcmp.eq.s32.totalorder %v1622, %v332
          %vm1649 = vcmp.eq.s32.totalorder %v1625, %v332
          %vm1650 = vcmp.eq.s32.totalorder %v1628, %v332
          %vm1651 = vcmp.eq.s32.totalorder %v1631, %v332
          %vm1652 = vcmp.eq.s32.totalorder %v1634, %v332
          %vm1653 = vcmp.eq.s32.totalorder %v1637, %v332
          %v1654 = vsel %vm1638, 1.0, 0.0
          %v1655 = vsel %vm1639, 1.0, 0.0
          %v1656 = vsel %vm1640, 1.0, 0.0
          %v1657 = vsel %vm1641, 1.0, 0.0
          %v1658 = vsel %vm1642, 1.0, 0.0
          %v1659 = vsel %vm1643, 1.0, 0.0
          %v1660 = vsel %vm1644, 1.0, 0.0
          %v1661 = vsel %vm1645, 1.0, 0.0
          %v1662 = vsel %vm1646, 1.0, 0.0
          %v1663 = vsel %vm1647, 1.0, 0.0
          %v1664 = vsel %vm1648, 1.0, 0.0
          %v1665 = vsel %vm1649, 1.0, 0.0
          %v1666 = vsel %vm1650, 1.0, 0.0
          %v1667 = vsel %vm1651, 1.0, 0.0
          %v1668 = vsel %vm1652, 1.0, 0.0
          %v1669 = vsel %vm1653, 1.0, 0.0
          %v1670 = vadd.f32 %v1574, %v1654
          %v1671 = vadd.f32 %v1575, %v1655
          %v1672 = vadd.f32 %v1576, %v1656
          %v1673 = vadd.f32 %v1577, %v1657
          %v1674 = vadd.f32 %v1578, %v1658
          %v1675 = vadd.f32 %v1579, %v1659
          %v1676 = vadd.f32 %v1580, %v1660
          %v1677 = vadd.f32 %v1581, %v1661
          %v1678 = vadd.f32 %v1582, %v1662
          %v1679 = vadd.f32 %v1583, %v1663
          %v1680 = vadd.f32 %v1584, %v1664
          %v1681 = vadd.f32 %v1585, %v1665
          %v1682 = vadd.f32 %v1586, %v1666
          %v1683 = vadd.f32 %v1587, %v1667
          %v1684 = vadd.f32 %v1588, %v1668
          %v1685 = vadd.f32 %v1589, %v1669
          %1686 = vset.pattern.permute.xlu0 14
          %1687 = vperm.xlu0 %1686, %v341
          %v1688 = vpop.permute.xlu0 %1687
          %1689 = vset.pattern.permute.xlu0 14
          %1690 = vperm.xlu0 %1689, %v342
          %v1691 = vpop.permute.xlu0 %1690
          %1692 = vset.pattern.permute.xlu0 14
          %1693 = vperm.xlu0 %1692, %v343
          %v1694 = vpop.permute.xlu0 %1693
          %1695 = vset.pattern.permute.xlu0 14
          %1696 = vperm.xlu0 %1695, %v344
          %v1697 = vpop.permute.xlu0 %1696
          %1698 = vset.pattern.permute.xlu0 14
          %1699 = vperm.xlu0 %1698, %v345
          %v1700 = vpop.permute.xlu0 %1699
          %1701 = vset.pattern.permute.xlu0 14
          %1702 = vperm.xlu0 %1701, %v346
          %v1703 = vpop.permute.xlu0 %1702
          %1704 = vset.pattern.permute.xlu0 14
          %1705 = vperm.xlu0 %1704, %v347
          %v1706 = vpop.permute.xlu0 %1705
          %1707 = vset.pattern.permute.xlu0 14
          %1708 = vperm.xlu0 %1707, %v348
          %v1709 = vpop.permute.xlu0 %1708
          %1710 = vset.pattern.permute.xlu0 14
          %1711 = vperm.xlu0 %1710, %v349
          %v1712 = vpop.permute.xlu0 %1711
          %1713 = vset.pattern.permute.xlu0 14
          %1714 = vperm.xlu0 %1713, %v350
          %v1715 = vpop.permute.xlu0 %1714
          %1716 = vset.pattern.permute.xlu0 14
          %1717 = vperm.xlu0 %1716, %v351
          %v1718 = vpop.permute.xlu0 %1717
          %1719 = vset.pattern.permute.xlu0 14
          %1720 = vperm.xlu0 %1719, %v352
          %v1721 = vpop.permute.xlu0 %1720
          %1722 = vset.pattern.permute.xlu0 14
          %1723 = vperm.xlu0 %1722, %v353
          %v1724 = vpop.permute.xlu0 %1723
          %1725 = vset.pattern.permute.xlu0 14
          %1726 = vperm.xlu0 %1725, %v354
          %v1727 = vpop.permute.xlu0 %1726
          %1728 = vset.pattern.permute.xlu0 14
          %1729 = vperm.xlu0 %1728, %v355
          %v1730 = vpop.permute.xlu0 %1729
          %1731 = vset.pattern.permute.xlu0 14
          %1732 = vperm.xlu0 %1731, %v356
          %v1733 = vpop.permute.xlu0 %1732
          %vm1734 = vcmp.eq.s32.totalorder %v1688, %v332
          %vm1735 = vcmp.eq.s32.totalorder %v1691, %v332
          %vm1736 = vcmp.eq.s32.totalorder %v1694, %v332
          %vm1737 = vcmp.eq.s32.totalorder %v1697, %v332
          %vm1738 = vcmp.eq.s32.totalorder %v1700, %v332
          %vm1739 = vcmp.eq.s32.totalorder %v1703, %v332
          %vm1740 = vcmp.eq.s32.totalorder %v1706, %v332
          %vm1741 = vcmp.eq.s32.totalorder %v1709, %v332
          %vm1742 = vcmp.eq.s32.totalorder %v1712, %v332
          %vm1743 = vcmp.eq.s32.totalorder %v1715, %v332
          %vm1744 = vcmp.eq.s32.totalorder %v1718, %v332
          %vm1745 = vcmp.eq.s32.totalorder %v1721, %v332
          %vm1746 = vcmp.eq.s32.totalorder %v1724, %v332
          %vm1747 = vcmp.eq.s32.totalorder %v1727, %v332
          %vm1748 = vcmp.eq.s32.totalorder %v1730, %v332
          %vm1749 = vcmp.eq.s32.totalorder %v1733, %v332
          %v1750 = vsel %vm1734, 1.0, 0.0
          %v1751 = vsel %vm1735, 1.0, 0.0
          %v1752 = vsel %vm1736, 1.0, 0.0
          %v1753 = vsel %vm1737, 1.0, 0.0
          %v1754 = vsel %vm1738, 1.0, 0.0
          %v1755 = vsel %vm1739, 1.0, 0.0
          %v1756 = vsel %vm1740, 1.0, 0.0
          %v1757 = vsel %vm1741, 1.0, 0.0
          %v1758 = vsel %vm1742, 1.0, 0.0
          %v1759 = vsel %vm1743, 1.0, 0.0
          %v1760 = vsel %vm1744, 1.0, 0.0
          %v1761 = vsel %vm1745, 1.0, 0.0
          %v1762 = vsel %vm1746, 1.0, 0.0
          %v1763 = vsel %vm1747, 1.0, 0.0
          %v1764 = vsel %vm1748, 1.0, 0.0
          %v1765 = vsel %vm1749, 1.0, 0.0
          %v1766 = vadd.f32 %v1670, %v1750
          %v1767 = vadd.f32 %v1671, %v1751
          %v1768 = vadd.f32 %v1672, %v1752
          %v1769 = vadd.f32 %v1673, %v1753
          %v1770 = vadd.f32 %v1674, %v1754
          %v1771 = vadd.f32 %v1675, %v1755
          %v1772 = vadd.f32 %v1676, %v1756
          %v1773 = vadd.f32 %v1677, %v1757
          %v1774 = vadd.f32 %v1678, %v1758
          %v1775 = vadd.f32 %v1679, %v1759
          %v1776 = vadd.f32 %v1680, %v1760
          %v1777 = vadd.f32 %v1681, %v1761
          %v1778 = vadd.f32 %v1682, %v1762
          %v1779 = vadd.f32 %v1683, %v1763
          %v1780 = vadd.f32 %v1684, %v1764
          %v1781 = vadd.f32 %v1685, %v1765
          %1782 = vset.pattern.permute.xlu0 15
          %1783 = vperm.xlu0 %1782, %v341
          %v1784 = vpop.permute.xlu0 %1783
          %1785 = vset.pattern.permute.xlu0 15
          %1786 = vperm.xlu0 %1785, %v342
          %v1787 = vpop.permute.xlu0 %1786
          %1788 = vset.pattern.permute.xlu0 15
          %1789 = vperm.xlu0 %1788, %v343
          %v1790 = vpop.permute.xlu0 %1789
          %1791 = vset.pattern.permute.xlu0 15
          %1792 = vperm.xlu0 %1791, %v344
          %v1793 = vpop.permute.xlu0 %1792
          %1794 = vset.pattern.permute.xlu0 15
          %1795 = vperm.xlu0 %1794, %v345
          %v1796 = vpop.permute.xlu0 %1795
          %1797 = vset.pattern.permute.xlu0 15
          %1798 = vperm.xlu0 %1797, %v346
          %v1799 = vpop.permute.xlu0 %1798
          %1800 = vset.pattern.permute.xlu0 15
          %1801 = vperm.xlu0 %1800, %v347
          %v1802 = vpop.permute.xlu0 %1801
          %1803 = vset.pattern.permute.xlu0 15
          %1804 = vperm.xlu0 %1803, %v348
          %v1805 = vpop.permute.xlu0 %1804
          %1806 = vset.pattern.permute.xlu0 15
          %1807 = vperm.xlu0 %1806, %v349
          %v1808 = vpop.permute.xlu0 %1807
          %1809 = vset.pattern.permute.xlu0 15
          %1810 = vperm.xlu0 %1809, %v350
          %v1811 = vpop.permute.xlu0 %1810
          %1812 = vset.pattern.permute.xlu0 15
          %1813 = vperm.xlu0 %1812, %v351
          %v1814 = vpop.permute.xlu0 %1813
          %1815 = vset.pattern.permute.xlu0 15
          %1816 = vperm.xlu0 %1815, %v352
          %v1817 = vpop.permute.xlu0 %1816
          %1818 = vset.pattern.permute.xlu0 15
          %1819 = vperm.xlu0 %1818, %v353
          %v1820 = vpop.permute.xlu0 %1819
          %1821 = vset.pattern.permute.xlu0 15
          %1822 = vperm.xlu0 %1821, %v354
          %v1823 = vpop.permute.xlu0 %1822
          %1824 = vset.pattern.permute.xlu0 15
          %1825 = vperm.xlu0 %1824, %v355
          %v1826 = vpop.permute.xlu0 %1825
          %1827 = vset.pattern.permute.xlu0 15
          %1828 = vperm.xlu0 %1827, %v356
          %v1829 = vpop.permute.xlu0 %1828
          %vm1830 = vcmp.eq.s32.totalorder %v1784, %v332
          %vm1831 = vcmp.eq.s32.totalorder %v1787, %v332
          %vm1832 = vcmp.eq.s32.totalorder %v1790, %v332
          %vm1833 = vcmp.eq.s32.totalorder %v1793, %v332
          %vm1834 = vcmp.eq.s32.totalorder %v1796, %v332
          %vm1835 = vcmp.eq.s32.totalorder %v1799, %v332
          %vm1836 = vcmp.eq.s32.totalorder %v1802, %v332
          %vm1837 = vcmp.eq.s32.totalorder %v1805, %v332
          %vm1838 = vcmp.eq.s32.totalorder %v1808, %v332
          %vm1839 = vcmp.eq.s32.totalorder %v1811, %v332
          %vm1840 = vcmp.eq.s32.totalorder %v1814, %v332
          %vm1841 = vcmp.eq.s32.totalorder %v1817, %v332
          %vm1842 = vcmp.eq.s32.totalorder %v1820, %v332
          %vm1843 = vcmp.eq.s32.totalorder %v1823, %v332
          %vm1844 = vcmp.eq.s32.totalorder %v1826, %v332
          %vm1845 = vcmp.eq.s32.totalorder %v1829, %v332
          %v1846 = vsel %vm1830, 1.0, 0.0
          %v1847 = vsel %vm1831, 1.0, 0.0
          %v1848 = vsel %vm1832, 1.0, 0.0
          %v1849 = vsel %vm1833, 1.0, 0.0
          %v1850 = vsel %vm1834, 1.0, 0.0
          %v1851 = vsel %vm1835, 1.0, 0.0
          %v1852 = vsel %vm1836, 1.0, 0.0
          %v1853 = vsel %vm1837, 1.0, 0.0
          %v1854 = vsel %vm1838, 1.0, 0.0
          %v1855 = vsel %vm1839, 1.0, 0.0
          %v1856 = vsel %vm1840, 1.0, 0.0
          %v1857 = vsel %vm1841, 1.0, 0.0
          %v1858 = vsel %vm1842, 1.0, 0.0
          %v1859 = vsel %vm1843, 1.0, 0.0
          %v1860 = vsel %vm1844, 1.0, 0.0
          %v1861 = vsel %vm1845, 1.0, 0.0
          %v1862 = vadd.f32 %v1766, %v1846
          %v1863 = vadd.f32 %v1767, %v1847
          %v1864 = vadd.f32 %v1768, %v1848
          %v1865 = vadd.f32 %v1769, %v1849
          %v1866 = vadd.f32 %v1770, %v1850
          %v1867 = vadd.f32 %v1771, %v1851
          %v1868 = vadd.f32 %v1772, %v1852
          %v1869 = vadd.f32 %v1773, %v1853
          %v1870 = vadd.f32 %v1774, %v1854
          %v1871 = vadd.f32 %v1775, %v1855
          %v1872 = vadd.f32 %v1776, %v1856
          %v1873 = vadd.f32 %v1777, %v1857
          %v1874 = vadd.f32 %v1778, %v1858
          %v1875 = vadd.f32 %v1779, %v1859
          %v1876 = vadd.f32 %v1780, %v1860
          %v1877 = vadd.f32 %v1781, %v1861
          %v1878 = vadd.f32 %v1494, %v1862
          %v1879 = vadd.f32 %v1495, %v1863
          %v1880 = vadd.f32 %v1496, %v1864
          %v1881 = vadd.f32 %v1497, %v1865
          %v1882 = vadd.f32 %v1498, %v1866
          %v1883 = vadd.f32 %v1499, %v1867
          %v1884 = vadd.f32 %v1500, %v1868
          %v1885 = vadd.f32 %v1501, %v1869
          %v1886 = vadd.f32 %v1502, %v1870
          %v1887 = vadd.f32 %v1503, %v1871
          %v1888 = vadd.f32 %v1504, %v1872
          %v1889 = vadd.f32 %v1505, %v1873
          %v1890 = vadd.f32 %v1506, %v1874
          %v1891 = vadd.f32 %v1507, %v1875
          %v1892 = vadd.f32 %v1508, %v1876
          %v1893 = vadd.f32 %v1509, %v1877
          %1894 = vset.pattern.permute.xlu0 16
          %1895 = vperm.xlu0 %1894, %v341
          %v1896 = vpop.permute.xlu0 %1895
          %1897 = vset.pattern.permute.xlu0 16
          %1898 = vperm.xlu0 %1897, %v342
          %v1899 = vpop.permute.xlu0 %1898
          %1900 = vset.pattern.permute.xlu0 16
          %1901 = vperm.xlu0 %1900, %v343
          %v1902 = vpop.permute.xlu0 %1901
          %1903 = vset.pattern.permute.xlu0 16
          %1904 = vperm.xlu0 %1903, %v344
          %v1905 = vpop.permute.xlu0 %1904
          %1906 = vset.pattern.permute.xlu0 16
          %1907 = vperm.xlu0 %1906, %v345
          %v1908 = vpop.permute.xlu0 %1907
          %1909 = vset.pattern.permute.xlu0 16
          %1910 = vperm.xlu0 %1909, %v346
          %v1911 = vpop.permute.xlu0 %1910
          %1912 = vset.pattern.permute.xlu0 16
          %1913 = vperm.xlu0 %1912, %v347
          %v1914 = vpop.permute.xlu0 %1913
          %1915 = vset.pattern.permute.xlu0 16
          %1916 = vperm.xlu0 %1915, %v348
          %v1917 = vpop.permute.xlu0 %1916
          %1918 = vset.pattern.permute.xlu0 16
          %1919 = vperm.xlu0 %1918, %v349
          %v1920 = vpop.permute.xlu0 %1919
          %1921 = vset.pattern.permute.xlu0 16
          %1922 = vperm.xlu0 %1921, %v350
          %v1923 = vpop.permute.xlu0 %1922
          %1924 = vset.pattern.permute.xlu0 16
          %1925 = vperm.xlu0 %1924, %v351
          %v1926 = vpop.permute.xlu0 %1925
          %1927 = vset.pattern.permute.xlu0 16
          %1928 = vperm.xlu0 %1927, %v352
          %v1929 = vpop.permute.xlu0 %1928
          %1930 = vset.pattern.permute.xlu0 16
          %1931 = vperm.xlu0 %1930, %v353
          %v1932 = vpop.permute.xlu0 %1931
          %1933 = vset.pattern.permute.xlu0 16
          %1934 = vperm.xlu0 %1933, %v354
          %v1935 = vpop.permute.xlu0 %1934
          %1936 = vset.pattern.permute.xlu0 16
          %1937 = vperm.xlu0 %1936, %v355
          %v1938 = vpop.permute.xlu0 %1937
          %1939 = vset.pattern.permute.xlu0 16
          %1940 = vperm.xlu0 %1939, %v356
          %v1941 = vpop.permute.xlu0 %1940
          %vm1942 = vcmp.eq.s32.totalorder %v1896, %v332
          %vm1943 = vcmp.eq.s32.totalorder %v1899, %v332
          %vm1944 = vcmp.eq.s32.totalorder %v1902, %v332
          %vm1945 = vcmp.eq.s32.totalorder %v1905, %v332
          %vm1946 = vcmp.eq.s32.totalorder %v1908, %v332
          %vm1947 = vcmp.eq.s32.totalorder %v1911, %v332
          %vm1948 = vcmp.eq.s32.totalorder %v1914, %v332
          %vm1949 = vcmp.eq.s32.totalorder %v1917, %v332
          %vm1950 = vcmp.eq.s32.totalorder %v1920, %v332
          %vm1951 = vcmp.eq.s32.totalorder %v1923, %v332
          %vm1952 = vcmp.eq.s32.totalorder %v1926, %v332
          %vm1953 = vcmp.eq.s32.totalorder %v1929, %v332
          %vm1954 = vcmp.eq.s32.totalorder %v1932, %v332
          %vm1955 = vcmp.eq.s32.totalorder %v1935, %v332
          %vm1956 = vcmp.eq.s32.totalorder %v1938, %v332
          %vm1957 = vcmp.eq.s32.totalorder %v1941, %v332
          %v1958 = vsel %vm1942, 1.0, 0.0
          %v1959 = vsel %vm1943, 1.0, 0.0
          %v1960 = vsel %vm1944, 1.0, 0.0
          %v1961 = vsel %vm1945, 1.0, 0.0
          %v1962 = vsel %vm1946, 1.0, 0.0
          %v1963 = vsel %vm1947, 1.0, 0.0
          %v1964 = vsel %vm1948, 1.0, 0.0
          %v1965 = vsel %vm1949, 1.0, 0.0
          %v1966 = vsel %vm1950, 1.0, 0.0
          %v1967 = vsel %vm1951, 1.0, 0.0
          %v1968 = vsel %vm1952, 1.0, 0.0
          %v1969 = vsel %vm1953, 1.0, 0.0
          %v1970 = vsel %vm1954, 1.0, 0.0
          %v1971 = vsel %vm1955, 1.0, 0.0
          %v1972 = vsel %vm1956, 1.0, 0.0
          %v1973 = vsel %vm1957, 1.0, 0.0
          %1974 = vset.pattern.permute.xlu0 17
          %1975 = vperm.xlu0 %1974, %v341
          %v1976 = vpop.permute.xlu0 %1975
          %1977 = vset.pattern.permute.xlu0 17
          %1978 = vperm.xlu0 %1977, %v342
          %v1979 = vpop.permute.xlu0 %1978
          %1980 = vset.pattern.permute.xlu0 17
          %1981 = vperm.xlu0 %1980, %v343
          %v1982 = vpop.permute.xlu0 %1981
          %1983 = vset.pattern.permute.xlu0 17
          %1984 = vperm.xlu0 %1983, %v344
          %v1985 = vpop.permute.xlu0 %1984
          %1986 = vset.pattern.permute.xlu0 17
          %1987 = vperm.xlu0 %1986, %v345
          %v1988 = vpop.permute.xlu0 %1987
          %1989 = vset.pattern.permute.xlu0 17
          %1990 = vperm.xlu0 %1989, %v346
          %v1991 = vpop.permute.xlu0 %1990
          %1992 = vset.pattern.permute.xlu0 17
          %1993 = vperm.xlu0 %1992, %v347
          %v1994 = vpop.permute.xlu0 %1993
          %1995 = vset.pattern.permute.xlu0 17
          %1996 = vperm.xlu0 %1995, %v348
          %v1997 = vpop.permute.xlu0 %1996
          %1998 = vset.pattern.permute.xlu0 17
          %1999 = vperm.xlu0 %1998, %v349
          %v2000 = vpop.permute.xlu0 %1999
          %2001 = vset.pattern.permute.xlu0 17
          %2002 = vperm.xlu0 %2001, %v350
          %v2003 = vpop.permute.xlu0 %2002
          %2004 = vset.pattern.permute.xlu0 17
          %2005 = vperm.xlu0 %2004, %v351
          %v2006 = vpop.permute.xlu0 %2005
          %2007 = vset.pattern.permute.xlu0 17
          %2008 = vperm.xlu0 %2007, %v352
          %v2009 = vpop.permute.xlu0 %2008
          %2010 = vset.pattern.permute.xlu0 17
          %2011 = vperm.xlu0 %2010, %v353
          %v2012 = vpop.permute.xlu0 %2011
          %2013 = vset.pattern.permute.xlu0 17
          %2014 = vperm.xlu0 %2013, %v354
          %v2015 = vpop.permute.xlu0 %2014
          %2016 = vset.pattern.permute.xlu0 17
          %2017 = vperm.xlu0 %2016, %v355
          %v2018 = vpop.permute.xlu0 %2017
          %2019 = vset.pattern.permute.xlu0 17
          %2020 = vperm.xlu0 %2019, %v356
          %v2021 = vpop.permute.xlu0 %2020
          %vm2022 = vcmp.eq.s32.totalorder %v1976, %v332
          %vm2023 = vcmp.eq.s32.totalorder %v1979, %v332
          %vm2024 = vcmp.eq.s32.totalorder %v1982, %v332
          %vm2025 = vcmp.eq.s32.totalorder %v1985, %v332
          %vm2026 = vcmp.eq.s32.totalorder %v1988, %v332
          %vm2027 = vcmp.eq.s32.totalorder %v1991, %v332
          %vm2028 = vcmp.eq.s32.totalorder %v1994, %v332
          %vm2029 = vcmp.eq.s32.totalorder %v1997, %v332
          %vm2030 = vcmp.eq.s32.totalorder %v2000, %v332
          %vm2031 = vcmp.eq.s32.totalorder %v2003, %v332
          %vm2032 = vcmp.eq.s32.totalorder %v2006, %v332
          %vm2033 = vcmp.eq.s32.totalorder %v2009, %v332
          %vm2034 = vcmp.eq.s32.totalorder %v2012, %v332
          %vm2035 = vcmp.eq.s32.totalorder %v2015, %v332
          %vm2036 = vcmp.eq.s32.totalorder %v2018, %v332
          %vm2037 = vcmp.eq.s32.totalorder %v2021, %v332
          %v2038 = vsel %vm2022, 1.0, 0.0
          %v2039 = vsel %vm2023, 1.0, 0.0
          %v2040 = vsel %vm2024, 1.0, 0.0
          %v2041 = vsel %vm2025, 1.0, 0.0
          %v2042 = vsel %vm2026, 1.0, 0.0
          %v2043 = vsel %vm2027, 1.0, 0.0
          %v2044 = vsel %vm2028, 1.0, 0.0
          %v2045 = vsel %vm2029, 1.0, 0.0
          %v2046 = vsel %vm2030, 1.0, 0.0
          %v2047 = vsel %vm2031, 1.0, 0.0
          %v2048 = vsel %vm2032, 1.0, 0.0
          %v2049 = vsel %vm2033, 1.0, 0.0
          %v2050 = vsel %vm2034, 1.0, 0.0
          %v2051 = vsel %vm2035, 1.0, 0.0
          %v2052 = vsel %vm2036, 1.0, 0.0
          %v2053 = vsel %vm2037, 1.0, 0.0
          %v2054 = vadd.f32 %v1958, %v2038
          %v2055 = vadd.f32 %v1959, %v2039
          %v2056 = vadd.f32 %v1960, %v2040
          %v2057 = vadd.f32 %v1961, %v2041
          %v2058 = vadd.f32 %v1962, %v2042
          %v2059 = vadd.f32 %v1963, %v2043
          %v2060 = vadd.f32 %v1964, %v2044
          %v2061 = vadd.f32 %v1965, %v2045
          %v2062 = vadd.f32 %v1966, %v2046
          %v2063 = vadd.f32 %v1967, %v2047
          %v2064 = vadd.f32 %v1968, %v2048
          %v2065 = vadd.f32 %v1969, %v2049
          %v2066 = vadd.f32 %v1970, %v2050
          %v2067 = vadd.f32 %v1971, %v2051
          %v2068 = vadd.f32 %v1972, %v2052
          %v2069 = vadd.f32 %v1973, %v2053
          %2070 = vset.pattern.permute.xlu0 18
          %2071 = vperm.xlu0 %2070, %v341
          %v2072 = vpop.permute.xlu0 %2071
          %2073 = vset.pattern.permute.xlu0 18
          %2074 = vperm.xlu0 %2073, %v342
          %v2075 = vpop.permute.xlu0 %2074
          %2076 = vset.pattern.permute.xlu0 18
          %2077 = vperm.xlu0 %2076, %v343
          %v2078 = vpop.permute.xlu0 %2077
          %2079 = vset.pattern.permute.xlu0 18
          %2080 = vperm.xlu0 %2079, %v344
          %v2081 = vpop.permute.xlu0 %2080
          %2082 = vset.pattern.permute.xlu0 18
          %2083 = vperm.xlu0 %2082, %v345
          %v2084 = vpop.permute.xlu0 %2083
          %2085 = vset.pattern.permute.xlu0 18
          %2086 = vperm.xlu0 %2085, %v346
          %v2087 = vpop.permute.xlu0 %2086
          %2088 = vset.pattern.permute.xlu0 18
          %2089 = vperm.xlu0 %2088, %v347
          %v2090 = vpop.permute.xlu0 %2089
          %2091 = vset.pattern.permute.xlu0 18
          %2092 = vperm.xlu0 %2091, %v348
          %v2093 = vpop.permute.xlu0 %2092
          %2094 = vset.pattern.permute.xlu0 18
          %2095 = vperm.xlu0 %2094, %v349
          %v2096 = vpop.permute.xlu0 %2095
          %2097 = vset.pattern.permute.xlu0 18
          %2098 = vperm.xlu0 %2097, %v350
          %v2099 = vpop.permute.xlu0 %2098
          %2100 = vset.pattern.permute.xlu0 18
          %2101 = vperm.xlu0 %2100, %v351
          %v2102 = vpop.permute.xlu0 %2101
          %2103 = vset.pattern.permute.xlu0 18
          %2104 = vperm.xlu0 %2103, %v352
          %v2105 = vpop.permute.xlu0 %2104
          %2106 = vset.pattern.permute.xlu0 18
          %2107 = vperm.xlu0 %2106, %v353
          %v2108 = vpop.permute.xlu0 %2107
          %2109 = vset.pattern.permute.xlu0 18
          %2110 = vperm.xlu0 %2109, %v354
          %v2111 = vpop.permute.xlu0 %2110
          %2112 = vset.pattern.permute.xlu0 18
          %2113 = vperm.xlu0 %2112, %v355
          %v2114 = vpop.permute.xlu0 %2113
          %2115 = vset.pattern.permute.xlu0 18
          %2116 = vperm.xlu0 %2115, %v356
          %v2117 = vpop.permute.xlu0 %2116
          %vm2118 = vcmp.eq.s32.totalorder %v2072, %v332
          %vm2119 = vcmp.eq.s32.totalorder %v2075, %v332
          %vm2120 = vcmp.eq.s32.totalorder %v2078, %v332
          %vm2121 = vcmp.eq.s32.totalorder %v2081, %v332
          %vm2122 = vcmp.eq.s32.totalorder %v2084, %v332
          %vm2123 = vcmp.eq.s32.totalorder %v2087, %v332
          %vm2124 = vcmp.eq.s32.totalorder %v2090, %v332
          %vm2125 = vcmp.eq.s32.totalorder %v2093, %v332
          %vm2126 = vcmp.eq.s32.totalorder %v2096, %v332
          %vm2127 = vcmp.eq.s32.totalorder %v2099, %v332
          %vm2128 = vcmp.eq.s32.totalorder %v2102, %v332
          %vm2129 = vcmp.eq.s32.totalorder %v2105, %v332
          %vm2130 = vcmp.eq.s32.totalorder %v2108, %v332
          %vm2131 = vcmp.eq.s32.totalorder %v2111, %v332
          %vm2132 = vcmp.eq.s32.totalorder %v2114, %v332
          %vm2133 = vcmp.eq.s32.totalorder %v2117, %v332
          %v2134 = vsel %vm2118, 1.0, 0.0
          %v2135 = vsel %vm2119, 1.0, 0.0
          %v2136 = vsel %vm2120, 1.0, 0.0
          %v2137 = vsel %vm2121, 1.0, 0.0
          %v2138 = vsel %vm2122, 1.0, 0.0
          %v2139 = vsel %vm2123, 1.0, 0.0
          %v2140 = vsel %vm2124, 1.0, 0.0
          %v2141 = vsel %vm2125, 1.0, 0.0
          %v2142 = vsel %vm2126, 1.0, 0.0
          %v2143 = vsel %vm2127, 1.0, 0.0
          %v2144 = vsel %vm2128, 1.0, 0.0
          %v2145 = vsel %vm2129, 1.0, 0.0
          %v2146 = vsel %vm2130, 1.0, 0.0
          %v2147 = vsel %vm2131, 1.0, 0.0
          %v2148 = vsel %vm2132, 1.0, 0.0
          %v2149 = vsel %vm2133, 1.0, 0.0
          %v2150 = vadd.f32 %v2054, %v2134
          %v2151 = vadd.f32 %v2055, %v2135
          %v2152 = vadd.f32 %v2056, %v2136
          %v2153 = vadd.f32 %v2057, %v2137
          %v2154 = vadd.f32 %v2058, %v2138
          %v2155 = vadd.f32 %v2059, %v2139
          %v2156 = vadd.f32 %v2060, %v2140
          %v2157 = vadd.f32 %v2061, %v2141
          %v2158 = vadd.f32 %v2062, %v2142
          %v2159 = vadd.f32 %v2063, %v2143
          %v2160 = vadd.f32 %v2064, %v2144
          %v2161 = vadd.f32 %v2065, %v2145
          %v2162 = vadd.f32 %v2066, %v2146
          %v2163 = vadd.f32 %v2067, %v2147
          %v2164 = vadd.f32 %v2068, %v2148
          %v2165 = vadd.f32 %v2069, %v2149
          %2166 = vset.pattern.permute.xlu0 19
          %2167 = vperm.xlu0 %2166, %v341
          %v2168 = vpop.permute.xlu0 %2167
          %2169 = vset.pattern.permute.xlu0 19
          %2170 = vperm.xlu0 %2169, %v342
          %v2171 = vpop.permute.xlu0 %2170
          %2172 = vset.pattern.permute.xlu0 19
          %2173 = vperm.xlu0 %2172, %v343
          %v2174 = vpop.permute.xlu0 %2173
          %2175 = vset.pattern.permute.xlu0 19
          %2176 = vperm.xlu0 %2175, %v344
          %v2177 = vpop.permute.xlu0 %2176
          %2178 = vset.pattern.permute.xlu0 19
          %2179 = vperm.xlu0 %2178, %v345
          %v2180 = vpop.permute.xlu0 %2179
          %2181 = vset.pattern.permute.xlu0 19
          %2182 = vperm.xlu0 %2181, %v346
          %v2183 = vpop.permute.xlu0 %2182
          %2184 = vset.pattern.permute.xlu0 19
          %2185 = vperm.xlu0 %2184, %v347
          %v2186 = vpop.permute.xlu0 %2185
          %2187 = vset.pattern.permute.xlu0 19
          %2188 = vperm.xlu0 %2187, %v348
          %v2189 = vpop.permute.xlu0 %2188
          %2190 = vset.pattern.permute.xlu0 19
          %2191 = vperm.xlu0 %2190, %v349
          %v2192 = vpop.permute.xlu0 %2191
          %2193 = vset.pattern.permute.xlu0 19
          %2194 = vperm.xlu0 %2193, %v350
          %v2195 = vpop.permute.xlu0 %2194
          %2196 = vset.pattern.permute.xlu0 19
          %2197 = vperm.xlu0 %2196, %v351
          %v2198 = vpop.permute.xlu0 %2197
          %2199 = vset.pattern.permute.xlu0 19
          %2200 = vperm.xlu0 %2199, %v352
          %v2201 = vpop.permute.xlu0 %2200
          %2202 = vset.pattern.permute.xlu0 19
          %2203 = vperm.xlu0 %2202, %v353
          %v2204 = vpop.permute.xlu0 %2203
          %2205 = vset.pattern.permute.xlu0 19
          %2206 = vperm.xlu0 %2205, %v354
          %v2207 = vpop.permute.xlu0 %2206
          %2208 = vset.pattern.permute.xlu0 19
          %2209 = vperm.xlu0 %2208, %v355
          %v2210 = vpop.permute.xlu0 %2209
          %2211 = vset.pattern.permute.xlu0 19
          %2212 = vperm.xlu0 %2211, %v356
          %v2213 = vpop.permute.xlu0 %2212
          %vm2214 = vcmp.eq.s32.totalorder %v2168, %v332
          %vm2215 = vcmp.eq.s32.totalorder %v2171, %v332
          %vm2216 = vcmp.eq.s32.totalorder %v2174, %v332
          %vm2217 = vcmp.eq.s32.totalorder %v2177, %v332
          %vm2218 = vcmp.eq.s32.totalorder %v2180, %v332
          %vm2219 = vcmp.eq.s32.totalorder %v2183, %v332
          %vm2220 = vcmp.eq.s32.totalorder %v2186, %v332
          %vm2221 = vcmp.eq.s32.totalorder %v2189, %v332
          %vm2222 = vcmp.eq.s32.totalorder %v2192, %v332
          %vm2223 = vcmp.eq.s32.totalorder %v2195, %v332
          %vm2224 = vcmp.eq.s32.totalorder %v2198, %v332
          %vm2225 = vcmp.eq.s32.totalorder %v2201, %v332
          %vm2226 = vcmp.eq.s32.totalorder %v2204, %v332
          %vm2227 = vcmp.eq.s32.totalorder %v2207, %v332
          %vm2228 = vcmp.eq.s32.totalorder %v2210, %v332
          %vm2229 = vcmp.eq.s32.totalorder %v2213, %v332
          %v2230 = vsel %vm2214, 1.0, 0.0
          %v2231 = vsel %vm2215, 1.0, 0.0
          %v2232 = vsel %vm2216, 1.0, 0.0
          %v2233 = vsel %vm2217, 1.0, 0.0
          %v2234 = vsel %vm2218, 1.0, 0.0
          %v2235 = vsel %vm2219, 1.0, 0.0
          %v2236 = vsel %vm2220, 1.0, 0.0
          %v2237 = vsel %vm2221, 1.0, 0.0
          %v2238 = vsel %vm2222, 1.0, 0.0
          %v2239 = vsel %vm2223, 1.0, 0.0
          %v2240 = vsel %vm2224, 1.0, 0.0
          %v2241 = vsel %vm2225, 1.0, 0.0
          %v2242 = vsel %vm2226, 1.0, 0.0
          %v2243 = vsel %vm2227, 1.0, 0.0
          %v2244 = vsel %vm2228, 1.0, 0.0
          %v2245 = vsel %vm2229, 1.0, 0.0
          %v2246 = vadd.f32 %v2150, %v2230
          %v2247 = vadd.f32 %v2151, %v2231
          %v2248 = vadd.f32 %v2152, %v2232
          %v2249 = vadd.f32 %v2153, %v2233
          %v2250 = vadd.f32 %v2154, %v2234
          %v2251 = vadd.f32 %v2155, %v2235
          %v2252 = vadd.f32 %v2156, %v2236
          %v2253 = vadd.f32 %v2157, %v2237
          %v2254 = vadd.f32 %v2158, %v2238
          %v2255 = vadd.f32 %v2159, %v2239
          %v2256 = vadd.f32 %v2160, %v2240
          %v2257 = vadd.f32 %v2161, %v2241
          %v2258 = vadd.f32 %v2162, %v2242
          %v2259 = vadd.f32 %v2163, %v2243
          %v2260 = vadd.f32 %v2164, %v2244
          %v2261 = vadd.f32 %v2165, %v2245
          %v2262 = vadd.f32 %v1878, %v2246
          %v2263 = vadd.f32 %v1879, %v2247
          %v2264 = vadd.f32 %v1880, %v2248
          %v2265 = vadd.f32 %v1881, %v2249
          %v2266 = vadd.f32 %v1882, %v2250
          %v2267 = vadd.f32 %v1883, %v2251
          %v2268 = vadd.f32 %v1884, %v2252
          %v2269 = vadd.f32 %v1885, %v2253
          %v2270 = vadd.f32 %v1886, %v2254
          %v2271 = vadd.f32 %v1887, %v2255
          %v2272 = vadd.f32 %v1888, %v2256
          %v2273 = vadd.f32 %v1889, %v2257
          %v2274 = vadd.f32 %v1890, %v2258
          %v2275 = vadd.f32 %v1891, %v2259
          %v2276 = vadd.f32 %v1892, %v2260
          %v2277 = vadd.f32 %v1893, %v2261
          %2278 = vset.pattern.permute.xlu0 0
          %2279 = vperm.xlu0 %2278, %v358
          %v2280 = vpop.permute.xlu0 %2279
          %2281 = vset.pattern.permute.xlu0 0
          %2282 = vperm.xlu0 %2281, %v359
          %v2283 = vpop.permute.xlu0 %2282
          %2284 = vset.pattern.permute.xlu0 0
          %2285 = vperm.xlu0 %2284, %v360
          %v2286 = vpop.permute.xlu0 %2285
          %2287 = vset.pattern.permute.xlu0 0
          %2288 = vperm.xlu0 %2287, %v361
          %v2289 = vpop.permute.xlu0 %2288
          %2290 = vset.pattern.permute.xlu0 0
          %2291 = vperm.xlu0 %2290, %v362
          %v2292 = vpop.permute.xlu0 %2291
          %2293 = vset.pattern.permute.xlu0 0
          %2294 = vperm.xlu0 %2293, %v363
          %v2295 = vpop.permute.xlu0 %2294
          %2296 = vset.pattern.permute.xlu0 0
          %2297 = vperm.xlu0 %2296, %v364
          %v2298 = vpop.permute.xlu0 %2297
          %2299 = vset.pattern.permute.xlu0 0
          %2300 = vperm.xlu0 %2299, %v365
          %v2301 = vpop.permute.xlu0 %2300
          %2302 = vset.pattern.permute.xlu0 0
          %2303 = vperm.xlu0 %2302, %v366
          %v2304 = vpop.permute.xlu0 %2303
          %2305 = vset.pattern.permute.xlu0 0
          %2306 = vperm.xlu0 %2305, %v367
          %v2307 = vpop.permute.xlu0 %2306
          %2308 = vset.pattern.permute.xlu0 0
          %2309 = vperm.xlu0 %2308, %v368
          %v2310 = vpop.permute.xlu0 %2309
          %2311 = vset.pattern.permute.xlu0 0
          %2312 = vperm.xlu0 %2311, %v369
          %v2313 = vpop.permute.xlu0 %2312
          %2314 = vset.pattern.permute.xlu0 0
          %2315 = vperm.xlu0 %2314, %v370
          %v2316 = vpop.permute.xlu0 %2315
          %2317 = vset.pattern.permute.xlu0 0
          %2318 = vperm.xlu0 %2317, %v371
          %v2319 = vpop.permute.xlu0 %2318
          %2320 = vset.pattern.permute.xlu0 0
          %2321 = vperm.xlu0 %2320, %v372
          %v2322 = vpop.permute.xlu0 %2321
          %2323 = vset.pattern.permute.xlu0 0
          %2324 = vperm.xlu0 %2323, %v373
          %v2325 = vpop.permute.xlu0 %2324
          %vm2326 = vcmp.eq.s32.totalorder %v2280, %v332
          %vm2327 = vcmp.eq.s32.totalorder %v2283, %v332
          %vm2328 = vcmp.eq.s32.totalorder %v2286, %v332
          %vm2329 = vcmp.eq.s32.totalorder %v2289, %v332
          %vm2330 = vcmp.eq.s32.totalorder %v2292, %v332
          %vm2331 = vcmp.eq.s32.totalorder %v2295, %v332
          %vm2332 = vcmp.eq.s32.totalorder %v2298, %v332
          %vm2333 = vcmp.eq.s32.totalorder %v2301, %v332
          %vm2334 = vcmp.eq.s32.totalorder %v2304, %v332
          %vm2335 = vcmp.eq.s32.totalorder %v2307, %v332
          %vm2336 = vcmp.eq.s32.totalorder %v2310, %v332
          %vm2337 = vcmp.eq.s32.totalorder %v2313, %v332
          %vm2338 = vcmp.eq.s32.totalorder %v2316, %v332
          %vm2339 = vcmp.eq.s32.totalorder %v2319, %v332
          %vm2340 = vcmp.eq.s32.totalorder %v2322, %v332
          %vm2341 = vcmp.eq.s32.totalorder %v2325, %v332
          %v2342 = vsel %vm2326, 1.0, 0.0
          %v2343 = vsel %vm2327, 1.0, 0.0
          %v2344 = vsel %vm2328, 1.0, 0.0
          %v2345 = vsel %vm2329, 1.0, 0.0
          %v2346 = vsel %vm2330, 1.0, 0.0
          %v2347 = vsel %vm2331, 1.0, 0.0
          %v2348 = vsel %vm2332, 1.0, 0.0
          %v2349 = vsel %vm2333, 1.0, 0.0
          %v2350 = vsel %vm2334, 1.0, 0.0
          %v2351 = vsel %vm2335, 1.0, 0.0
          %v2352 = vsel %vm2336, 1.0, 0.0
          %v2353 = vsel %vm2337, 1.0, 0.0
          %v2354 = vsel %vm2338, 1.0, 0.0
          %v2355 = vsel %vm2339, 1.0, 0.0
          %v2356 = vsel %vm2340, 1.0, 0.0
          %v2357 = vsel %vm2341, 1.0, 0.0
          %2358 = vset.pattern.permute.xlu0 1
          %2359 = vperm.xlu0 %2358, %v358
          %v2360 = vpop.permute.xlu0 %2359
          %2361 = vset.pattern.permute.xlu0 1
          %2362 = vperm.xlu0 %2361, %v359
          %v2363 = vpop.permute.xlu0 %2362
          %2364 = vset.pattern.permute.xlu0 1
          %2365 = vperm.xlu0 %2364, %v360
          %v2366 = vpop.permute.xlu0 %2365
          %2367 = vset.pattern.permute.xlu0 1
          %2368 = vperm.xlu0 %2367, %v361
          %v2369 = vpop.permute.xlu0 %2368
          %2370 = vset.pattern.permute.xlu0 1
          %2371 = vperm.xlu0 %2370, %v362
          %v2372 = vpop.permute.xlu0 %2371
          %2373 = vset.pattern.permute.xlu0 1
          %2374 = vperm.xlu0 %2373, %v363
          %v2375 = vpop.permute.xlu0 %2374
          %2376 = vset.pattern.permute.xlu0 1
          %2377 = vperm.xlu0 %2376, %v364
          %v2378 = vpop.permute.xlu0 %2377
          %2379 = vset.pattern.permute.xlu0 1
          %2380 = vperm.xlu0 %2379, %v365
          %v2381 = vpop.permute.xlu0 %2380
          %2382 = vset.pattern.permute.xlu0 1
          %2383 = vperm.xlu0 %2382, %v366
          %v2384 = vpop.permute.xlu0 %2383
          %2385 = vset.pattern.permute.xlu0 1
          %2386 = vperm.xlu0 %2385, %v367
          %v2387 = vpop.permute.xlu0 %2386
          %2388 = vset.pattern.permute.xlu0 1
          %2389 = vperm.xlu0 %2388, %v368
          %v2390 = vpop.permute.xlu0 %2389
          %2391 = vset.pattern.permute.xlu0 1
          %2392 = vperm.xlu0 %2391, %v369
          %v2393 = vpop.permute.xlu0 %2392
          %2394 = vset.pattern.permute.xlu0 1
          %2395 = vperm.xlu0 %2394, %v370
          %v2396 = vpop.permute.xlu0 %2395
          %2397 = vset.pattern.permute.xlu0 1
          %2398 = vperm.xlu0 %2397, %v371
          %v2399 = vpop.permute.xlu0 %2398
          %2400 = vset.pattern.permute.xlu0 1
          %2401 = vperm.xlu0 %2400, %v372
          %v2402 = vpop.permute.xlu0 %2401
          %2403 = vset.pattern.permute.xlu0 1
          %2404 = vperm.xlu0 %2403, %v373
          %v2405 = vpop.permute.xlu0 %2404
          %vm2406 = vcmp.eq.s32.totalorder %v2360, %v332
          %vm2407 = vcmp.eq.s32.totalorder %v2363, %v332
          %vm2408 = vcmp.eq.s32.totalorder %v2366, %v332
          %vm2409 = vcmp.eq.s32.totalorder %v2369, %v332
          %vm2410 = vcmp.eq.s32.totalorder %v2372, %v332
          %vm2411 = vcmp.eq.s32.totalorder %v2375, %v332
          %vm2412 = vcmp.eq.s32.totalorder %v2378, %v332
          %vm2413 = vcmp.eq.s32.totalorder %v2381, %v332
          %vm2414 = vcmp.eq.s32.totalorder %v2384, %v332
          %vm2415 = vcmp.eq.s32.totalorder %v2387, %v332
          %vm2416 = vcmp.eq.s32.totalorder %v2390, %v332
          %vm2417 = vcmp.eq.s32.totalorder %v2393, %v332
          %vm2418 = vcmp.eq.s32.totalorder %v2396, %v332
          %vm2419 = vcmp.eq.s32.totalorder %v2399, %v332
          %vm2420 = vcmp.eq.s32.totalorder %v2402, %v332
          %vm2421 = vcmp.eq.s32.totalorder %v2405, %v332
          %v2422 = vsel %vm2406, 1.0, 0.0
          %v2423 = vsel %vm2407, 1.0, 0.0
          %v2424 = vsel %vm2408, 1.0, 0.0
          %v2425 = vsel %vm2409, 1.0, 0.0
          %v2426 = vsel %vm2410, 1.0, 0.0
          %v2427 = vsel %vm2411, 1.0, 0.0
          %v2428 = vsel %vm2412, 1.0, 0.0
          %v2429 = vsel %vm2413, 1.0, 0.0
          %v2430 = vsel %vm2414, 1.0, 0.0
          %v2431 = vsel %vm2415, 1.0, 0.0
          %v2432 = vsel %vm2416, 1.0, 0.0
          %v2433 = vsel %vm2417, 1.0, 0.0
          %v2434 = vsel %vm2418, 1.0, 0.0
          %v2435 = vsel %vm2419, 1.0, 0.0
          %v2436 = vsel %vm2420, 1.0, 0.0
          %v2437 = vsel %vm2421, 1.0, 0.0
          %v2438 = vadd.f32 %v2342, %v2422
          %v2439 = vadd.f32 %v2343, %v2423
          %v2440 = vadd.f32 %v2344, %v2424
          %v2441 = vadd.f32 %v2345, %v2425
          %v2442 = vadd.f32 %v2346, %v2426
          %v2443 = vadd.f32 %v2347, %v2427
          %v2444 = vadd.f32 %v2348, %v2428
          %v2445 = vadd.f32 %v2349, %v2429
          %v2446 = vadd.f32 %v2350, %v2430
          %v2447 = vadd.f32 %v2351, %v2431
          %v2448 = vadd.f32 %v2352, %v2432
          %v2449 = vadd.f32 %v2353, %v2433
          %v2450 = vadd.f32 %v2354, %v2434
          %v2451 = vadd.f32 %v2355, %v2435
          %v2452 = vadd.f32 %v2356, %v2436
          %v2453 = vadd.f32 %v2357, %v2437
          %2454 = vset.pattern.permute.xlu0 2
          %2455 = vperm.xlu0 %2454, %v358
          %v2456 = vpop.permute.xlu0 %2455
          %2457 = vset.pattern.permute.xlu0 2
          %2458 = vperm.xlu0 %2457, %v359
          %v2459 = vpop.permute.xlu0 %2458
          %2460 = vset.pattern.permute.xlu0 2
          %2461 = vperm.xlu0 %2460, %v360
          %v2462 = vpop.permute.xlu0 %2461
          %2463 = vset.pattern.permute.xlu0 2
          %2464 = vperm.xlu0 %2463, %v361
          %v2465 = vpop.permute.xlu0 %2464
          %2466 = vset.pattern.permute.xlu0 2
          %2467 = vperm.xlu0 %2466, %v362
          %v2468 = vpop.permute.xlu0 %2467
          %2469 = vset.pattern.permute.xlu0 2
          %2470 = vperm.xlu0 %2469, %v363
          %v2471 = vpop.permute.xlu0 %2470
          %2472 = vset.pattern.permute.xlu0 2
          %2473 = vperm.xlu0 %2472, %v364
          %v2474 = vpop.permute.xlu0 %2473
          %2475 = vset.pattern.permute.xlu0 2
          %2476 = vperm.xlu0 %2475, %v365
          %v2477 = vpop.permute.xlu0 %2476
          %2478 = vset.pattern.permute.xlu0 2
          %2479 = vperm.xlu0 %2478, %v366
          %v2480 = vpop.permute.xlu0 %2479
          %2481 = vset.pattern.permute.xlu0 2
          %2482 = vperm.xlu0 %2481, %v367
          %v2483 = vpop.permute.xlu0 %2482
          %2484 = vset.pattern.permute.xlu0 2
          %2485 = vperm.xlu0 %2484, %v368
          %v2486 = vpop.permute.xlu0 %2485
          %2487 = vset.pattern.permute.xlu0 2
          %2488 = vperm.xlu0 %2487, %v369
          %v2489 = vpop.permute.xlu0 %2488
          %2490 = vset.pattern.permute.xlu0 2
          %2491 = vperm.xlu0 %2490, %v370
          %v2492 = vpop.permute.xlu0 %2491
          %2493 = vset.pattern.permute.xlu0 2
          %2494 = vperm.xlu0 %2493, %v371
          %v2495 = vpop.permute.xlu0 %2494
          %2496 = vset.pattern.permute.xlu0 2
          %2497 = vperm.xlu0 %2496, %v372
          %v2498 = vpop.permute.xlu0 %2497
          %2499 = vset.pattern.permute.xlu0 2
          %2500 = vperm.xlu0 %2499, %v373
          %v2501 = vpop.permute.xlu0 %2500
          %vm2502 = vcmp.eq.s32.totalorder %v2456, %v332
          %vm2503 = vcmp.eq.s32.totalorder %v2459, %v332
          %vm2504 = vcmp.eq.s32.totalorder %v2462, %v332
          %vm2505 = vcmp.eq.s32.totalorder %v2465, %v332
          %vm2506 = vcmp.eq.s32.totalorder %v2468, %v332
          %vm2507 = vcmp.eq.s32.totalorder %v2471, %v332
          %vm2508 = vcmp.eq.s32.totalorder %v2474, %v332
          %vm2509 = vcmp.eq.s32.totalorder %v2477, %v332
          %vm2510 = vcmp.eq.s32.totalorder %v2480, %v332
          %vm2511 = vcmp.eq.s32.totalorder %v2483, %v332
          %vm2512 = vcmp.eq.s32.totalorder %v2486, %v332
          %vm2513 = vcmp.eq.s32.totalorder %v2489, %v332
          %vm2514 = vcmp.eq.s32.totalorder %v2492, %v332
          %vm2515 = vcmp.eq.s32.totalorder %v2495, %v332
          %vm2516 = vcmp.eq.s32.totalorder %v2498, %v332
          %vm2517 = vcmp.eq.s32.totalorder %v2501, %v332
          %v2518 = vsel %vm2502, 1.0, 0.0
          %v2519 = vsel %vm2503, 1.0, 0.0
          %v2520 = vsel %vm2504, 1.0, 0.0
          %v2521 = vsel %vm2505, 1.0, 0.0
          %v2522 = vsel %vm2506, 1.0, 0.0
          %v2523 = vsel %vm2507, 1.0, 0.0
          %v2524 = vsel %vm2508, 1.0, 0.0
          %v2525 = vsel %vm2509, 1.0, 0.0
          %v2526 = vsel %vm2510, 1.0, 0.0
          %v2527 = vsel %vm2511, 1.0, 0.0
          %v2528 = vsel %vm2512, 1.0, 0.0
          %v2529 = vsel %vm2513, 1.0, 0.0
          %v2530 = vsel %vm2514, 1.0, 0.0
          %v2531 = vsel %vm2515, 1.0, 0.0
          %v2532 = vsel %vm2516, 1.0, 0.0
          %v2533 = vsel %vm2517, 1.0, 0.0
          %v2534 = vadd.f32 %v2438, %v2518
          %v2535 = vadd.f32 %v2439, %v2519
          %v2536 = vadd.f32 %v2440, %v2520
          %v2537 = vadd.f32 %v2441, %v2521
          %v2538 = vadd.f32 %v2442, %v2522
          %v2539 = vadd.f32 %v2443, %v2523
          %v2540 = vadd.f32 %v2444, %v2524
          %v2541 = vadd.f32 %v2445, %v2525
          %v2542 = vadd.f32 %v2446, %v2526
          %v2543 = vadd.f32 %v2447, %v2527
          %v2544 = vadd.f32 %v2448, %v2528
          %v2545 = vadd.f32 %v2449, %v2529
          %v2546 = vadd.f32 %v2450, %v2530
          %v2547 = vadd.f32 %v2451, %v2531
          %v2548 = vadd.f32 %v2452, %v2532
          %v2549 = vadd.f32 %v2453, %v2533
          %2550 = vset.pattern.permute.xlu0 3
          %2551 = vperm.xlu0 %2550, %v358
          %v2552 = vpop.permute.xlu0 %2551
          %2553 = vset.pattern.permute.xlu0 3
          %2554 = vperm.xlu0 %2553, %v359
          %v2555 = vpop.permute.xlu0 %2554
          %2556 = vset.pattern.permute.xlu0 3
          %2557 = vperm.xlu0 %2556, %v360
          %v2558 = vpop.permute.xlu0 %2557
          %2559 = vset.pattern.permute.xlu0 3
          %2560 = vperm.xlu0 %2559, %v361
          %v2561 = vpop.permute.xlu0 %2560
          %2562 = vset.pattern.permute.xlu0 3
          %2563 = vperm.xlu0 %2562, %v362
          %v2564 = vpop.permute.xlu0 %2563
          %2565 = vset.pattern.permute.xlu0 3
          %2566 = vperm.xlu0 %2565, %v363
          %v2567 = vpop.permute.xlu0 %2566
          %2568 = vset.pattern.permute.xlu0 3
          %2569 = vperm.xlu0 %2568, %v364
          %v2570 = vpop.permute.xlu0 %2569
          %2571 = vset.pattern.permute.xlu0 3
          %2572 = vperm.xlu0 %2571, %v365
          %v2573 = vpop.permute.xlu0 %2572
          %2574 = vset.pattern.permute.xlu0 3
          %2575 = vperm.xlu0 %2574, %v366
          %v2576 = vpop.permute.xlu0 %2575
          %2577 = vset.pattern.permute.xlu0 3
          %2578 = vperm.xlu0 %2577, %v367
          %v2579 = vpop.permute.xlu0 %2578
          %2580 = vset.pattern.permute.xlu0 3
          %2581 = vperm.xlu0 %2580, %v368
          %v2582 = vpop.permute.xlu0 %2581
          %2583 = vset.pattern.permute.xlu0 3
          %2584 = vperm.xlu0 %2583, %v369
          %v2585 = vpop.permute.xlu0 %2584
          %2586 = vset.pattern.permute.xlu0 3
          %2587 = vperm.xlu0 %2586, %v370
          %v2588 = vpop.permute.xlu0 %2587
          %2589 = vset.pattern.permute.xlu0 3
          %2590 = vperm.xlu0 %2589, %v371
          %v2591 = vpop.permute.xlu0 %2590
          %2592 = vset.pattern.permute.xlu0 3
          %2593 = vperm.xlu0 %2592, %v372
          %v2594 = vpop.permute.xlu0 %2593
          %2595 = vset.pattern.permute.xlu0 3
          %2596 = vperm.xlu0 %2595, %v373
          %v2597 = vpop.permute.xlu0 %2596
          %vm2598 = vcmp.eq.s32.totalorder %v2552, %v332
          %vm2599 = vcmp.eq.s32.totalorder %v2555, %v332
          %vm2600 = vcmp.eq.s32.totalorder %v2558, %v332
          %vm2601 = vcmp.eq.s32.totalorder %v2561, %v332
          %vm2602 = vcmp.eq.s32.totalorder %v2564, %v332
          %vm2603 = vcmp.eq.s32.totalorder %v2567, %v332
          %vm2604 = vcmp.eq.s32.totalorder %v2570, %v332
          %vm2605 = vcmp.eq.s32.totalorder %v2573, %v332
          %vm2606 = vcmp.eq.s32.totalorder %v2576, %v332
          %vm2607 = vcmp.eq.s32.totalorder %v2579, %v332
          %vm2608 = vcmp.eq.s32.totalorder %v2582, %v332
          %vm2609 = vcmp.eq.s32.totalorder %v2585, %v332
          %vm2610 = vcmp.eq.s32.totalorder %v2588, %v332
          %vm2611 = vcmp.eq.s32.totalorder %v2591, %v332
          %vm2612 = vcmp.eq.s32.totalorder %v2594, %v332
          %vm2613 = vcmp.eq.s32.totalorder %v2597, %v332
          %v2614 = vsel %vm2598, 1.0, 0.0
          %v2615 = vsel %vm2599, 1.0, 0.0
          %v2616 = vsel %vm2600, 1.0, 0.0
          %v2617 = vsel %vm2601, 1.0, 0.0
          %v2618 = vsel %vm2602, 1.0, 0.0
          %v2619 = vsel %vm2603, 1.0, 0.0
          %v2620 = vsel %vm2604, 1.0, 0.0
          %v2621 = vsel %vm2605, 1.0, 0.0
          %v2622 = vsel %vm2606, 1.0, 0.0
          %v2623 = vsel %vm2607, 1.0, 0.0
          %v2624 = vsel %vm2608, 1.0, 0.0
          %v2625 = vsel %vm2609, 1.0, 0.0
          %v2626 = vsel %vm2610, 1.0, 0.0
          %v2627 = vsel %vm2611, 1.0, 0.0
          %v2628 = vsel %vm2612, 1.0, 0.0
          %v2629 = vsel %vm2613, 1.0, 0.0
          %v2630 = vadd.f32 %v2534, %v2614
          %v2631 = vadd.f32 %v2535, %v2615
          %v2632 = vadd.f32 %v2536, %v2616
          %v2633 = vadd.f32 %v2537, %v2617
          %v2634 = vadd.f32 %v2538, %v2618
          %v2635 = vadd.f32 %v2539, %v2619
          %v2636 = vadd.f32 %v2540, %v2620
          %v2637 = vadd.f32 %v2541, %v2621
          %v2638 = vadd.f32 %v2542, %v2622
          %v2639 = vadd.f32 %v2543, %v2623
          %v2640 = vadd.f32 %v2544, %v2624
          %v2641 = vadd.f32 %v2545, %v2625
          %v2642 = vadd.f32 %v2546, %v2626
          %v2643 = vadd.f32 %v2547, %v2627
          %v2644 = vadd.f32 %v2548, %v2628
          %v2645 = vadd.f32 %v2549, %v2629
          %2646 = vset.pattern.permute.xlu0 4
          %2647 = vperm.xlu0 %2646, %v358
          %v2648 = vpop.permute.xlu0 %2647
          %2649 = vset.pattern.permute.xlu0 4
          %2650 = vperm.xlu0 %2649, %v359
          %v2651 = vpop.permute.xlu0 %2650
          %2652 = vset.pattern.permute.xlu0 4
          %2653 = vperm.xlu0 %2652, %v360
          %v2654 = vpop.permute.xlu0 %2653
          %2655 = vset.pattern.permute.xlu0 4
          %2656 = vperm.xlu0 %2655, %v361
          %v2657 = vpop.permute.xlu0 %2656
          %2658 = vset.pattern.permute.xlu0 4
          %2659 = vperm.xlu0 %2658, %v362
          %v2660 = vpop.permute.xlu0 %2659
          %2661 = vset.pattern.permute.xlu0 4
          %2662 = vperm.xlu0 %2661, %v363
          %v2663 = vpop.permute.xlu0 %2662
          %2664 = vset.pattern.permute.xlu0 4
          %2665 = vperm.xlu0 %2664, %v364
          %v2666 = vpop.permute.xlu0 %2665
          %2667 = vset.pattern.permute.xlu0 4
          %2668 = vperm.xlu0 %2667, %v365
          %v2669 = vpop.permute.xlu0 %2668
          %2670 = vset.pattern.permute.xlu0 4
          %2671 = vperm.xlu0 %2670, %v366
          %v2672 = vpop.permute.xlu0 %2671
          %2673 = vset.pattern.permute.xlu0 4
          %2674 = vperm.xlu0 %2673, %v367
          %v2675 = vpop.permute.xlu0 %2674
          %2676 = vset.pattern.permute.xlu0 4
          %2677 = vperm.xlu0 %2676, %v368
          %v2678 = vpop.permute.xlu0 %2677
          %2679 = vset.pattern.permute.xlu0 4
          %2680 = vperm.xlu0 %2679, %v369
          %v2681 = vpop.permute.xlu0 %2680
          %2682 = vset.pattern.permute.xlu0 4
          %2683 = vperm.xlu0 %2682, %v370
          %v2684 = vpop.permute.xlu0 %2683
          %2685 = vset.pattern.permute.xlu0 4
          %2686 = vperm.xlu0 %2685, %v371
          %v2687 = vpop.permute.xlu0 %2686
          %2688 = vset.pattern.permute.xlu0 4
          %2689 = vperm.xlu0 %2688, %v372
          %v2690 = vpop.permute.xlu0 %2689
          %2691 = vset.pattern.permute.xlu0 4
          %2692 = vperm.xlu0 %2691, %v373
          %v2693 = vpop.permute.xlu0 %2692
          %vm2694 = vcmp.eq.s32.totalorder %v2648, %v332
          %vm2695 = vcmp.eq.s32.totalorder %v2651, %v332
          %vm2696 = vcmp.eq.s32.totalorder %v2654, %v332
          %vm2697 = vcmp.eq.s32.totalorder %v2657, %v332
          %vm2698 = vcmp.eq.s32.totalorder %v2660, %v332
          %vm2699 = vcmp.eq.s32.totalorder %v2663, %v332
          %vm2700 = vcmp.eq.s32.totalorder %v2666, %v332
          %vm2701 = vcmp.eq.s32.totalorder %v2669, %v332
          %vm2702 = vcmp.eq.s32.totalorder %v2672, %v332
          %vm2703 = vcmp.eq.s32.totalorder %v2675, %v332
          %vm2704 = vcmp.eq.s32.totalorder %v2678, %v332
          %vm2705 = vcmp.eq.s32.totalorder %v2681, %v332
          %vm2706 = vcmp.eq.s32.totalorder %v2684, %v332
          %vm2707 = vcmp.eq.s32.totalorder %v2687, %v332
          %vm2708 = vcmp.eq.s32.totalorder %v2690, %v332
          %vm2709 = vcmp.eq.s32.totalorder %v2693, %v332
          %v2710 = vsel %vm2694, 1.0, 0.0
          %v2711 = vsel %vm2695, 1.0, 0.0
          %v2712 = vsel %vm2696, 1.0, 0.0
          %v2713 = vsel %vm2697, 1.0, 0.0
          %v2714 = vsel %vm2698, 1.0, 0.0
          %v2715 = vsel %vm2699, 1.0, 0.0
          %v2716 = vsel %vm2700, 1.0, 0.0
          %v2717 = vsel %vm2701, 1.0, 0.0
          %v2718 = vsel %vm2702, 1.0, 0.0
          %v2719 = vsel %vm2703, 1.0, 0.0
          %v2720 = vsel %vm2704, 1.0, 0.0
          %v2721 = vsel %vm2705, 1.0, 0.0
          %v2722 = vsel %vm2706, 1.0, 0.0
          %v2723 = vsel %vm2707, 1.0, 0.0
          %v2724 = vsel %vm2708, 1.0, 0.0
          %v2725 = vsel %vm2709, 1.0, 0.0
          %2726 = vset.pattern.permute.xlu0 5
          %2727 = vperm.xlu0 %2726, %v358
          %v2728 = vpop.permute.xlu0 %2727
          %2729 = vset.pattern.permute.xlu0 5
          %2730 = vperm.xlu0 %2729, %v359
          %v2731 = vpop.permute.xlu0 %2730
          %2732 = vset.pattern.permute.xlu0 5
          %2733 = vperm.xlu0 %2732, %v360
          %v2734 = vpop.permute.xlu0 %2733
          %2735 = vset.pattern.permute.xlu0 5
          %2736 = vperm.xlu0 %2735, %v361
          %v2737 = vpop.permute.xlu0 %2736
          %2738 = vset.pattern.permute.xlu0 5
          %2739 = vperm.xlu0 %2738, %v362
          %v2740 = vpop.permute.xlu0 %2739
          %2741 = vset.pattern.permute.xlu0 5
          %2742 = vperm.xlu0 %2741, %v363
          %v2743 = vpop.permute.xlu0 %2742
          %2744 = vset.pattern.permute.xlu0 5
          %2745 = vperm.xlu0 %2744, %v364
          %v2746 = vpop.permute.xlu0 %2745
          %2747 = vset.pattern.permute.xlu0 5
          %2748 = vperm.xlu0 %2747, %v365
          %v2749 = vpop.permute.xlu0 %2748
          %2750 = vset.pattern.permute.xlu0 5
          %2751 = vperm.xlu0 %2750, %v366
          %v2752 = vpop.permute.xlu0 %2751
          %2753 = vset.pattern.permute.xlu0 5
          %2754 = vperm.xlu0 %2753, %v367
          %v2755 = vpop.permute.xlu0 %2754
          %2756 = vset.pattern.permute.xlu0 5
          %2757 = vperm.xlu0 %2756, %v368
          %v2758 = vpop.permute.xlu0 %2757
          %2759 = vset.pattern.permute.xlu0 5
          %2760 = vperm.xlu0 %2759, %v369
          %v2761 = vpop.permute.xlu0 %2760
          %2762 = vset.pattern.permute.xlu0 5
          %2763 = vperm.xlu0 %2762, %v370
          %v2764 = vpop.permute.xlu0 %2763
          %2765 = vset.pattern.permute.xlu0 5
          %2766 = vperm.xlu0 %2765, %v371
          %v2767 = vpop.permute.xlu0 %2766
          %2768 = vset.pattern.permute.xlu0 5
          %2769 = vperm.xlu0 %2768, %v372
          %v2770 = vpop.permute.xlu0 %2769
          %2771 = vset.pattern.permute.xlu0 5
          %2772 = vperm.xlu0 %2771, %v373
          %v2773 = vpop.permute.xlu0 %2772
          %vm2774 = vcmp.eq.s32.totalorder %v2728, %v332
          %vm2775 = vcmp.eq.s32.totalorder %v2731, %v332
          %vm2776 = vcmp.eq.s32.totalorder %v2734, %v332
          %vm2777 = vcmp.eq.s32.totalorder %v2737, %v332
          %vm2778 = vcmp.eq.s32.totalorder %v2740, %v332
          %vm2779 = vcmp.eq.s32.totalorder %v2743, %v332
          %vm2780 = vcmp.eq.s32.totalorder %v2746, %v332
          %vm2781 = vcmp.eq.s32.totalorder %v2749, %v332
          %vm2782 = vcmp.eq.s32.totalorder %v2752, %v332
          %vm2783 = vcmp.eq.s32.totalorder %v2755, %v332
          %vm2784 = vcmp.eq.s32.totalorder %v2758, %v332
          %vm2785 = vcmp.eq.s32.totalorder %v2761, %v332
          %vm2786 = vcmp.eq.s32.totalorder %v2764, %v332
          %vm2787 = vcmp.eq.s32.totalorder %v2767, %v332
          %vm2788 = vcmp.eq.s32.totalorder %v2770, %v332
          %vm2789 = vcmp.eq.s32.totalorder %v2773, %v332
          %v2790 = vsel %vm2774, 1.0, 0.0
          %v2791 = vsel %vm2775, 1.0, 0.0
          %v2792 = vsel %vm2776, 1.0, 0.0
          %v2793 = vsel %vm2777, 1.0, 0.0
          %v2794 = vsel %vm2778, 1.0, 0.0
          %v2795 = vsel %vm2779, 1.0, 0.0
          %v2796 = vsel %vm2780, 1.0, 0.0
          %v2797 = vsel %vm2781, 1.0, 0.0
          %v2798 = vsel %vm2782, 1.0, 0.0
          %v2799 = vsel %vm2783, 1.0, 0.0
          %v2800 = vsel %vm2784, 1.0, 0.0
          %v2801 = vsel %vm2785, 1.0, 0.0
          %v2802 = vsel %vm2786, 1.0, 0.0
          %v2803 = vsel %vm2787, 1.0, 0.0
          %v2804 = vsel %vm2788, 1.0, 0.0
          %v2805 = vsel %vm2789, 1.0, 0.0
          %v2806 = vadd.f32 %v2710, %v2790
          %v2807 = vadd.f32 %v2711, %v2791
          %v2808 = vadd.f32 %v2712, %v2792
          %v2809 = vadd.f32 %v2713, %v2793
          %v2810 = vadd.f32 %v2714, %v2794
          %v2811 = vadd.f32 %v2715, %v2795
          %v2812 = vadd.f32 %v2716, %v2796
          %v2813 = vadd.f32 %v2717, %v2797
          %v2814 = vadd.f32 %v2718, %v2798
          %v2815 = vadd.f32 %v2719, %v2799
          %v2816 = vadd.f32 %v2720, %v2800
          %v2817 = vadd.f32 %v2721, %v2801
          %v2818 = vadd.f32 %v2722, %v2802
          %v2819 = vadd.f32 %v2723, %v2803
          %v2820 = vadd.f32 %v2724, %v2804
          %v2821 = vadd.f32 %v2725, %v2805
          %2822 = vset.pattern.permute.xlu0 6
          %2823 = vperm.xlu0 %2822, %v358
          %v2824 = vpop.permute.xlu0 %2823
          %2825 = vset.pattern.permute.xlu0 6
          %2826 = vperm.xlu0 %2825, %v359
          %v2827 = vpop.permute.xlu0 %2826
          %2828 = vset.pattern.permute.xlu0 6
          %2829 = vperm.xlu0 %2828, %v360
          %v2830 = vpop.permute.xlu0 %2829
          %2831 = vset.pattern.permute.xlu0 6
          %2832 = vperm.xlu0 %2831, %v361
          %v2833 = vpop.permute.xlu0 %2832
          %2834 = vset.pattern.permute.xlu0 6
          %2835 = vperm.xlu0 %2834, %v362
          %v2836 = vpop.permute.xlu0 %2835
          %2837 = vset.pattern.permute.xlu0 6
          %2838 = vperm.xlu0 %2837, %v363
          %v2839 = vpop.permute.xlu0 %2838
          %2840 = vset.pattern.permute.xlu0 6
          %2841 = vperm.xlu0 %2840, %v364
          %v2842 = vpop.permute.xlu0 %2841
          %2843 = vset.pattern.permute.xlu0 6
          %2844 = vperm.xlu0 %2843, %v365
          %v2845 = vpop.permute.xlu0 %2844
          %2846 = vset.pattern.permute.xlu0 6
          %2847 = vperm.xlu0 %2846, %v366
          %v2848 = vpop.permute.xlu0 %2847
          %2849 = vset.pattern.permute.xlu0 6
          %2850 = vperm.xlu0 %2849, %v367
          %v2851 = vpop.permute.xlu0 %2850
          %2852 = vset.pattern.permute.xlu0 6
          %2853 = vperm.xlu0 %2852, %v368
          %v2854 = vpop.permute.xlu0 %2853
          %2855 = vset.pattern.permute.xlu0 6
          %2856 = vperm.xlu0 %2855, %v369
          %v2857 = vpop.permute.xlu0 %2856
          %2858 = vset.pattern.permute.xlu0 6
          %2859 = vperm.xlu0 %2858, %v370
          %v2860 = vpop.permute.xlu0 %2859
          %2861 = vset.pattern.permute.xlu0 6
          %2862 = vperm.xlu0 %2861, %v371
          %v2863 = vpop.permute.xlu0 %2862
          %2864 = vset.pattern.permute.xlu0 6
          %2865 = vperm.xlu0 %2864, %v372
          %v2866 = vpop.permute.xlu0 %2865
          %2867 = vset.pattern.permute.xlu0 6
          %2868 = vperm.xlu0 %2867, %v373
          %v2869 = vpop.permute.xlu0 %2868
          %vm2870 = vcmp.eq.s32.totalorder %v2824, %v332
          %vm2871 = vcmp.eq.s32.totalorder %v2827, %v332
          %vm2872 = vcmp.eq.s32.totalorder %v2830, %v332
          %vm2873 = vcmp.eq.s32.totalorder %v2833, %v332
          %vm2874 = vcmp.eq.s32.totalorder %v2836, %v332
          %vm2875 = vcmp.eq.s32.totalorder %v2839, %v332
          %vm2876 = vcmp.eq.s32.totalorder %v2842, %v332
          %vm2877 = vcmp.eq.s32.totalorder %v2845, %v332
          %vm2878 = vcmp.eq.s32.totalorder %v2848, %v332
          %vm2879 = vcmp.eq.s32.totalorder %v2851, %v332
          %vm2880 = vcmp.eq.s32.totalorder %v2854, %v332
          %vm2881 = vcmp.eq.s32.totalorder %v2857, %v332
          %vm2882 = vcmp.eq.s32.totalorder %v2860, %v332
          %vm2883 = vcmp.eq.s32.totalorder %v2863, %v332
          %vm2884 = vcmp.eq.s32.totalorder %v2866, %v332
          %vm2885 = vcmp.eq.s32.totalorder %v2869, %v332
          %v2886 = vsel %vm2870, 1.0, 0.0
          %v2887 = vsel %vm2871, 1.0, 0.0
          %v2888 = vsel %vm2872, 1.0, 0.0
          %v2889 = vsel %vm2873, 1.0, 0.0
          %v2890 = vsel %vm2874, 1.0, 0.0
          %v2891 = vsel %vm2875, 1.0, 0.0
          %v2892 = vsel %vm2876, 1.0, 0.0
          %v2893 = vsel %vm2877, 1.0, 0.0
          %v2894 = vsel %vm2878, 1.0, 0.0
          %v2895 = vsel %vm2879, 1.0, 0.0
          %v2896 = vsel %vm2880, 1.0, 0.0
          %v2897 = vsel %vm2881, 1.0, 0.0
          %v2898 = vsel %vm2882, 1.0, 0.0
          %v2899 = vsel %vm2883, 1.0, 0.0
          %v2900 = vsel %vm2884, 1.0, 0.0
          %v2901 = vsel %vm2885, 1.0, 0.0
          %v2902 = vadd.f32 %v2806, %v2886
          %v2903 = vadd.f32 %v2807, %v2887
          %v2904 = vadd.f32 %v2808, %v2888
          %v2905 = vadd.f32 %v2809, %v2889
          %v2906 = vadd.f32 %v2810, %v2890
          %v2907 = vadd.f32 %v2811, %v2891
          %v2908 = vadd.f32 %v2812, %v2892
          %v2909 = vadd.f32 %v2813, %v2893
          %v2910 = vadd.f32 %v2814, %v2894
          %v2911 = vadd.f32 %v2815, %v2895
          %v2912 = vadd.f32 %v2816, %v2896
          %v2913 = vadd.f32 %v2817, %v2897
          %v2914 = vadd.f32 %v2818, %v2898
          %v2915 = vadd.f32 %v2819, %v2899
          %v2916 = vadd.f32 %v2820, %v2900
          %v2917 = vadd.f32 %v2821, %v2901
          %2918 = vset.pattern.permute.xlu0 7
          %2919 = vperm.xlu0 %2918, %v358
          %v2920 = vpop.permute.xlu0 %2919
          %2921 = vset.pattern.permute.xlu0 7
          %2922 = vperm.xlu0 %2921, %v359
          %v2923 = vpop.permute.xlu0 %2922
          %2924 = vset.pattern.permute.xlu0 7
          %2925 = vperm.xlu0 %2924, %v360
          %v2926 = vpop.permute.xlu0 %2925
          %2927 = vset.pattern.permute.xlu0 7
          %2928 = vperm.xlu0 %2927, %v361
          %v2929 = vpop.permute.xlu0 %2928
          %2930 = vset.pattern.permute.xlu0 7
          %2931 = vperm.xlu0 %2930, %v362
          %v2932 = vpop.permute.xlu0 %2931
          %2933 = vset.pattern.permute.xlu0 7
          %2934 = vperm.xlu0 %2933, %v363
          %v2935 = vpop.permute.xlu0 %2934
          %2936 = vset.pattern.permute.xlu0 7
          %2937 = vperm.xlu0 %2936, %v364
          %v2938 = vpop.permute.xlu0 %2937
          %2939 = vset.pattern.permute.xlu0 7
          %2940 = vperm.xlu0 %2939, %v365
          %v2941 = vpop.permute.xlu0 %2940
          %2942 = vset.pattern.permute.xlu0 7
          %2943 = vperm.xlu0 %2942, %v366
          %v2944 = vpop.permute.xlu0 %2943
          %2945 = vset.pattern.permute.xlu0 7
          %2946 = vperm.xlu0 %2945, %v367
          %v2947 = vpop.permute.xlu0 %2946
          %2948 = vset.pattern.permute.xlu0 7
          %2949 = vperm.xlu0 %2948, %v368
          %v2950 = vpop.permute.xlu0 %2949
          %2951 = vset.pattern.permute.xlu0 7
          %2952 = vperm.xlu0 %2951, %v369
          %v2953 = vpop.permute.xlu0 %2952
          %2954 = vset.pattern.permute.xlu0 7
          %2955 = vperm.xlu0 %2954, %v370
          %v2956 = vpop.permute.xlu0 %2955
          %2957 = vset.pattern.permute.xlu0 7
          %2958 = vperm.xlu0 %2957, %v371
          %v2959 = vpop.permute.xlu0 %2958
          %2960 = vset.pattern.permute.xlu0 7
          %2961 = vperm.xlu0 %2960, %v372
          %v2962 = vpop.permute.xlu0 %2961
          %2963 = vset.pattern.permute.xlu0 7
          %2964 = vperm.xlu0 %2963, %v373
          %v2965 = vpop.permute.xlu0 %2964
          %vm2966 = vcmp.eq.s32.totalorder %v2920, %v332
          %vm2967 = vcmp.eq.s32.totalorder %v2923, %v332
          %vm2968 = vcmp.eq.s32.totalorder %v2926, %v332
          %vm2969 = vcmp.eq.s32.totalorder %v2929, %v332
          %vm2970 = vcmp.eq.s32.totalorder %v2932, %v332
          %vm2971 = vcmp.eq.s32.totalorder %v2935, %v332
          %vm2972 = vcmp.eq.s32.totalorder %v2938, %v332
          %vm2973 = vcmp.eq.s32.totalorder %v2941, %v332
          %vm2974 = vcmp.eq.s32.totalorder %v2944, %v332
          %vm2975 = vcmp.eq.s32.totalorder %v2947, %v332
          %vm2976 = vcmp.eq.s32.totalorder %v2950, %v332
          %vm2977 = vcmp.eq.s32.totalorder %v2953, %v332
          %vm2978 = vcmp.eq.s32.totalorder %v2956, %v332
          %vm2979 = vcmp.eq.s32.totalorder %v2959, %v332
          %vm2980 = vcmp.eq.s32.totalorder %v2962, %v332
          %vm2981 = vcmp.eq.s32.totalorder %v2965, %v332
          %v2982 = vsel %vm2966, 1.0, 0.0
          %v2983 = vsel %vm2967, 1.0, 0.0
          %v2984 = vsel %vm2968, 1.0, 0.0
          %v2985 = vsel %vm2969, 1.0, 0.0
          %v2986 = vsel %vm2970, 1.0, 0.0
          %v2987 = vsel %vm2971, 1.0, 0.0
          %v2988 = vsel %vm2972, 1.0, 0.0
          %v2989 = vsel %vm2973, 1.0, 0.0
          %v2990 = vsel %vm2974, 1.0, 0.0
          %v2991 = vsel %vm2975, 1.0, 0.0
          %v2992 = vsel %vm2976, 1.0, 0.0
          %v2993 = vsel %vm2977, 1.0, 0.0
          %v2994 = vsel %vm2978, 1.0, 0.0
          %v2995 = vsel %vm2979, 1.0, 0.0
          %v2996 = vsel %vm2980, 1.0, 0.0
          %v2997 = vsel %vm2981, 1.0, 0.0
          %v2998 = vadd.f32 %v2902, %v2982
          %v2999 = vadd.f32 %v2903, %v2983
          %v3000 = vadd.f32 %v2904, %v2984
          %v3001 = vadd.f32 %v2905, %v2985
          %v3002 = vadd.f32 %v2906, %v2986
          %v3003 = vadd.f32 %v2907, %v2987
          %v3004 = vadd.f32 %v2908, %v2988
          %v3005 = vadd.f32 %v2909, %v2989
          %v3006 = vadd.f32 %v2910, %v2990
          %v3007 = vadd.f32 %v2911, %v2991
          %v3008 = vadd.f32 %v2912, %v2992
          %v3009 = vadd.f32 %v2913, %v2993
          %v3010 = vadd.f32 %v2914, %v2994
          %v3011 = vadd.f32 %v2915, %v2995
          %v3012 = vadd.f32 %v2916, %v2996
          %v3013 = vadd.f32 %v2917, %v2997
          %v3014 = vadd.f32 %v2630, %v2998
          %v3015 = vadd.f32 %v2631, %v2999
          %v3016 = vadd.f32 %v2632, %v3000
          %v3017 = vadd.f32 %v2633, %v3001
          %v3018 = vadd.f32 %v2634, %v3002
          %v3019 = vadd.f32 %v2635, %v3003
          %v3020 = vadd.f32 %v2636, %v3004
          %v3021 = vadd.f32 %v2637, %v3005
          %v3022 = vadd.f32 %v2638, %v3006
          %v3023 = vadd.f32 %v2639, %v3007
          %v3024 = vadd.f32 %v2640, %v3008
          %v3025 = vadd.f32 %v2641, %v3009
          %v3026 = vadd.f32 %v2642, %v3010
          %v3027 = vadd.f32 %v2643, %v3011
          %v3028 = vadd.f32 %v2644, %v3012
          %v3029 = vadd.f32 %v2645, %v3013
          %3030 = vset.pattern.permute.xlu0 8
          %3031 = vperm.xlu0 %3030, %v358
          %v3032 = vpop.permute.xlu0 %3031
          %3033 = vset.pattern.permute.xlu0 8
          %3034 = vperm.xlu0 %3033, %v359
          %v3035 = vpop.permute.xlu0 %3034
          %3036 = vset.pattern.permute.xlu0 8
          %3037 = vperm.xlu0 %3036, %v360
          %v3038 = vpop.permute.xlu0 %3037
          %3039 = vset.pattern.permute.xlu0 8
          %3040 = vperm.xlu0 %3039, %v361
          %v3041 = vpop.permute.xlu0 %3040
          %3042 = vset.pattern.permute.xlu0 8
          %3043 = vperm.xlu0 %3042, %v362
          %v3044 = vpop.permute.xlu0 %3043
          %3045 = vset.pattern.permute.xlu0 8
          %3046 = vperm.xlu0 %3045, %v363
          %v3047 = vpop.permute.xlu0 %3046
          %3048 = vset.pattern.permute.xlu0 8
          %3049 = vperm.xlu0 %3048, %v364
          %v3050 = vpop.permute.xlu0 %3049
          %3051 = vset.pattern.permute.xlu0 8
          %3052 = vperm.xlu0 %3051, %v365
          %v3053 = vpop.permute.xlu0 %3052
          %3054 = vset.pattern.permute.xlu0 8
          %3055 = vperm.xlu0 %3054, %v366
          %v3056 = vpop.permute.xlu0 %3055
          %3057 = vset.pattern.permute.xlu0 8
          %3058 = vperm.xlu0 %3057, %v367
          %v3059 = vpop.permute.xlu0 %3058
          %3060 = vset.pattern.permute.xlu0 8
          %3061 = vperm.xlu0 %3060, %v368
          %v3062 = vpop.permute.xlu0 %3061
          %3063 = vset.pattern.permute.xlu0 8
          %3064 = vperm.xlu0 %3063, %v369
          %v3065 = vpop.permute.xlu0 %3064
          %3066 = vset.pattern.permute.xlu0 8
          %3067 = vperm.xlu0 %3066, %v370
          %v3068 = vpop.permute.xlu0 %3067
          %3069 = vset.pattern.permute.xlu0 8
          %3070 = vperm.xlu0 %3069, %v371
          %v3071 = vpop.permute.xlu0 %3070
          %3072 = vset.pattern.permute.xlu0 8
          %3073 = vperm.xlu0 %3072, %v372
          %v3074 = vpop.permute.xlu0 %3073
          %3075 = vset.pattern.permute.xlu0 8
          %3076 = vperm.xlu0 %3075, %v373
          %v3077 = vpop.permute.xlu0 %3076
          %vm3078 = vcmp.eq.s32.totalorder %v3032, %v332
          %vm3079 = vcmp.eq.s32.totalorder %v3035, %v332
          %vm3080 = vcmp.eq.s32.totalorder %v3038, %v332
          %vm3081 = vcmp.eq.s32.totalorder %v3041, %v332
          %vm3082 = vcmp.eq.s32.totalorder %v3044, %v332
          %vm3083 = vcmp.eq.s32.totalorder %v3047, %v332
          %vm3084 = vcmp.eq.s32.totalorder %v3050, %v332
          %vm3085 = vcmp.eq.s32.totalorder %v3053, %v332
          %vm3086 = vcmp.eq.s32.totalorder %v3056, %v332
          %vm3087 = vcmp.eq.s32.totalorder %v3059, %v332
          %vm3088 = vcmp.eq.s32.totalorder %v3062, %v332
          %vm3089 = vcmp.eq.s32.totalorder %v3065, %v332
          %vm3090 = vcmp.eq.s32.totalorder %v3068, %v332
          %vm3091 = vcmp.eq.s32.totalorder %v3071, %v332
          %vm3092 = vcmp.eq.s32.totalorder %v3074, %v332
          %vm3093 = vcmp.eq.s32.totalorder %v3077, %v332
          %v3094 = vsel %vm3078, 1.0, 0.0
          %v3095 = vsel %vm3079, 1.0, 0.0
          %v3096 = vsel %vm3080, 1.0, 0.0
          %v3097 = vsel %vm3081, 1.0, 0.0
          %v3098 = vsel %vm3082, 1.0, 0.0
          %v3099 = vsel %vm3083, 1.0, 0.0
          %v3100 = vsel %vm3084, 1.0, 0.0
          %v3101 = vsel %vm3085, 1.0, 0.0
          %v3102 = vsel %vm3086, 1.0, 0.0
          %v3103 = vsel %vm3087, 1.0, 0.0
          %v3104 = vsel %vm3088, 1.0, 0.0
          %v3105 = vsel %vm3089, 1.0, 0.0
          %v3106 = vsel %vm3090, 1.0, 0.0
          %v3107 = vsel %vm3091, 1.0, 0.0
          %v3108 = vsel %vm3092, 1.0, 0.0
          %v3109 = vsel %vm3093, 1.0, 0.0
          %3110 = vset.pattern.permute.xlu0 9
          %3111 = vperm.xlu0 %3110, %v358
          %v3112 = vpop.permute.xlu0 %3111
          %3113 = vset.pattern.permute.xlu0 9
          %3114 = vperm.xlu0 %3113, %v359
          %v3115 = vpop.permute.xlu0 %3114
          %3116 = vset.pattern.permute.xlu0 9
          %3117 = vperm.xlu0 %3116, %v360
          %v3118 = vpop.permute.xlu0 %3117
          %3119 = vset.pattern.permute.xlu0 9
          %3120 = vperm.xlu0 %3119, %v361
          %v3121 = vpop.permute.xlu0 %3120
          %3122 = vset.pattern.permute.xlu0 9
          %3123 = vperm.xlu0 %3122, %v362
          %v3124 = vpop.permute.xlu0 %3123
          %3125 = vset.pattern.permute.xlu0 9
          %3126 = vperm.xlu0 %3125, %v363
          %v3127 = vpop.permute.xlu0 %3126
          %3128 = vset.pattern.permute.xlu0 9
          %3129 = vperm.xlu0 %3128, %v364
          %v3130 = vpop.permute.xlu0 %3129
          %3131 = vset.pattern.permute.xlu0 9
          %3132 = vperm.xlu0 %3131, %v365
          %v3133 = vpop.permute.xlu0 %3132
          %3134 = vset.pattern.permute.xlu0 9
          %3135 = vperm.xlu0 %3134, %v366
          %v3136 = vpop.permute.xlu0 %3135
          %3137 = vset.pattern.permute.xlu0 9
          %3138 = vperm.xlu0 %3137, %v367
          %v3139 = vpop.permute.xlu0 %3138
          %3140 = vset.pattern.permute.xlu0 9
          %3141 = vperm.xlu0 %3140, %v368
          %v3142 = vpop.permute.xlu0 %3141
          %3143 = vset.pattern.permute.xlu0 9
          %3144 = vperm.xlu0 %3143, %v369
          %v3145 = vpop.permute.xlu0 %3144
          %3146 = vset.pattern.permute.xlu0 9
          %3147 = vperm.xlu0 %3146, %v370
          %v3148 = vpop.permute.xlu0 %3147
          %3149 = vset.pattern.permute.xlu0 9
          %3150 = vperm.xlu0 %3149, %v371
          %v3151 = vpop.permute.xlu0 %3150
          %3152 = vset.pattern.permute.xlu0 9
          %3153 = vperm.xlu0 %3152, %v372
          %v3154 = vpop.permute.xlu0 %3153
          %3155 = vset.pattern.permute.xlu0 9
          %3156 = vperm.xlu0 %3155, %v373
          %v3157 = vpop.permute.xlu0 %3156
          %vm3158 = vcmp.eq.s32.totalorder %v3112, %v332
          %vm3159 = vcmp.eq.s32.totalorder %v3115, %v332
          %vm3160 = vcmp.eq.s32.totalorder %v3118, %v332
          %vm3161 = vcmp.eq.s32.totalorder %v3121, %v332
          %vm3162 = vcmp.eq.s32.totalorder %v3124, %v332
          %vm3163 = vcmp.eq.s32.totalorder %v3127, %v332
          %vm3164 = vcmp.eq.s32.totalorder %v3130, %v332
          %vm3165 = vcmp.eq.s32.totalorder %v3133, %v332
          %vm3166 = vcmp.eq.s32.totalorder %v3136, %v332
          %vm3167 = vcmp.eq.s32.totalorder %v3139, %v332
          %vm3168 = vcmp.eq.s32.totalorder %v3142, %v332
          %vm3169 = vcmp.eq.s32.totalorder %v3145, %v332
          %vm3170 = vcmp.eq.s32.totalorder %v3148, %v332
          %vm3171 = vcmp.eq.s32.totalorder %v3151, %v332
          %vm3172 = vcmp.eq.s32.totalorder %v3154, %v332
          %vm3173 = vcmp.eq.s32.totalorder %v3157, %v332
          %v3174 = vsel %vm3158, 1.0, 0.0
          %v3175 = vsel %vm3159, 1.0, 0.0
          %v3176 = vsel %vm3160, 1.0, 0.0
          %v3177 = vsel %vm3161, 1.0, 0.0
          %v3178 = vsel %vm3162, 1.0, 0.0
          %v3179 = vsel %vm3163, 1.0, 0.0
          %v3180 = vsel %vm3164, 1.0, 0.0
          %v3181 = vsel %vm3165, 1.0, 0.0
          %v3182 = vsel %vm3166, 1.0, 0.0
          %v3183 = vsel %vm3167, 1.0, 0.0
          %v3184 = vsel %vm3168, 1.0, 0.0
          %v3185 = vsel %vm3169, 1.0, 0.0
          %v3186 = vsel %vm3170, 1.0, 0.0
          %v3187 = vsel %vm3171, 1.0, 0.0
          %v3188 = vsel %vm3172, 1.0, 0.0
          %v3189 = vsel %vm3173, 1.0, 0.0
          %v3190 = vadd.f32 %v3094, %v3174
          %v3191 = vadd.f32 %v3095, %v3175
          %v3192 = vadd.f32 %v3096, %v3176
          %v3193 = vadd.f32 %v3097, %v3177
          %v3194 = vadd.f32 %v3098, %v3178
          %v3195 = vadd.f32 %v3099, %v3179
          %v3196 = vadd.f32 %v3100, %v3180
          %v3197 = vadd.f32 %v3101, %v3181
          %v3198 = vadd.f32 %v3102, %v3182
          %v3199 = vadd.f32 %v3103, %v3183
          %v3200 = vadd.f32 %v3104, %v3184
          %v3201 = vadd.f32 %v3105, %v3185
          %v3202 = vadd.f32 %v3106, %v3186
          %v3203 = vadd.f32 %v3107, %v3187
          %v3204 = vadd.f32 %v3108, %v3188
          %v3205 = vadd.f32 %v3109, %v3189
          %3206 = vset.pattern.permute.xlu0 10
          %3207 = vperm.xlu0 %3206, %v358
          %v3208 = vpop.permute.xlu0 %3207
          %3209 = vset.pattern.permute.xlu0 10
          %3210 = vperm.xlu0 %3209, %v359
          %v3211 = vpop.permute.xlu0 %3210
          %3212 = vset.pattern.permute.xlu0 10
          %3213 = vperm.xlu0 %3212, %v360
          %v3214 = vpop.permute.xlu0 %3213
          %3215 = vset.pattern.permute.xlu0 10
          %3216 = vperm.xlu0 %3215, %v361
          %v3217 = vpop.permute.xlu0 %3216
          %3218 = vset.pattern.permute.xlu0 10
          %3219 = vperm.xlu0 %3218, %v362
          %v3220 = vpop.permute.xlu0 %3219
          %3221 = vset.pattern.permute.xlu0 10
          %3222 = vperm.xlu0 %3221, %v363
          %v3223 = vpop.permute.xlu0 %3222
          %3224 = vset.pattern.permute.xlu0 10
          %3225 = vperm.xlu0 %3224, %v364
          %v3226 = vpop.permute.xlu0 %3225
          %3227 = vset.pattern.permute.xlu0 10
          %3228 = vperm.xlu0 %3227, %v365
          %v3229 = vpop.permute.xlu0 %3228
          %3230 = vset.pattern.permute.xlu0 10
          %3231 = vperm.xlu0 %3230, %v366
          %v3232 = vpop.permute.xlu0 %3231
          %3233 = vset.pattern.permute.xlu0 10
          %3234 = vperm.xlu0 %3233, %v367
          %v3235 = vpop.permute.xlu0 %3234
          %3236 = vset.pattern.permute.xlu0 10
          %3237 = vperm.xlu0 %3236, %v368
          %v3238 = vpop.permute.xlu0 %3237
          %3239 = vset.pattern.permute.xlu0 10
          %3240 = vperm.xlu0 %3239, %v369
          %v3241 = vpop.permute.xlu0 %3240
          %3242 = vset.pattern.permute.xlu0 10
          %3243 = vperm.xlu0 %3242, %v370
          %v3244 = vpop.permute.xlu0 %3243
          %3245 = vset.pattern.permute.xlu0 10
          %3246 = vperm.xlu0 %3245, %v371
          %v3247 = vpop.permute.xlu0 %3246
          %3248 = vset.pattern.permute.xlu0 10
          %3249 = vperm.xlu0 %3248, %v372
          %v3250 = vpop.permute.xlu0 %3249
          %3251 = vset.pattern.permute.xlu0 10
          %3252 = vperm.xlu0 %3251, %v373
          %v3253 = vpop.permute.xlu0 %3252
          %vm3254 = vcmp.eq.s32.totalorder %v3208, %v332
          %vm3255 = vcmp.eq.s32.totalorder %v3211, %v332
          %vm3256 = vcmp.eq.s32.totalorder %v3214, %v332
          %vm3257 = vcmp.eq.s32.totalorder %v3217, %v332
          %vm3258 = vcmp.eq.s32.totalorder %v3220, %v332
          %vm3259 = vcmp.eq.s32.totalorder %v3223, %v332
          %vm3260 = vcmp.eq.s32.totalorder %v3226, %v332
          %vm3261 = vcmp.eq.s32.totalorder %v3229, %v332
          %vm3262 = vcmp.eq.s32.totalorder %v3232, %v332
          %vm3263 = vcmp.eq.s32.totalorder %v3235, %v332
          %vm3264 = vcmp.eq.s32.totalorder %v3238, %v332
          %vm3265 = vcmp.eq.s32.totalorder %v3241, %v332
          %vm3266 = vcmp.eq.s32.totalorder %v3244, %v332
          %vm3267 = vcmp.eq.s32.totalorder %v3247, %v332
          %vm3268 = vcmp.eq.s32.totalorder %v3250, %v332
          %vm3269 = vcmp.eq.s32.totalorder %v3253, %v332
          %v3270 = vsel %vm3254, 1.0, 0.0
          %v3271 = vsel %vm3255, 1.0, 0.0
          %v3272 = vsel %vm3256, 1.0, 0.0
          %v3273 = vsel %vm3257, 1.0, 0.0
          %v3274 = vsel %vm3258, 1.0, 0.0
          %v3275 = vsel %vm3259, 1.0, 0.0
          %v3276 = vsel %vm3260, 1.0, 0.0
          %v3277 = vsel %vm3261, 1.0, 0.0
          %v3278 = vsel %vm3262, 1.0, 0.0
          %v3279 = vsel %vm3263, 1.0, 0.0
          %v3280 = vsel %vm3264, 1.0, 0.0
          %v3281 = vsel %vm3265, 1.0, 0.0
          %v3282 = vsel %vm3266, 1.0, 0.0
          %v3283 = vsel %vm3267, 1.0, 0.0
          %v3284 = vsel %vm3268, 1.0, 0.0
          %v3285 = vsel %vm3269, 1.0, 0.0
          %v3286 = vadd.f32 %v3190, %v3270
          %v3287 = vadd.f32 %v3191, %v3271
          %v3288 = vadd.f32 %v3192, %v3272
          %v3289 = vadd.f32 %v3193, %v3273
          %v3290 = vadd.f32 %v3194, %v3274
          %v3291 = vadd.f32 %v3195, %v3275
          %v3292 = vadd.f32 %v3196, %v3276
          %v3293 = vadd.f32 %v3197, %v3277
          %v3294 = vadd.f32 %v3198, %v3278
          %v3295 = vadd.f32 %v3199, %v3279
          %v3296 = vadd.f32 %v3200, %v3280
          %v3297 = vadd.f32 %v3201, %v3281
          %v3298 = vadd.f32 %v3202, %v3282
          %v3299 = vadd.f32 %v3203, %v3283
          %v3300 = vadd.f32 %v3204, %v3284
          %v3301 = vadd.f32 %v3205, %v3285
          %3302 = vset.pattern.permute.xlu0 11
          %3303 = vperm.xlu0 %3302, %v358
          %v3304 = vpop.permute.xlu0 %3303
          %3305 = vset.pattern.permute.xlu0 11
          %3306 = vperm.xlu0 %3305, %v359
          %v3307 = vpop.permute.xlu0 %3306
          %3308 = vset.pattern.permute.xlu0 11
          %3309 = vperm.xlu0 %3308, %v360
          %v3310 = vpop.permute.xlu0 %3309
          %3311 = vset.pattern.permute.xlu0 11
          %3312 = vperm.xlu0 %3311, %v361
          %v3313 = vpop.permute.xlu0 %3312
          %3314 = vset.pattern.permute.xlu0 11
          %3315 = vperm.xlu0 %3314, %v362
          %v3316 = vpop.permute.xlu0 %3315
          %3317 = vset.pattern.permute.xlu0 11
          %3318 = vperm.xlu0 %3317, %v363
          %v3319 = vpop.permute.xlu0 %3318
          %3320 = vset.pattern.permute.xlu0 11
          %3321 = vperm.xlu0 %3320, %v364
          %v3322 = vpop.permute.xlu0 %3321
          %3323 = vset.pattern.permute.xlu0 11
          %3324 = vperm.xlu0 %3323, %v365
          %v3325 = vpop.permute.xlu0 %3324
          %3326 = vset.pattern.permute.xlu0 11
          %3327 = vperm.xlu0 %3326, %v366
          %v3328 = vpop.permute.xlu0 %3327
          %3329 = vset.pattern.permute.xlu0 11
          %3330 = vperm.xlu0 %3329, %v367
          %v3331 = vpop.permute.xlu0 %3330
          %3332 = vset.pattern.permute.xlu0 11
          %3333 = vperm.xlu0 %3332, %v368
          %v3334 = vpop.permute.xlu0 %3333
          %3335 = vset.pattern.permute.xlu0 11
          %3336 = vperm.xlu0 %3335, %v369
          %v3337 = vpop.permute.xlu0 %3336
          %3338 = vset.pattern.permute.xlu0 11
          %3339 = vperm.xlu0 %3338, %v370
          %v3340 = vpop.permute.xlu0 %3339
          %3341 = vset.pattern.permute.xlu0 11
          %3342 = vperm.xlu0 %3341, %v371
          %v3343 = vpop.permute.xlu0 %3342
          %3344 = vset.pattern.permute.xlu0 11
          %3345 = vperm.xlu0 %3344, %v372
          %v3346 = vpop.permute.xlu0 %3345
          %3347 = vset.pattern.permute.xlu0 11
          %3348 = vperm.xlu0 %3347, %v373
          %v3349 = vpop.permute.xlu0 %3348
          %vm3350 = vcmp.eq.s32.totalorder %v3304, %v332
          %vm3351 = vcmp.eq.s32.totalorder %v3307, %v332
          %vm3352 = vcmp.eq.s32.totalorder %v3310, %v332
          %vm3353 = vcmp.eq.s32.totalorder %v3313, %v332
          %vm3354 = vcmp.eq.s32.totalorder %v3316, %v332
          %vm3355 = vcmp.eq.s32.totalorder %v3319, %v332
          %vm3356 = vcmp.eq.s32.totalorder %v3322, %v332
          %vm3357 = vcmp.eq.s32.totalorder %v3325, %v332
          %vm3358 = vcmp.eq.s32.totalorder %v3328, %v332
          %vm3359 = vcmp.eq.s32.totalorder %v3331, %v332
          %vm3360 = vcmp.eq.s32.totalorder %v3334, %v332
          %vm3361 = vcmp.eq.s32.totalorder %v3337, %v332
          %vm3362 = vcmp.eq.s32.totalorder %v3340, %v332
          %vm3363 = vcmp.eq.s32.totalorder %v3343, %v332
          %vm3364 = vcmp.eq.s32.totalorder %v3346, %v332
          %vm3365 = vcmp.eq.s32.totalorder %v3349, %v332
          %v3366 = vsel %vm3350, 1.0, 0.0
          %v3367 = vsel %vm3351, 1.0, 0.0
          %v3368 = vsel %vm3352, 1.0, 0.0
          %v3369 = vsel %vm3353, 1.0, 0.0
          %v3370 = vsel %vm3354, 1.0, 0.0
          %v3371 = vsel %vm3355, 1.0, 0.0
          %v3372 = vsel %vm3356, 1.0, 0.0
          %v3373 = vsel %vm3357, 1.0, 0.0
          %v3374 = vsel %vm3358, 1.0, 0.0
          %v3375 = vsel %vm3359, 1.0, 0.0
          %v3376 = vsel %vm3360, 1.0, 0.0
          %v3377 = vsel %vm3361, 1.0, 0.0
          %v3378 = vsel %vm3362, 1.0, 0.0
          %v3379 = vsel %vm3363, 1.0, 0.0
          %v3380 = vsel %vm3364, 1.0, 0.0
          %v3381 = vsel %vm3365, 1.0, 0.0
          %v3382 = vadd.f32 %v3286, %v3366
          %v3383 = vadd.f32 %v3287, %v3367
          %v3384 = vadd.f32 %v3288, %v3368
          %v3385 = vadd.f32 %v3289, %v3369
          %v3386 = vadd.f32 %v3290, %v3370
          %v3387 = vadd.f32 %v3291, %v3371
          %v3388 = vadd.f32 %v3292, %v3372
          %v3389 = vadd.f32 %v3293, %v3373
          %v3390 = vadd.f32 %v3294, %v3374
          %v3391 = vadd.f32 %v3295, %v3375
          %v3392 = vadd.f32 %v3296, %v3376
          %v3393 = vadd.f32 %v3297, %v3377
          %v3394 = vadd.f32 %v3298, %v3378
          %v3395 = vadd.f32 %v3299, %v3379
          %v3396 = vadd.f32 %v3300, %v3380
          %v3397 = vadd.f32 %v3301, %v3381
          %v3398 = vadd.f32 %v3014, %v3382
          %v3399 = vadd.f32 %v3015, %v3383
          %v3400 = vadd.f32 %v3016, %v3384
          %v3401 = vadd.f32 %v3017, %v3385
          %v3402 = vadd.f32 %v3018, %v3386
          %v3403 = vadd.f32 %v3019, %v3387
          %v3404 = vadd.f32 %v3020, %v3388
          %v3405 = vadd.f32 %v3021, %v3389
          %v3406 = vadd.f32 %v3022, %v3390
          %v3407 = vadd.f32 %v3023, %v3391
          %v3408 = vadd.f32 %v3024, %v3392
          %v3409 = vadd.f32 %v3025, %v3393
          %v3410 = vadd.f32 %v3026, %v3394
          %v3411 = vadd.f32 %v3027, %v3395
          %v3412 = vadd.f32 %v3028, %v3396
          %v3413 = vadd.f32 %v3029, %v3397
          %3414 = vset.pattern.permute.xlu0 12
          %3415 = vperm.xlu0 %3414, %v358
          %v3416 = vpop.permute.xlu0 %3415
          %3417 = vset.pattern.permute.xlu0 12
          %3418 = vperm.xlu0 %3417, %v359
          %v3419 = vpop.permute.xlu0 %3418
          %3420 = vset.pattern.permute.xlu0 12
          %3421 = vperm.xlu0 %3420, %v360
          %v3422 = vpop.permute.xlu0 %3421
          %3423 = vset.pattern.permute.xlu0 12
          %3424 = vperm.xlu0 %3423, %v361
          %v3425 = vpop.permute.xlu0 %3424
          %3426 = vset.pattern.permute.xlu0 12
          %3427 = vperm.xlu0 %3426, %v362
          %v3428 = vpop.permute.xlu0 %3427
          %3429 = vset.pattern.permute.xlu0 12
          %3430 = vperm.xlu0 %3429, %v363
          %v3431 = vpop.permute.xlu0 %3430
          %3432 = vset.pattern.permute.xlu0 12
          %3433 = vperm.xlu0 %3432, %v364
          %v3434 = vpop.permute.xlu0 %3433
          %3435 = vset.pattern.permute.xlu0 12
          %3436 = vperm.xlu0 %3435, %v365
          %v3437 = vpop.permute.xlu0 %3436
          %3438 = vset.pattern.permute.xlu0 12
          %3439 = vperm.xlu0 %3438, %v366
          %v3440 = vpop.permute.xlu0 %3439
          %3441 = vset.pattern.permute.xlu0 12
          %3442 = vperm.xlu0 %3441, %v367
          %v3443 = vpop.permute.xlu0 %3442
          %3444 = vset.pattern.permute.xlu0 12
          %3445 = vperm.xlu0 %3444, %v368
          %v3446 = vpop.permute.xlu0 %3445
          %3447 = vset.pattern.permute.xlu0 12
          %3448 = vperm.xlu0 %3447, %v369
          %v3449 = vpop.permute.xlu0 %3448
          %3450 = vset.pattern.permute.xlu0 12
          %3451 = vperm.xlu0 %3450, %v370
          %v3452 = vpop.permute.xlu0 %3451
          %3453 = vset.pattern.permute.xlu0 12
          %3454 = vperm.xlu0 %3453, %v371
          %v3455 = vpop.permute.xlu0 %3454
          %3456 = vset.pattern.permute.xlu0 12
          %3457 = vperm.xlu0 %3456, %v372
          %v3458 = vpop.permute.xlu0 %3457
          %3459 = vset.pattern.permute.xlu0 12
          %3460 = vperm.xlu0 %3459, %v373
          %v3461 = vpop.permute.xlu0 %3460
          %vm3462 = vcmp.eq.s32.totalorder %v3416, %v332
          %vm3463 = vcmp.eq.s32.totalorder %v3419, %v332
          %vm3464 = vcmp.eq.s32.totalorder %v3422, %v332
          %vm3465 = vcmp.eq.s32.totalorder %v3425, %v332
          %vm3466 = vcmp.eq.s32.totalorder %v3428, %v332
          %vm3467 = vcmp.eq.s32.totalorder %v3431, %v332
          %vm3468 = vcmp.eq.s32.totalorder %v3434, %v332
          %vm3469 = vcmp.eq.s32.totalorder %v3437, %v332
          %vm3470 = vcmp.eq.s32.totalorder %v3440, %v332
          %vm3471 = vcmp.eq.s32.totalorder %v3443, %v332
          %vm3472 = vcmp.eq.s32.totalorder %v3446, %v332
          %vm3473 = vcmp.eq.s32.totalorder %v3449, %v332
          %vm3474 = vcmp.eq.s32.totalorder %v3452, %v332
          %vm3475 = vcmp.eq.s32.totalorder %v3455, %v332
          %vm3476 = vcmp.eq.s32.totalorder %v3458, %v332
          %vm3477 = vcmp.eq.s32.totalorder %v3461, %v332
          %v3478 = vsel %vm3462, 1.0, 0.0
          %v3479 = vsel %vm3463, 1.0, 0.0
          %v3480 = vsel %vm3464, 1.0, 0.0
          %v3481 = vsel %vm3465, 1.0, 0.0
          %v3482 = vsel %vm3466, 1.0, 0.0
          %v3483 = vsel %vm3467, 1.0, 0.0
          %v3484 = vsel %vm3468, 1.0, 0.0
          %v3485 = vsel %vm3469, 1.0, 0.0
          %v3486 = vsel %vm3470, 1.0, 0.0
          %v3487 = vsel %vm3471, 1.0, 0.0
          %v3488 = vsel %vm3472, 1.0, 0.0
          %v3489 = vsel %vm3473, 1.0, 0.0
          %v3490 = vsel %vm3474, 1.0, 0.0
          %v3491 = vsel %vm3475, 1.0, 0.0
          %v3492 = vsel %vm3476, 1.0, 0.0
          %v3493 = vsel %vm3477, 1.0, 0.0
          %3494 = vset.pattern.permute.xlu0 13
          %3495 = vperm.xlu0 %3494, %v358
          %v3496 = vpop.permute.xlu0 %3495
          %3497 = vset.pattern.permute.xlu0 13
          %3498 = vperm.xlu0 %3497, %v359
          %v3499 = vpop.permute.xlu0 %3498
          %3500 = vset.pattern.permute.xlu0 13
          %3501 = vperm.xlu0 %3500, %v360
          %v3502 = vpop.permute.xlu0 %3501
          %3503 = vset.pattern.permute.xlu0 13
          %3504 = vperm.xlu0 %3503, %v361
          %v3505 = vpop.permute.xlu0 %3504
          %3506 = vset.pattern.permute.xlu0 13
          %3507 = vperm.xlu0 %3506, %v362
          %v3508 = vpop.permute.xlu0 %3507
          %3509 = vset.pattern.permute.xlu0 13
          %3510 = vperm.xlu0 %3509, %v363
          %v3511 = vpop.permute.xlu0 %3510
          %3512 = vset.pattern.permute.xlu0 13
          %3513 = vperm.xlu0 %3512, %v364
          %v3514 = vpop.permute.xlu0 %3513
          %3515 = vset.pattern.permute.xlu0 13
          %3516 = vperm.xlu0 %3515, %v365
          %v3517 = vpop.permute.xlu0 %3516
          %3518 = vset.pattern.permute.xlu0 13
          %3519 = vperm.xlu0 %3518, %v366
          %v3520 = vpop.permute.xlu0 %3519
          %3521 = vset.pattern.permute.xlu0 13
          %3522 = vperm.xlu0 %3521, %v367
          %v3523 = vpop.permute.xlu0 %3522
          %3524 = vset.pattern.permute.xlu0 13
          %3525 = vperm.xlu0 %3524, %v368
          %v3526 = vpop.permute.xlu0 %3525
          %3527 = vset.pattern.permute.xlu0 13
          %3528 = vperm.xlu0 %3527, %v369
          %v3529 = vpop.permute.xlu0 %3528
          %3530 = vset.pattern.permute.xlu0 13
          %3531 = vperm.xlu0 %3530, %v370
          %v3532 = vpop.permute.xlu0 %3531
          %3533 = vset.pattern.permute.xlu0 13
          %3534 = vperm.xlu0 %3533, %v371
          %v3535 = vpop.permute.xlu0 %3534
          %3536 = vset.pattern.permute.xlu0 13
          %3537 = vperm.xlu0 %3536, %v372
          %v3538 = vpop.permute.xlu0 %3537
          %3539 = vset.pattern.permute.xlu0 13
          %3540 = vperm.xlu0 %3539, %v373
          %v3541 = vpop.permute.xlu0 %3540
          %vm3542 = vcmp.eq.s32.totalorder %v3496, %v332
          %vm3543 = vcmp.eq.s32.totalorder %v3499, %v332
          %vm3544 = vcmp.eq.s32.totalorder %v3502, %v332
          %vm3545 = vcmp.eq.s32.totalorder %v3505, %v332
          %vm3546 = vcmp.eq.s32.totalorder %v3508, %v332
          %vm3547 = vcmp.eq.s32.totalorder %v3511, %v332
          %vm3548 = vcmp.eq.s32.totalorder %v3514, %v332
          %vm3549 = vcmp.eq.s32.totalorder %v3517, %v332
          %vm3550 = vcmp.eq.s32.totalorder %v3520, %v332
          %vm3551 = vcmp.eq.s32.totalorder %v3523, %v332
          %vm3552 = vcmp.eq.s32.totalorder %v3526, %v332
          %vm3553 = vcmp.eq.s32.totalorder %v3529, %v332
          %vm3554 = vcmp.eq.s32.totalorder %v3532, %v332
          %vm3555 = vcmp.eq.s32.totalorder %v3535, %v332
          %vm3556 = vcmp.eq.s32.totalorder %v3538, %v332
          %vm3557 = vcmp.eq.s32.totalorder %v3541, %v332
          %v3558 = vsel %vm3542, 1.0, 0.0
          %v3559 = vsel %vm3543, 1.0, 0.0
          %v3560 = vsel %vm3544, 1.0, 0.0
          %v3561 = vsel %vm3545, 1.0, 0.0
          %v3562 = vsel %vm3546, 1.0, 0.0
          %v3563 = vsel %vm3547, 1.0, 0.0
          %v3564 = vsel %vm3548, 1.0, 0.0
          %v3565 = vsel %vm3549, 1.0, 0.0
          %v3566 = vsel %vm3550, 1.0, 0.0
          %v3567 = vsel %vm3551, 1.0, 0.0
          %v3568 = vsel %vm3552, 1.0, 0.0
          %v3569 = vsel %vm3553, 1.0, 0.0
          %v3570 = vsel %vm3554, 1.0, 0.0
          %v3571 = vsel %vm3555, 1.0, 0.0
          %v3572 = vsel %vm3556, 1.0, 0.0
          %v3573 = vsel %vm3557, 1.0, 0.0
          %v3574 = vadd.f32 %v3478, %v3558
          %v3575 = vadd.f32 %v3479, %v3559
          %v3576 = vadd.f32 %v3480, %v3560
          %v3577 = vadd.f32 %v3481, %v3561
          %v3578 = vadd.f32 %v3482, %v3562
          %v3579 = vadd.f32 %v3483, %v3563
          %v3580 = vadd.f32 %v3484, %v3564
          %v3581 = vadd.f32 %v3485, %v3565
          %v3582 = vadd.f32 %v3486, %v3566
          %v3583 = vadd.f32 %v3487, %v3567
          %v3584 = vadd.f32 %v3488, %v3568
          %v3585 = vadd.f32 %v3489, %v3569
          %v3586 = vadd.f32 %v3490, %v3570
          %v3587 = vadd.f32 %v3491, %v3571
          %v3588 = vadd.f32 %v3492, %v3572
          %v3589 = vadd.f32 %v3493, %v3573
          %v3590 = vadd.f32 %v3398, %v3574
          %v3591 = vadd.f32 %v3399, %v3575
          %v3592 = vadd.f32 %v3400, %v3576
          %v3593 = vadd.f32 %v3401, %v3577
          %v3594 = vadd.f32 %v3402, %v3578
          %v3595 = vadd.f32 %v3403, %v3579
          %v3596 = vadd.f32 %v3404, %v3580
          %v3597 = vadd.f32 %v3405, %v3581
          %v3598 = vadd.f32 %v3406, %v3582
          %v3599 = vadd.f32 %v3407, %v3583
          %v3600 = vadd.f32 %v3408, %v3584
          %v3601 = vadd.f32 %v3409, %v3585
          %v3602 = vadd.f32 %v3410, %v3586
          %v3603 = vadd.f32 %v3411, %v3587
          %v3604 = vadd.f32 %v3412, %v3588
          %v3605 = vadd.f32 %v3413, %v3589
          %3606 = vadd.xlane.f32.xlu0 %v2262
          %v3607 = vpop.xlane.xlu0 %3606
          %3608 = vadd.xlane.f32.xlu0 %v2263
          %v3609 = vpop.xlane.xlu0 %3608
          %3610 = vadd.xlane.f32.xlu0 %v2264
          %v3611 = vpop.xlane.xlu0 %3610
          %3612 = vadd.xlane.f32.xlu0 %v2265
          %v3613 = vpop.xlane.xlu0 %3612
          %3614 = vadd.xlane.f32.xlu0 %v2266
          %v3615 = vpop.xlane.xlu0 %3614
          %3616 = vadd.xlane.f32.xlu0 %v2267
          %v3617 = vpop.xlane.xlu0 %3616
          %3618 = vadd.xlane.f32.xlu0 %v2268
          %v3619 = vpop.xlane.xlu0 %3618
          %3620 = vadd.xlane.f32.xlu0 %v2269
          %v3621 = vpop.xlane.xlu0 %3620
          %3622 = vadd.xlane.f32.xlu0 %v2270
          %v3623 = vpop.xlane.xlu0 %3622
          %3624 = vadd.xlane.f32.xlu0 %v2271
          %v3625 = vpop.xlane.xlu0 %3624
          %3626 = vadd.xlane.f32.xlu0 %v2272
          %v3627 = vpop.xlane.xlu0 %3626
          %3628 = vadd.xlane.f32.xlu0 %v2273
          %v3629 = vpop.xlane.xlu0 %3628
          %3630 = vadd.xlane.f32.xlu0 %v2274
          %v3631 = vpop.xlane.xlu0 %3630
          %3632 = vadd.xlane.f32.xlu0 %v2275
          %v3633 = vpop.xlane.xlu0 %3632
          %3634 = vadd.xlane.f32.xlu0 %v2276
          %v3635 = vpop.xlane.xlu0 %3634
          %3636 = vadd.xlane.f32.xlu0 %v2277
          %v3637 = vpop.xlane.xlu0 %3636
          %v3638 = vcvt.f32.s32.to.zero.pseudo %v3607
          %v3639 = vcvt.f32.s32.to.zero.pseudo %v3609
          %v3640 = vcvt.f32.s32.to.zero.pseudo %v3611
          %v3641 = vcvt.f32.s32.to.zero.pseudo %v3613
          %v3642 = vcvt.f32.s32.to.zero.pseudo %v3615
          %v3643 = vcvt.f32.s32.to.zero.pseudo %v3617
          %v3644 = vcvt.f32.s32.to.zero.pseudo %v3619
          %v3645 = vcvt.f32.s32.to.zero.pseudo %v3621
          %v3646 = vcvt.f32.s32.to.zero.pseudo %v3623
          %v3647 = vcvt.f32.s32.to.zero.pseudo %v3625
          %v3648 = vcvt.f32.s32.to.zero.pseudo %v3627
          %v3649 = vcvt.f32.s32.to.zero.pseudo %v3629
          %v3650 = vcvt.f32.s32.to.zero.pseudo %v3631
          %v3651 = vcvt.f32.s32.to.zero.pseudo %v3633
          %v3652 = vcvt.f32.s32.to.zero.pseudo %v3635
          %v3653 = vcvt.f32.s32.to.zero.pseudo %v3637
          %vm3654 = vcmp.eq.s32.totalorder %v3638, %v331
          %vm3655 = vcmp.eq.s32.totalorder %v3639, %v331
          %vm3656 = vcmp.eq.s32.totalorder %v3640, %v331
          %vm3657 = vcmp.eq.s32.totalorder %v3641, %v331
          %vm3658 = vcmp.eq.s32.totalorder %v3642, %v331
          %vm3659 = vcmp.eq.s32.totalorder %v3643, %v331
          %vm3660 = vcmp.eq.s32.totalorder %v3644, %v331
          %vm3661 = vcmp.eq.s32.totalorder %v3645, %v331
          %vm3662 = vcmp.eq.s32.totalorder %v3646, %v331
          %vm3663 = vcmp.eq.s32.totalorder %v3647, %v331
          %vm3664 = vcmp.eq.s32.totalorder %v3648, %v331
          %vm3665 = vcmp.eq.s32.totalorder %v3649, %v331
          %vm3666 = vcmp.eq.s32.totalorder %v3650, %v331
          %vm3667 = vcmp.eq.s32.totalorder %v3651, %v331
          %vm3668 = vcmp.eq.s32.totalorder %v3652, %v331
          %vm3669 = vcmp.eq.s32.totalorder %v3653, %v331
          %v3670 = vsel %vm3654, 1.0, 0.0
          %v3671 = vsel %vm3655, 1.0, 0.0
          %v3672 = vsel %vm3656, 1.0, 0.0
          %v3673 = vsel %vm3657, 1.0, 0.0
          %v3674 = vsel %vm3658, 1.0, 0.0
          %v3675 = vsel %vm3659, 1.0, 0.0
          %v3676 = vsel %vm3660, 1.0, 0.0
          %v3677 = vsel %vm3661, 1.0, 0.0
          %v3678 = vsel %vm3662, 1.0, 0.0
          %v3679 = vsel %vm3663, 1.0, 0.0
          %v3680 = vsel %vm3664, 1.0, 0.0
          %v3681 = vsel %vm3665, 1.0, 0.0
          %v3682 = vsel %vm3666, 1.0, 0.0
          %v3683 = vsel %vm3667, 1.0, 0.0
          %v3684 = vsel %vm3668, 1.0, 0.0
          %v3685 = vsel %vm3669, 1.0, 0.0
          %v3686 = vpack.c.bf16 %v2263, %v2262
          %v3687 = vpack.c.bf16 %v2265, %v2264
          %v3688 = vpack.c.bf16 %v2267, %v2266
          %v3689 = vpack.c.bf16 %v2269, %v2268
          %v3690 = vpack.c.bf16 %v2271, %v2270
          %v3691 = vpack.c.bf16 %v2273, %v2272
          %v3692 = vpack.c.bf16 %v2275, %v2274
          %v3693 = vpack.c.bf16 %v2277, %v2276
          %v3694 = vpack.c.bf16 %v3591, %v3590
          %v3695 = vpack.c.bf16 %v3593, %v3592
          %v3696 = vpack.c.bf16 %v3595, %v3594
          %v3697 = vpack.c.bf16 %v3597, %v3596
          %v3698 = vpack.c.bf16 %v3599, %v3598
          %v3699 = vpack.c.bf16 %v3601, %v3600
          %v3700 = vpack.c.bf16 %v3603, %v3602
          %v3701 = vpack.c.bf16 %v3605, %v3604
          %v3702 = vpack.c.bf16 %v3671, %v3670
          %v3703 = vpack.c.bf16 %v3673, %v3672
          %v3704 = vpack.c.bf16 %v3675, %v3674
          %v3705 = vpack.c.bf16 %v3677, %v3676
          %v3706 = vpack.c.bf16 %v3679, %v3678
          %v3707 = vpack.c.bf16 %v3681, %v3680
          %v3708 = vpack.c.bf16 %v3683, %v3682
          %v3709 = vpack.c.bf16 %v3685, %v3684
          %v3710 = vld [vmem:[%s2] sm:$0xf]
          %v3711 = vld [vmem:[%s2 + $0x4] sm:$0xf]
          %v3712 = vld [vmem:[%s2 + $0x8] sm:$0xf]
          %v3713 = vld [vmem:[%s2 + $0xc] sm:$0xf]
          %v3714 = vld [vmem:[%s2 + $0x10] sm:$0xf]
          %v3715 = vld [vmem:[%s2 + $0x14] sm:$0xf]
          %v3716 = vld [vmem:[%s2 + $0x18] sm:$0xf]
          %v3717 = vld [vmem:[%s2 + $0x1c] sm:$0xf]
          %v3718 = vld [vmem:[%s2 + $0x20] sm:$0xf]
          %v3719 = vld [vmem:[%s2 + $0x24] sm:$0xf]
          %v3720 = vld [vmem:[%s2 + $0x28] sm:$0xf]
          %v3721 = vld [vmem:[%s2 + $0x2c] sm:$0xf]
          %v3722 = vld [vmem:[%s2 + $0x30] sm:$0xf]
          %v3723 = vld [vmem:[%s2 + $0x34] sm:$0xf]
          %v3724 = vld [vmem:[%s2 + $0x38] sm:$0xf]
          %v3725 = vld [vmem:[%s2 + $0x3c] sm:$0xf]
          %v3726 = vld [vmem:[%s2 + $0x40] sm:$0xf]
          %v3727 = vld [vmem:[%s2 + $0x44] sm:$0xf]
          %v3728 = vld [vmem:[%s2 + $0x48] sm:$0xf]
          %v3729 = vld [vmem:[%s2 + $0x4c] sm:$0xf]
          %v3730 = vld [vmem:[%s2 + $0x50] sm:$0xf]
          %v3731 = vld [vmem:[%s2 + $0x54] sm:$0xf]
          %v3732 = vld [vmem:[%s2 + $0x58] sm:$0xf]
          %v3733 = vld [vmem:[%s2 + $0x5c] sm:$0xf]
          %v3734 = vld [vmem:[%s2 + $0x60] sm:$0xf]
          %v3735 = vld [vmem:[%s2 + $0x64] sm:$0xf]
          %v3736 = vld [vmem:[%s2 + $0x68] sm:$0xf]
          %v3737 = vld [vmem:[%s2 + $0x6c] sm:$0xf]
          %v3738 = vld [vmem:[%s2 + $0x70] sm:$0xf]
          %v3739 = vld [vmem:[%s2 + $0x74] sm:$0xf]
          %v3740 = vld [vmem:[%s2 + $0x78] sm:$0xf]
          %v3741 = vld [vmem:[%s2 + $0x7c] sm:$0xf]
          %v3742 = vld [vmem:[%s2 + $0x80] sm:$0xf]
          %v3743 = vld [vmem:[%s2 + $0x84] sm:$0xf]
          %v3744 = vld [vmem:[%s2 + $0x88] sm:$0xf]
          %v3745 = vld [vmem:[%s2 + $0x8c] sm:$0xf]
          %v3746 = vld [vmem:[%s2 + $0x90] sm:$0xf]
          %v3747 = vld [vmem:[%s2 + $0x94] sm:$0xf]
          %v3748 = vld [vmem:[%s2 + $0x98] sm:$0xf]
          %v3749 = vld [vmem:[%s2 + $0x9c] sm:$0xf]
          %v3750 = vld [vmem:[%s2 + $0xa0] sm:$0xf]
          %v3751 = vld [vmem:[%s2 + $0xa4] sm:$0xf]
          %v3752 = vld [vmem:[%s2 + $0xa8] sm:$0xf]
          %v3753 = vld [vmem:[%s2 + $0xac] sm:$0xf]
          %v3754 = vld [vmem:[%s2 + $0xb0] sm:$0xf]
          %v3755 = vld [vmem:[%s2 + $0xb4] sm:$0xf]
          %v3756 = vld [vmem:[%s2 + $0xb8] sm:$0xf]
          %v3757 = vld [vmem:[%s2 + $0xbc] sm:$0xf]
          %v3758 = vld [vmem:[%s3] sm:$0x1]
          %v3760 = vlaneseq
          %v3761 = vshrl.u32 %v3760, 7
          %v3762 = vsub.s32 0, %v3761
          %v3763 = vrot.slane %v3758, %v3762
          %v3813 = vunpack.c.l.b16 %v3710
          %v3814 = vunpack.c.l.b16 %v3711
          %v3815 = vunpack.c.l.b16 %v3712
          %v3816 = vunpack.c.l.b16 %v3713
          %v3817 = vunpack.c.l.b16 %v3714
          %v3818 = vunpack.c.l.b16 %v3715
          %v3819 = vunpack.c.l.b16 %v3716
          %v3820 = vunpack.c.l.b16 %v3717
          %v3821 = vunpack.c.l.b16 %v3718
          %v3822 = vunpack.c.l.b16 %v3719
          %v3823 = vunpack.c.l.b16 %v3720
          %v3824 = vunpack.c.l.b16 %v3721
          %v3825 = vunpack.c.l.b16 %v3722
          %v3826 = vunpack.c.l.b16 %v3723
          %v3827 = vunpack.c.l.b16 %v3724
          %v3828 = vunpack.c.l.b16 %v3725
          %v3829 = vunpack.c.l.b16 %v3726
          %v3830 = vunpack.c.l.b16 %v3727
          %v3831 = vunpack.c.l.b16 %v3728
          %v3832 = vunpack.c.l.b16 %v3729
          %v3833 = vunpack.c.l.b16 %v3730
          %v3834 = vunpack.c.l.b16 %v3731
          %v3835 = vunpack.c.l.b16 %v3732
          %v3836 = vunpack.c.l.b16 %v3733
          %v3837 = vunpack.c.l.b16 %v3734
          %v3838 = vunpack.c.l.b16 %v3735
          %v3839 = vunpack.c.l.b16 %v3736
          %v3840 = vunpack.c.l.b16 %v3737
          %v3841 = vunpack.c.l.b16 %v3738
          %v3842 = vunpack.c.l.b16 %v3739
          %v3843 = vunpack.c.l.b16 %v3740
          %v3844 = vunpack.c.l.b16 %v3741
          %v3845 = vunpack.c.l.b16 %v3742
          %v3846 = vunpack.c.l.b16 %v3743
          %v3847 = vunpack.c.l.b16 %v3744
          %v3848 = vunpack.c.l.b16 %v3745
          %v3849 = vunpack.c.l.b16 %v3746
          %v3850 = vunpack.c.l.b16 %v3747
          %v3851 = vunpack.c.l.b16 %v3748
          %v3852 = vunpack.c.l.b16 %v3749
          %v3853 = vunpack.c.l.b16 %v3750
          %v3854 = vunpack.c.l.b16 %v3751
          %v3855 = vunpack.c.l.b16 %v3752
          %v3856 = vunpack.c.l.b16 %v3753
          %v3857 = vunpack.c.l.b16 %v3754
          %v3858 = vunpack.c.l.b16 %v3755
          %v3859 = vunpack.c.l.b16 %v3756
          %v3860 = vunpack.c.l.b16 %v3757
          %v3861 = vpack.c.b16 %v3814, %v3813
          %v3862 = vpack.c.b16 %v3816, %v3815
          %v3863 = vpack.c.b16 %v3818, %v3817
          %v3864 = vpack.c.b16 %v3820, %v3819
          %v3865 = vpack.c.b16 %v3822, %v3821
          %v3866 = vpack.c.b16 %v3824, %v3823
          %v3867 = vpack.c.b16 %v3826, %v3825
          %v3868 = vpack.c.b16 %v3828, %v3827
          %v3869 = vpack.c.b16 %v3830, %v3829
          %v3870 = vpack.c.b16 %v3832, %v3831
          %v3871 = vpack.c.b16 %v3834, %v3833
          %v3872 = vpack.c.b16 %v3836, %v3835
          %v3873 = vpack.c.b16 %v3838, %v3837
          %v3874 = vpack.c.b16 %v3840, %v3839
          %v3875 = vpack.c.b16 %v3842, %v3841
          %v3876 = vpack.c.b16 %v3844, %v3843
          %v3877 = vpack.c.b16 %v3846, %v3845
          %v3878 = vpack.c.b16 %v3848, %v3847
          %v3879 = vpack.c.b16 %v3850, %v3849
          %v3880 = vpack.c.b16 %v3852, %v3851
          %v3881 = vpack.c.b16 %v3854, %v3853
          %v3882 = vpack.c.b16 %v3856, %v3855
          %v3883 = vpack.c.b16 %v3858, %v3857
          %v3884 = vpack.c.b16 %v3860, %v3859
          %3909 = vmatprep.subr.bf16.mxu0 0
          %3910 = vmatpush1.bf16.msra.mxu0 %v3861
          %3911 = vmatprep.subr.bf16.mxu0 0
          %3912 = vmatpush1.bf16.msra.mxu0 %v3862
          %3913 = vmatprep.subr.bf16.mxu0 0
          %3914 = vmatpush1.bf16.msra.mxu0 %v3863
          %3915 = vmatprep.subr.bf16.mxu0 0
          %3916 = vmatpush1.bf16.msra.mxu0 %v3864
          %3917 = vmatprep.subr.bf16.mxu0 0
          %3918 = vmatpush1.bf16.msra.mxu0 %v3865
          %3919 = vmatprep.subr.bf16.mxu0 0
          %3920 = vmatpush1.bf16.msra.mxu0 %v3866
          %3921 = vmatprep.subr.bf16.mxu0 0
          %3922 = vmatpush1.bf16.msra.mxu0 %v3867
          %3923 = vmatprep.subr.bf16.mxu0 0
          %3924 = vmatpush1.bf16.msra.mxu0 %v3868
          %3925 = vmatprep.subr.bf16.mxu0 0
          %3926 = vmatpush1.bf16.msra.mxu0 %v3869
          %3927 = vmatprep.subr.bf16.mxu0 0
          %3928 = vmatpush1.bf16.msra.mxu0 %v3870
          %3929 = vmatprep.subr.bf16.mxu0 0
          %3930 = vmatpush1.bf16.msra.mxu0 %v3871
          %3931 = vmatprep.subr.bf16.mxu0 0
          %3932 = vmatpush1.bf16.msra.mxu0 %v3872
          %3933 = vmatprep.subr.bf16.mxu0 0
          %3934 = vmatpush1.bf16.msra.mxu0 %v3873
          %3935 = vmatprep.subr.bf16.mxu0 0
          %3936 = vmatpush1.bf16.msra.mxu0 %v3874
          %3937 = vmatprep.subr.bf16.mxu0 0
          %3938 = vmatpush1.bf16.msra.mxu0 %v3875
          %3939 = vmatprep.subr.bf16.mxu0 0
          %3940 = vmatpush1.bf16.msra.mxu0 %v3876
          %3941 = vmatprep.mubr.bf16.mxu0 %v3694
          %3942 = vmatmul.mubr.bf16.gmra.mrb[0].mxu0 %v3686
          %v3943 = vpop.f32.mrb[0].mxu0
          %v3944 = vadd.f32 %v3763, %v3943
          %v3945 = vpop.f32.mrb[0].mxu0
          %v3946 = vpop.f32.mrb[0].mxu0
          %v3947 = vadd.f32 %v3763, %v3946
          %v3948 = vpop.f32.mrb[0].mxu0
          %3949 = vmatprep.mubr.bf16.mxu0 %v3695
          %3950 = vmatmul.mubr.bf16.gmra.mrb[0].mxu0 %v3687
          %v3951 = vpop.f32.mrb[0].mxu0
          %v3952 = vadd.f32 %v3763, %v3951
          %v3953 = vpop.f32.mrb[0].mxu0
          %v3954 = vpop.f32.mrb[0].mxu0
          %v3955 = vadd.f32 %v3763, %v3954
          %v3956 = vpop.f32.mrb[0].mxu0
          %3957 = vmatprep.mubr.bf16.mxu0 %v3696
          %3958 = vmatmul.mubr.bf16.gmra.mrb[0].mxu0 %v3688
          %v3959 = vpop.f32.mrb[0].mxu0
          %v3960 = vadd.f32 %v3763, %v3959
          %v3961 = vpop.f32.mrb[0].mxu0
          %v3962 = vpop.f32.mrb[0].mxu0
          %v3963 = vadd.f32 %v3763, %v3962
          %v3964 = vpop.f32.mrb[0].mxu0
          %3965 = vmatprep.mubr.bf16.mxu0 %v3697
          %3966 = vmatmul.mubr.bf16.gmra.mrb[0].mxu0 %v3689
          %v3967 = vpop.f32.mrb[0].mxu0
          %v3968 = vadd.f32 %v3763, %v3967
          %v3969 = vpop.f32.mrb[0].mxu0
          %v3970 = vpop.f32.mrb[0].mxu0
          %v3971 = vadd.f32 %v3763, %v3970
          %v3972 = vpop.f32.mrb[0].mxu0
          %3973 = vmatprep.mubr.bf16.mxu0 %v3698
          %3974 = vmatmul.mubr.bf16.gmra.mrb[0].mxu0 %v3690
          %v3975 = vpop.f32.mrb[0].mxu0
          %v3976 = vadd.f32 %v3763, %v3975
          %v3977 = vpop.f32.mrb[0].mxu0
          %v3978 = vpop.f32.mrb[0].mxu0
          %v3979 = vadd.f32 %v3763, %v3978
          %v3980 = vpop.f32.mrb[0].mxu0
          %3981 = vmatprep.mubr.bf16.mxu0 %v3699
          %3982 = vmatmul.mubr.bf16.gmra.mrb[0].mxu0 %v3691
          %v3983 = vpop.f32.mrb[0].mxu0
          %v3984 = vadd.f32 %v3763, %v3983
          %v3985 = vpop.f32.mrb[0].mxu0
          %v3986 = vpop.f32.mrb[0].mxu0
          %v3987 = vadd.f32 %v3763, %v3986
          %v3988 = vpop.f32.mrb[0].mxu0
          %3989 = vmatprep.mubr.bf16.mxu0 %v3700
          %3990 = vmatmul.mubr.bf16.gmra.mrb[0].mxu0 %v3692
          %v3991 = vpop.f32.mrb[0].mxu0
          %v3992 = vadd.f32 %v3763, %v3991
          %v3993 = vpop.f32.mrb[0].mxu0
          %v3994 = vpop.f32.mrb[0].mxu0
          %v3995 = vadd.f32 %v3763, %v3994
          %v3996 = vpop.f32.mrb[0].mxu0
          %3997 = vmatprep.mubr.bf16.mxu0 %v3701
          %3998 = vmatmul.mubr.bf16.gmra.mrb[0].mxu0 %v3693
          %v3999 = vpop.f32.mrb[0].mxu0
          %v4000 = vadd.f32 %v3763, %v3999
          %v4001 = vpop.f32.mrb[0].mxu0
          %v4002 = vpop.f32.mrb[0].mxu0
          %v4003 = vadd.f32 %v3763, %v4002
          %v4004 = vpop.f32.mrb[0].mxu0
          %4005 = vdwg.mxu0
          %4006 = vmatprep.subr.bf16.mxu0 0
          %4007 = vmatpush1.bf16.msra.mxu0 %v3877
          %4008 = vmatprep.subr.bf16.mxu0 0
          %4009 = vmatpush1.bf16.msra.mxu0 %v3878
          %4010 = vmatprep.subr.bf16.mxu0 0
          %4011 = vmatpush1.bf16.msra.mxu0 %v3879
          %4012 = vmatprep.subr.bf16.mxu0 0
          %4013 = vmatpush1.bf16.msra.mxu0 %v3880
          %4014 = vmatprep.subr.bf16.mxu0 0
          %4015 = vmatpush1.bf16.msra.mxu0 %v3881
          %4016 = vmatprep.subr.bf16.mxu0 0
          %4017 = vmatpush1.bf16.msra.mxu0 %v3882
          %4018 = vmatprep.subr.bf16.mxu0 0
          %4019 = vmatpush1.bf16.msra.mxu0 %v3883
          %4020 = vmatprep.subr.bf16.mxu0 0
          %4021 = vmatpush1.bf16.msra.mxu0 %v3884
          %4022 = vmatprep.subr.bf16.mxu0 0
          %4023 = vmatpush1.bf16.msra.mxu0 0
          %4024 = vmatprep.subr.bf16.mxu0 0
          %4025 = vmatpush1.bf16.msra.mxu0 0
          %4026 = vmatprep.subr.bf16.mxu0 0
          %4027 = vmatpush1.bf16.msra.mxu0 0
          %4028 = vmatprep.subr.bf16.mxu0 0
          %4029 = vmatpush1.bf16.msra.mxu0 0
          %4030 = vmatprep.subr.bf16.mxu0 0
          %4031 = vmatpush1.bf16.msra.mxu0 0
          %4032 = vmatprep.subr.bf16.mxu0 0
          %4033 = vmatpush1.bf16.msra.mxu0 0
          %4034 = vmatprep.subr.bf16.mxu0 0
          %4035 = vmatpush1.bf16.msra.mxu0 0
          %4036 = vmatprep.subr.bf16.mxu0 0
          %4037 = vmatpush1.bf16.msra.mxu0 0
          %4038 = vmatprep.mubr.bf16.mxu0 0
          %4039 = vmatmul.mubr.bf16.gmra.mrb[0].mxu0 %v3702
          %v4040 = vpop.f32.mrb[0].mxu0
          %v4041 = vadd.f32 %v3944, %v4040
          %v4042 = vpop.f32.mrb[0].mxu0
          %v4043 = vpop.f32.mrb[0].mxu0
          %v4044 = vadd.f32 %v3947, %v4043
          %v4045 = vpop.f32.mrb[0].mxu0
          %4046 = vmatprep.mubr.bf16.mxu0 0
          %4047 = vmatmul.mubr.bf16.gmra.mrb[0].mxu0 %v3703
          %v4048 = vpop.f32.mrb[0].mxu0
          %v4049 = vadd.f32 %v3952, %v4048
          %v4050 = vpop.f32.mrb[0].mxu0
          %v4051 = vpop.f32.mrb[0].mxu0
          %v4052 = vadd.f32 %v3955, %v4051
          %v4053 = vpop.f32.mrb[0].mxu0
          %4054 = vmatprep.mubr.bf16.mxu0 0
          %4055 = vmatmul.mubr.bf16.gmra.mrb[0].mxu0 %v3704
          %v4056 = vpop.f32.mrb[0].mxu0
          %v4057 = vadd.f32 %v3960, %v4056
          %v4058 = vpop.f32.mrb[0].mxu0
          %v4059 = vpop.f32.mrb[0].mxu0
          %v4060 = vadd.f32 %v3963, %v4059
          %v4061 = vpop.f32.mrb[0].mxu0
          %4062 = vmatprep.mubr.bf16.mxu0 0
          %4063 = vmatmul.mubr.bf16.gmra.mrb[0].mxu0 %v3705
          %v4064 = vpop.f32.mrb[0].mxu0
          %v4065 = vadd.f32 %v3968, %v4064
          %v4066 = vpop.f32.mrb[0].mxu0
          %v4067 = vpop.f32.mrb[0].mxu0
          %v4068 = vadd.f32 %v3971, %v4067
          %v4069 = vpop.f32.mrb[0].mxu0
          %4070 = vmatprep.mubr.bf16.mxu0 0
          %4071 = vmatmul.mubr.bf16.gmra.mrb[0].mxu0 %v3706
          %v4072 = vpop.f32.mrb[0].mxu0
          %v4073 = vadd.f32 %v3976, %v4072
          %v4074 = vpop.f32.mrb[0].mxu0
          %v4075 = vpop.f32.mrb[0].mxu0
          %v4076 = vadd.f32 %v3979, %v4075
          %v4077 = vpop.f32.mrb[0].mxu0
          %4078 = vmatprep.mubr.bf16.mxu0 0
          %4079 = vmatmul.mubr.bf16.gmra.mrb[0].mxu0 %v3707
          %v4080 = vpop.f32.mrb[0].mxu0
          %v4081 = vadd.f32 %v3984, %v4080
          %v4082 = vpop.f32.mrb[0].mxu0
          %v4083 = vpop.f32.mrb[0].mxu0
          %v4084 = vadd.f32 %v3987, %v4083
          %v4085 = vpop.f32.mrb[0].mxu0
          %4086 = vmatprep.mubr.bf16.mxu0 0
          %4087 = vmatmul.mubr.bf16.gmra.mrb[0].mxu0 %v3708
          %v4088 = vpop.f32.mrb[0].mxu0
          %v4089 = vadd.f32 %v3992, %v4088
          %v4090 = vpop.f32.mrb[0].mxu0
          %v4091 = vpop.f32.mrb[0].mxu0
          %v4092 = vadd.f32 %v3995, %v4091
          %v4093 = vpop.f32.mrb[0].mxu0
          %4094 = vmatprep.mubr.bf16.mxu0 0
          %4095 = vmatmul.mubr.bf16.gmra.mrb[0].mxu0 %v3709
          %v4096 = vpop.f32.mrb[0].mxu0
          %v4097 = vadd.f32 %v4000, %v4096
          %v4098 = vpop.f32.mrb[0].mxu0
          %v4099 = vpop.f32.mrb[0].mxu0
          %v4100 = vadd.f32 %v4003, %v4099
          %v4101 = vpop.f32.mrb[0].mxu0
          %4102 = vdwg.mxu0
          %v4103 = vmax.f32 %v4041, 0.0
          %v4104 = vmax.f32 %v4044, 0.0
          %v4105 = vmax.f32 %v4049, 0.0
          %v4106 = vmax.f32 %v4052, 0.0
          %v4107 = vmax.f32 %v4057, 0.0
          %v4108 = vmax.f32 %v4060, 0.0
          %v4109 = vmax.f32 %v4065, 0.0
          %v4110 = vmax.f32 %v4068, 0.0
          %v4111 = vmax.f32 %v4073, 0.0
          %v4112 = vmax.f32 %v4076, 0.0
          %v4113 = vmax.f32 %v4081, 0.0
          %v4114 = vmax.f32 %v4084, 0.0
          %v4115 = vmax.f32 %v4089, 0.0
          %v4116 = vmax.f32 %v4092, 0.0
          %v4117 = vmax.f32 %v4097, 0.0
          %v4118 = vmax.f32 %v4100, 0.0
          %v4119 = vpack.c.bf16 %v4104, %v4103
          %v4120 = vpack.c.bf16 %v4106, %v4105
          %v4121 = vpack.c.bf16 %v4108, %v4107
          %v4122 = vpack.c.bf16 %v4110, %v4109
          %v4123 = vpack.c.bf16 %v4112, %v4111
          %v4124 = vpack.c.bf16 %v4114, %v4113
          %v4125 = vpack.c.bf16 %v4116, %v4115
          %v4126 = vpack.c.bf16 %v4118, %v4117
          %v4127 = vld [vmem:[%s4] sm:$0xf]
          %v4128 = vld [vmem:[%s4 + $0x4] sm:$0xf]
          %v4129 = vld [vmem:[%s4 + $0x8] sm:$0xf]
          %v4130 = vld [vmem:[%s4 + $0xc] sm:$0xf]
          %v4131 = vld [vmem:[%s4 + $0x10] sm:$0xf]
          %v4132 = vld [vmem:[%s4 + $0x14] sm:$0xf]
          %v4133 = vld [vmem:[%s4 + $0x18] sm:$0xf]
          %v4134 = vld [vmem:[%s4 + $0x1c] sm:$0xf]
          %v4135 = vld [vmem:[%s4 + $0x20] sm:$0xf]
          %v4136 = vld [vmem:[%s4 + $0x24] sm:$0xf]
          %v4137 = vld [vmem:[%s4 + $0x28] sm:$0xf]
          %v4138 = vld [vmem:[%s4 + $0x2c] sm:$0xf]
          %v4139 = vld [vmem:[%s4 + $0x30] sm:$0xf]
          %v4140 = vld [vmem:[%s4 + $0x34] sm:$0xf]
          %v4141 = vld [vmem:[%s4 + $0x38] sm:$0xf]
          %v4142 = vld [vmem:[%s4 + $0x3c] sm:$0xf]
          %v4143 = vld [vmem:[%s5] sm:$0x1]
          %v4145 = vlaneseq
          %v4146 = vshrl.u32 %v4145, 7
          %v4147 = vsub.s32 0, %v4146
          %v4148 = vrot.slane %v4143, %v4147
          %v4166 = vunpack.c.l.b16 %v4127
          %v4167 = vunpack.c.l.b16 %v4128
          %v4168 = vunpack.c.l.b16 %v4129
          %v4169 = vunpack.c.l.b16 %v4130
          %v4170 = vunpack.c.l.b16 %v4131
          %v4171 = vunpack.c.l.b16 %v4132
          %v4172 = vunpack.c.l.b16 %v4133
          %v4173 = vunpack.c.l.b16 %v4134
          %v4174 = vunpack.c.l.b16 %v4135
          %v4175 = vunpack.c.l.b16 %v4136
          %v4176 = vunpack.c.l.b16 %v4137
          %v4177 = vunpack.c.l.b16 %v4138
          %v4178 = vunpack.c.l.b16 %v4139
          %v4179 = vunpack.c.l.b16 %v4140
          %v4180 = vunpack.c.l.b16 %v4141
          %v4181 = vunpack.c.l.b16 %v4142
          %v4182 = vpack.c.b16 %v4167, %v4166
          %v4183 = vpack.c.b16 %v4169, %v4168
          %v4184 = vpack.c.b16 %v4171, %v4170
          %v4185 = vpack.c.b16 %v4173, %v4172
          %v4186 = vpack.c.b16 %v4175, %v4174
          %v4187 = vpack.c.b16 %v4177, %v4176
          %v4188 = vpack.c.b16 %v4179, %v4178
          %v4189 = vpack.c.b16 %v4181, %v4180
          %4198 = vmatprep.subr.bf16.mxu0 0
          %4199 = vmatpush1.bf16.msra.mxu0 %v4182
          %4200 = vmatprep.subr.bf16.mxu0 0
          %4201 = vmatpush1.bf16.msra.mxu0 %v4183
          %4202 = vmatprep.subr.bf16.mxu0 0
          %4203 = vmatpush1.bf16.msra.mxu0 %v4184
          %4204 = vmatprep.subr.bf16.mxu0 0
          %4205 = vmatpush1.bf16.msra.mxu0 %v4185
          %4206 = vmatprep.subr.bf16.mxu0 0
          %4207 = vmatpush1.bf16.msra.mxu0 %v4186
          %4208 = vmatprep.subr.bf16.mxu0 0
          %4209 = vmatpush1.bf16.msra.mxu0 %v4187
          %4210 = vmatprep.subr.bf16.mxu0 0
          %4211 = vmatpush1.bf16.msra.mxu0 %v4188
          %4212 = vmatprep.subr.bf16.mxu0 0
          %4213 = vmatpush1.bf16.msra.mxu0 %v4189
          %4214 = vmatprep.subr.bf16.mxu0 0
          %4215 = vmatpush1.bf16.msra.mxu0 0
          %4216 = vmatprep.subr.bf16.mxu0 0
          %4217 = vmatpush1.bf16.msra.mxu0 0
          %4218 = vmatprep.subr.bf16.mxu0 0
          %4219 = vmatpush1.bf16.msra.mxu0 0
          %4220 = vmatprep.subr.bf16.mxu0 0
          %4221 = vmatpush1.bf16.msra.mxu0 0
          %4222 = vmatprep.subr.bf16.mxu0 0
          %4223 = vmatpush1.bf16.msra.mxu0 0
          %4224 = vmatprep.subr.bf16.mxu0 0
          %4225 = vmatpush1.bf16.msra.mxu0 0
          %4226 = vmatprep.subr.bf16.mxu0 0
          %4227 = vmatpush1.bf16.msra.mxu0 0
          %4228 = vmatprep.subr.bf16.mxu0 0
          %4229 = vmatpush1.bf16.msra.mxu0 0
          %4230 = vmatprep.mubr.bf16.mxu0 0
          %4231 = vmatmul.mubr.bf16.gmra.mrb[0].mxu0 %v4119
          %v4232 = vpop.f32.mrb[0].mxu0
          %v4233 = vadd.f32 %v4148, %v4232
          %v4234 = vpop.f32.mrb[0].mxu0
          %v4235 = vpop.f32.mrb[0].mxu0
          %v4236 = vadd.f32 %v4148, %v4235
          %v4237 = vpop.f32.mrb[0].mxu0
          %4238 = vmatprep.mubr.bf16.mxu0 0
          %4239 = vmatmul.mubr.bf16.gmra.mrb[0].mxu0 %v4120
          %v4240 = vpop.f32.mrb[0].mxu0
          %v4241 = vadd.f32 %v4148, %v4240
          %v4242 = vpop.f32.mrb[0].mxu0
          %v4243 = vpop.f32.mrb[0].mxu0
          %v4244 = vadd.f32 %v4148, %v4243
          %v4245 = vpop.f32.mrb[0].mxu0
          %4246 = vmatprep.mubr.bf16.mxu0 0
          %4247 = vmatmul.mubr.bf16.gmra.mrb[0].mxu0 %v4121
          %v4248 = vpop.f32.mrb[0].mxu0
          %v4249 = vadd.f32 %v4148, %v4248
          %v4250 = vpop.f32.mrb[0].mxu0
          %v4251 = vpop.f32.mrb[0].mxu0
          %v4252 = vadd.f32 %v4148, %v4251
          %v4253 = vpop.f32.mrb[0].mxu0
          %4254 = vmatprep.mubr.bf16.mxu0 0
          %4255 = vmatmul.mubr.bf16.gmra.mrb[0].mxu0 %v4122
          %v4256 = vpop.f32.mrb[0].mxu0
          %v4257 = vadd.f32 %v4148, %v4256
          %v4258 = vpop.f32.mrb[0].mxu0
          %v4259 = vpop.f32.mrb[0].mxu0
          %v4260 = vadd.f32 %v4148, %v4259
          %v4261 = vpop.f32.mrb[0].mxu0
          %4262 = vmatprep.mubr.bf16.mxu0 0
          %4263 = vmatmul.mubr.bf16.gmra.mrb[0].mxu0 %v4123
          %v4264 = vpop.f32.mrb[0].mxu0
          %v4265 = vadd.f32 %v4148, %v4264
          %v4266 = vpop.f32.mrb[0].mxu0
          %v4267 = vpop.f32.mrb[0].mxu0
          %v4268 = vadd.f32 %v4148, %v4267
          %v4269 = vpop.f32.mrb[0].mxu0
          %4270 = vmatprep.mubr.bf16.mxu0 0
          %4271 = vmatmul.mubr.bf16.gmra.mrb[0].mxu0 %v4124
          %v4272 = vpop.f32.mrb[0].mxu0
          %v4273 = vadd.f32 %v4148, %v4272
          %v4274 = vpop.f32.mrb[0].mxu0
          %v4275 = vpop.f32.mrb[0].mxu0
          %v4276 = vadd.f32 %v4148, %v4275
          %v4277 = vpop.f32.mrb[0].mxu0
          %4278 = vmatprep.mubr.bf16.mxu0 0
          %4279 = vmatmul.mubr.bf16.gmra.mrb[0].mxu0 %v4125
          %v4280 = vpop.f32.mrb[0].mxu0
          %v4281 = vadd.f32 %v4148, %v4280
          %v4282 = vpop.f32.mrb[0].mxu0
          %v4283 = vpop.f32.mrb[0].mxu0
          %v4284 = vadd.f32 %v4148, %v4283
          %v4285 = vpop.f32.mrb[0].mxu0
          %4286 = vmatprep.mubr.bf16.mxu0 0
          %4287 = vmatmul.mubr.bf16.gmra.mrb[0].mxu0 %v4126
          %v4288 = vpop.f32.mrb[0].mxu0
          %v4289 = vadd.f32 %v4148, %v4288
          %v4290 = vpop.f32.mrb[0].mxu0
          %v4291 = vpop.f32.mrb[0].mxu0
          %v4292 = vadd.f32 %v4148, %v4291
          %v4293 = vpop.f32.mrb[0].mxu0
          %4294 = vdwg.mxu0
          %v4295 = vmax.f32 %v4233, 0.0
          %v4296 = vmax.f32 %v4236, 0.0
          %v4297 = vmax.f32 %v4241, 0.0
          %v4298 = vmax.f32 %v4244, 0.0
          %v4299 = vmax.f32 %v4249, 0.0
          %v4300 = vmax.f32 %v4252, 0.0
          %v4301 = vmax.f32 %v4257, 0.0
          %v4302 = vmax.f32 %v4260, 0.0
          %v4303 = vmax.f32 %v4265, 0.0
          %v4304 = vmax.f32 %v4268, 0.0
          %v4305 = vmax.f32 %v4273, 0.0
          %v4306 = vmax.f32 %v4276, 0.0
          %v4307 = vmax.f32 %v4281, 0.0
          %v4308 = vmax.f32 %v4284, 0.0
          %v4309 = vmax.f32 %v4289, 0.0
          %v4310 = vmax.f32 %v4292, 0.0
          %v4311 = vpack.c.bf16 %v4296, %v4295
          %v4312 = vpack.c.bf16 %v4298, %v4297
          %v4313 = vpack.c.bf16 %v4300, %v4299
          %v4314 = vpack.c.bf16 %v4302, %v4301
          %v4315 = vpack.c.bf16 %v4304, %v4303
          %v4316 = vpack.c.bf16 %v4306, %v4305
          %v4317 = vpack.c.bf16 %v4308, %v4307
          %v4318 = vpack.c.bf16 %v4310, %v4309
          %v4319 = vld [vmem:[%s6] sm:$0xf]
          %v4320 = vld [vmem:[%s6 + $0x4] sm:$0xf]
          %v4321 = vld [vmem:[%s6 + $0x8] sm:$0xf]
          %v4322 = vld [vmem:[%s6 + $0xc] sm:$0xf]
          %v4323 = vld [vmem:[%s6 + $0x10] sm:$0xf]
          %v4324 = vld [vmem:[%s6 + $0x14] sm:$0xf]
          %v4325 = vld [vmem:[%s6 + $0x18] sm:$0xf]
          %v4326 = vld [vmem:[%s6 + $0x1c] sm:$0xf]
          %v4327 = vld [vmem:[%s6 + $0x20] sm:$0xf]
          %v4328 = vld [vmem:[%s6 + $0x24] sm:$0xf]
          %v4329 = vld [vmem:[%s6 + $0x28] sm:$0xf]
          %v4330 = vld [vmem:[%s6 + $0x2c] sm:$0xf]
          %v4331 = vld [vmem:[%s6 + $0x30] sm:$0xf]
          %v4332 = vld [vmem:[%s6 + $0x34] sm:$0xf]
          %v4333 = vld [vmem:[%s6 + $0x38] sm:$0xf]
          %v4334 = vld [vmem:[%s6 + $0x3c] sm:$0xf]
          %v4335 = vld [vmem:[%s7] sm:$0x1]
          %v4337 = vlaneseq
          %v4338 = vshrl.u32 %v4337, 7
          %v4339 = vsub.s32 0, %v4338
          %v4340 = vrot.slane %v4335, %v4339
          %v4358 = vunpack.c.l.b16 %v4319
          %v4359 = vunpack.c.l.b16 %v4320
          %v4360 = vunpack.c.l.b16 %v4321
          %v4361 = vunpack.c.l.b16 %v4322
          %v4362 = vunpack.c.l.b16 %v4323
          %v4363 = vunpack.c.l.b16 %v4324
          %v4364 = vunpack.c.l.b16 %v4325
          %v4365 = vunpack.c.l.b16 %v4326
          %v4366 = vunpack.c.l.b16 %v4327
          %v4367 = vunpack.c.l.b16 %v4328
          %v4368 = vunpack.c.l.b16 %v4329
          %v4369 = vunpack.c.l.b16 %v4330
          %v4370 = vunpack.c.l.b16 %v4331
          %v4371 = vunpack.c.l.b16 %v4332
          %v4372 = vunpack.c.l.b16 %v4333
          %v4373 = vunpack.c.l.b16 %v4334
          %v4374 = vpack.c.b16 %v4359, %v4358
          %v4375 = vpack.c.b16 %v4361, %v4360
          %v4376 = vpack.c.b16 %v4363, %v4362
          %v4377 = vpack.c.b16 %v4365, %v4364
          %v4378 = vpack.c.b16 %v4367, %v4366
          %v4379 = vpack.c.b16 %v4369, %v4368
          %v4380 = vpack.c.b16 %v4371, %v4370
          %v4381 = vpack.c.b16 %v4373, %v4372
          %4390 = vmatprep.subr.bf16.mxu0 0
          %4391 = vmatpush1.bf16.msra.mxu0 %v4374
          %4392 = vmatprep.subr.bf16.mxu0 0
          %4393 = vmatpush1.bf16.msra.mxu0 %v4375
          %4394 = vmatprep.subr.bf16.mxu0 0
          %4395 = vmatpush1.bf16.msra.mxu0 %v4376
          %4396 = vmatprep.subr.bf16.mxu0 0
          %4397 = vmatpush1.bf16.msra.mxu0 %v4377
          %4398 = vmatprep.subr.bf16.mxu0 0
          %4399 = vmatpush1.bf16.msra.mxu0 %v4378
          %4400 = vmatprep.subr.bf16.mxu0 0
          %4401 = vmatpush1.bf16.msra.mxu0 %v4379
          %4402 = vmatprep.subr.bf16.mxu0 0
          %4403 = vmatpush1.bf16.msra.mxu0 %v4380
          %4404 = vmatprep.subr.bf16.mxu0 0
          %4405 = vmatpush1.bf16.msra.mxu0 %v4381
          %4406 = vmatprep.subr.bf16.mxu0 0
          %4407 = vmatpush1.bf16.msra.mxu0 0
          %4408 = vmatprep.subr.bf16.mxu0 0
          %4409 = vmatpush1.bf16.msra.mxu0 0
          %4410 = vmatprep.subr.bf16.mxu0 0
          %4411 = vmatpush1.bf16.msra.mxu0 0
          %4412 = vmatprep.subr.bf16.mxu0 0
          %4413 = vmatpush1.bf16.msra.mxu0 0
          %4414 = vmatprep.subr.bf16.mxu0 0
          %4415 = vmatpush1.bf16.msra.mxu0 0
          %4416 = vmatprep.subr.bf16.mxu0 0
          %4417 = vmatpush1.bf16.msra.mxu0 0
          %4418 = vmatprep.subr.bf16.mxu0 0
          %4419 = vmatpush1.bf16.msra.mxu0 0
          %4420 = vmatprep.subr.bf16.mxu0 0
          %4421 = vmatpush1.bf16.msra.mxu0 0
          %4422 = vmatprep.mubr.bf16.mxu0 0
          %4423 = vmatmul.mubr.bf16.gmra.mrb[0].mxu0 %v4311
          %v4424 = vpop.f32.mrb[0].mxu0
          %v4425 = vadd.f32 %v4340, %v4424
          %v4426 = vpop.f32.mrb[0].mxu0
          %v4427 = vpop.f32.mrb[0].mxu0
          %v4428 = vadd.f32 %v4340, %v4427
          %v4429 = vpop.f32.mrb[0].mxu0
          %4430 = vmatprep.mubr.bf16.mxu0 0
          %4431 = vmatmul.mubr.bf16.gmra.mrb[0].mxu0 %v4312
          %v4432 = vpop.f32.mrb[0].mxu0
          %v4433 = vadd.f32 %v4340, %v4432
          %v4434 = vpop.f32.mrb[0].mxu0
          %v4435 = vpop.f32.mrb[0].mxu0
          %v4436 = vadd.f32 %v4340, %v4435
          %v4437 = vpop.f32.mrb[0].mxu0
          %4438 = vmatprep.mubr.bf16.mxu0 0
          %4439 = vmatmul.mubr.bf16.gmra.mrb[0].mxu0 %v4313
          %v4440 = vpop.f32.mrb[0].mxu0
          %v4441 = vadd.f32 %v4340, %v4440
          %v4442 = vpop.f32.mrb[0].mxu0
          %v4443 = vpop.f32.mrb[0].mxu0
          %v4444 = vadd.f32 %v4340, %v4443
          %v4445 = vpop.f32.mrb[0].mxu0
          %4446 = vmatprep.mubr.bf16.mxu0 0
          %4447 = vmatmul.mubr.bf16.gmra.mrb[0].mxu0 %v4314
          %v4448 = vpop.f32.mrb[0].mxu0
          %v4449 = vadd.f32 %v4340, %v4448
          %v4450 = vpop.f32.mrb[0].mxu0
          %v4451 = vpop.f32.mrb[0].mxu0
          %v4452 = vadd.f32 %v4340, %v4451
          %v4453 = vpop.f32.mrb[0].mxu0
          %4454 = vmatprep.mubr.bf16.mxu0 0
          %4455 = vmatmul.mubr.bf16.gmra.mrb[0].mxu0 %v4315
          %v4456 = vpop.f32.mrb[0].mxu0
          %v4457 = vadd.f32 %v4340, %v4456
          %v4458 = vpop.f32.mrb[0].mxu0
          %v4459 = vpop.f32.mrb[0].mxu0
          %v4460 = vadd.f32 %v4340, %v4459
          %v4461 = vpop.f32.mrb[0].mxu0
          %4462 = vmatprep.mubr.bf16.mxu0 0
          %4463 = vmatmul.mubr.bf16.gmra.mrb[0].mxu0 %v4316
          %v4464 = vpop.f32.mrb[0].mxu0
          %v4465 = vadd.f32 %v4340, %v4464
          %v4466 = vpop.f32.mrb[0].mxu0
          %v4467 = vpop.f32.mrb[0].mxu0
          %v4468 = vadd.f32 %v4340, %v4467
          %v4469 = vpop.f32.mrb[0].mxu0
          %4470 = vmatprep.mubr.bf16.mxu0 0
          %4471 = vmatmul.mubr.bf16.gmra.mrb[0].mxu0 %v4317
          %v4472 = vpop.f32.mrb[0].mxu0
          %v4473 = vadd.f32 %v4340, %v4472
          %v4474 = vpop.f32.mrb[0].mxu0
          %v4475 = vpop.f32.mrb[0].mxu0
          %v4476 = vadd.f32 %v4340, %v4475
          %v4477 = vpop.f32.mrb[0].mxu0
          %4478 = vmatprep.mubr.bf16.mxu0 0
          %4479 = vmatmul.mubr.bf16.gmra.mrb[0].mxu0 %v4318
          %v4480 = vpop.f32.mrb[0].mxu0
          %v4481 = vadd.f32 %v4340, %v4480
          %v4482 = vpop.f32.mrb[0].mxu0
          %v4483 = vpop.f32.mrb[0].mxu0
          %v4484 = vadd.f32 %v4340, %v4483
          %v4485 = vpop.f32.mrb[0].mxu0
          %4486 = vdwg.mxu0
          %v4487 = vpack.c.bf16 %v4428, %v4425
          %v4488 = vpack.c.bf16 %v4436, %v4433
          %v4489 = vpack.c.bf16 %v4444, %v4441
          %v4490 = vpack.c.bf16 %v4452, %v4449
          %v4491 = vpack.c.bf16 %v4460, %v4457
          %v4492 = vpack.c.bf16 %v4468, %v4465
          %v4493 = vpack.c.bf16 %v4476, %v4473
          %v4494 = vpack.c.bf16 %v4484, %v4481
          %v4503 = vunpack.c.l.b16 %v4487
          %v4504 = vunpack.c.h.b16 %v4487
          %v4505 = vunpack.c.l.b16 %v4488
          %v4506 = vunpack.c.h.b16 %v4488
          %v4507 = vunpack.c.l.b16 %v4489
          %v4508 = vunpack.c.h.b16 %v4489
          %v4509 = vunpack.c.l.b16 %v4490
          %v4510 = vunpack.c.h.b16 %v4490
          %v4511 = vunpack.c.l.b16 %v4491
          %v4512 = vunpack.c.h.b16 %v4491
          %v4513 = vunpack.c.l.b16 %v4492
          %v4514 = vunpack.c.h.b16 %v4492
          %v4515 = vunpack.c.l.b16 %v4493
          %v4516 = vunpack.c.h.b16 %v4493
          %v4517 = vunpack.c.l.b16 %v4494
          %v4518 = vunpack.c.h.b16 %v4494
          %v4519 = vpack.c.b16 %v4503, %v4503
          %v4520 = vpack.c.b16 %v4504, %v4504
          %v4521 = vpack.c.b16 %v4505, %v4505
          %v4522 = vpack.c.b16 %v4506, %v4506
          %v4523 = vpack.c.b16 %v4507, %v4507
          %v4524 = vpack.c.b16 %v4508, %v4508
          %v4525 = vpack.c.b16 %v4509, %v4509
          %v4526 = vpack.c.b16 %v4510, %v4510
          %v4527 = vpack.c.b16 %v4511, %v4511
          %v4528 = vpack.c.b16 %v4512, %v4512
          %v4529 = vpack.c.b16 %v4513, %v4513
          %v4530 = vpack.c.b16 %v4514, %v4514
          %v4531 = vpack.c.b16 %v4515, %v4515
          %v4532 = vpack.c.b16 %v4516, %v4516
          %v4533 = vpack.c.b16 %v4517, %v4517
          %v4534 = vpack.c.b16 %v4518, %v4518
          %s4551 = sshra.s32 %s339, 3
          %s4552 = sand.u32 %s339, 7
          %s4553 = smul.addr %s4551, 4
          %s4554 = scalar_lea.vmem %s315, %s4553 [#allocation2]
          %4555 = vst [vmem:[%s4554] sm:$0xf] %v4519
          %4556 = vst [vmem:[%s4554 + $0x4] sm:$0xf] %v4520
          %4557 = vst [vmem:[%s4554 + $0x8] sm:$0xf] %v4521
          %4558 = vst [vmem:[%s4554 + $0xc] sm:$0xf] %v4522
          %4559 = vst [vmem:[%s4554 + $0x10] sm:$0xf] %v4523
          %4560 = vst [vmem:[%s4554 + $0x14] sm:$0xf] %v4524
          %4561 = vst [vmem:[%s4554 + $0x18] sm:$0xf] %v4525
          %4562 = vst [vmem:[%s4554 + $0x1c] sm:$0xf] %v4526
          %4563 = vst [vmem:[%s4554 + $0x20] sm:$0xf] %v4527
          %4564 = vst [vmem:[%s4554 + $0x24] sm:$0xf] %v4528
          %4565 = vst [vmem:[%s4554 + $0x28] sm:$0xf] %v4529
          %4566 = vst [vmem:[%s4554 + $0x2c] sm:$0xf] %v4530
          %4567 = vst [vmem:[%s4554 + $0x30] sm:$0xf] %v4531
          %4568 = vst [vmem:[%s4554 + $0x34] sm:$0xf] %v4532
          %4569 = vst [vmem:[%s4554 + $0x38] sm:$0xf] %v4533
          %4570 = vst [vmem:[%s4554 + $0x3c] sm:$0xf] %v4534
        $region57: #{tpu_custom_call.1} parent=51 // loop_footer
          %s338 = sadd.s32 1, %s334
        $region58: #{tpu_custom_call.1} parent=51 // loop_footer_branch
          %333 = sbr.rel target = $region54
        $region59: #{tpu_custom_call.1} parent=51 // loop_exit
          _
        %s4571 = sand.u32 %s208, 1
        %s4572 = scalar_lea.sflag [#allocation3], %s4571
        %s4573 = sand.u32 %s208, 1
        %s4574 = smul.addr %s4573, 128
        %s4575 = scalar_lea.vmem [#allocation2], %s4574
        // Predicated region
        $region60: #{tpu_custom_call.1} parent=51 // pred_check
          %p4576 = pneg %p218
        $region61: #{tpu_custom_call.1} parent=51 // pred_check_branch
          %4578 = sbr.rel (%p4576) target = $region63
        $region62: #{tpu_custom_call.1} parent=51 // pred_region
          %s4579 = smul.u32 32, %s22
          %s4581 = ssub.s32 2048, 2048
          %4582 = vsyncadd %s4572, %s4581
          %s4583 = smul.addr %s4579, 64
          %s4584 = scalar_lea.hbm %s8, %s4583
          %s4585 = sshll.u32 %s4575, 4
          %s4586 = int_to_ptr.vmem [resolvable:$true] %s4585
          %4591 = dma.vmem_to_hbm [thread:$0]  %s4586, 2048, %s4584, %s4572, 64, 64, 4
        $region63: #{tpu_custom_call.1} parent=51 // pred_fallthru
          _
      $region52: #{tpu_custom_call.1} parent=5 // pred_fallthru
        _
      %p4592 = scmp.le.s32.totalorder 2, %s17
      // Predicated region
      $region64: #{tpu_custom_call.1} parent=5 // pred_check
        %p4593 = pneg %p4592
      $region65: #{tpu_custom_call.1} parent=5 // pred_check_branch
        %4595 = sbr.rel (%p4593) target = $region67
      $region66: #{tpu_custom_call.1} parent=5 // pred_region
        %s4596 = ssub.s32 %s17, 2
        // Predicated region
        $region68: #{tpu_custom_call.1} parent=66 // pred_check
          %p4597 = pneg %p224
        $region69: #{tpu_custom_call.1} parent=66 // pred_check_branch
          %4599 = sbr.rel (%p4597) target = $region71
        $region70: #{tpu_custom_call.1} parent=66 // pred_region
          %s4600 = sand.u32 %s209, 1
          %s4601 = scalar_lea.sflag [#allocation3], %s4600
          %s4602 = sand.u32 %s209, 1
          %s4603 = smul.addr %s4602, 128
          %s4604 = scalar_lea.vmem [#allocation2], %s4603
          %4605 = dma.done %s4601, 2048
        $region71: #{tpu_custom_call.1} parent=66 // pred_fallthru
          _
      $region67: #{tpu_custom_call.1} parent=5 // pred_fallthru
        _
    $region6: #{tpu_custom_call.1} parent=1 // loop_footer
      %s21 = sadd.s32 1, %s17
    $region7: #{tpu_custom_call.1} parent=1 // loop_footer_branch
      %16 = sbr.rel target = $region3
    $region8: #{tpu_custom_call.1} parent=1 // loop_exit
      _
    %4606 = vsyncpa [#allocation3], 1
    %s4607 = scalar_lea.sflag [#allocation3], 1
    %4608 = vsyncpa %s4607, 1

</llo_original>
